<compile_context>
chip_gen: v7x
topology: tpu7x:2x2x1
jax: 0.10.0
libtpu: 0.0.40
codegen_flags: <defaults>
</compile_context>

<pallas_src>
import functools

import jax
import jax.numpy as jnp
from jax.experimental import pallas as pl
from jax.experimental.pallas import tpu as pltpu


def _erf_approx(x):
    """erf via Abramowitz & Stegun 7.1.26 (|err| <= 1.5e-7).

    Uses only VPU ops + one EUP exp, so it lowers on all TPU generations
    (avoids relying on an erf primitive lowering inside Mosaic).
    """
    a1 = 0.254829592
    a2 = -0.284496736
    a3 = 1.421413741
    a4 = -1.453152027
    a5 = 1.061405429
    p = 0.3275911
    z = jnp.abs(x)
    t = 1.0 / (1.0 + p * z)
    poly = ((((a5 * t + a4) * t + a3) * t + a2) * t + a1) * t
    y = 1.0 - poly * jnp.exp(-(z * z))
    return jnp.where(x < 0.0, -y, y)


def _gelu_exact(x):
    """Exact (erf-based) GELU, matching torch.nn.GELU() default."""
    return 0.5 * x * (1.0 + _erf_approx(x * 0.7071067811865476))


def _mlp_kernel(x_ref, w1_ref, b1_ref, w2_ref, b2_ref, o_ref):
    """One row-tile of tokens per grid step.

    x_ref:  (TM, C)   bf16 input rows
    w1_ref: (C, H)    bf16 fc1 weight   (resident across grid)
    b1_ref: (1, H)    f32  fc1 bias
    w2_ref: (H, C)    bf16 fc2 weight   (resident across grid)
    b2_ref: (1, C)    f32  fc2 bias
    o_ref:  (TM, C)   f32  output rows  (C is a multiple of 128 -> full-width stores)
    """
    x = x_ref[...]                                                   # (TM, C) bf16

    # fc1: bf16 inputs, f32 accumulation on the MXU.
    h = jnp.dot(x, w1_ref[...], preferred_element_type=jnp.float32)  # (TM, H) f32
    h = h + b1_ref[...]

    # GELU in f32 (exp goes to the EUP slot, rest is VPU).
    h = _gelu_exact(h)

    # fc2: cast activations back to bf16 for the MXU, accumulate in f32.
    out = jnp.dot(h.astype(w2_ref.dtype), w2_ref[...],
                  preferred_element_type=jnp.float32)                # (TM, C) f32
    out = out + b2_ref[...]

    o_ref[...] = out.astype(o_ref.dtype)


def mlp_pallas(x, w1, b1, w2, b2, *, block_rows=256,
               compute_dtype=jnp.bfloat16):
    """Pallas forward of Mlp: fc2(gelu(fc1(x))).

    x:  (..., C) float32
    w1: (C, H),  b1: (H,)
    w2: (H, C),  b2: (C,)
    """
    orig_shape = x.shape
    C = orig_shape[-1]
    H = w1.shape[1]

    xm = x.reshape(-1, C)
    M = xm.shape[0]
    num_blocks = pl.cdiv(M, block_rows)
    Mp = num_blocks * block_rows
    if Mp != M:
        xm = jnp.pad(xm, ((0, Mp - M), (0, 0)))

    # bf16 matmul inputs; biases stay f32 (added post-accumulation).
    xm_c = xm.astype(compute_dtype)
    w1_c = w1.astype(compute_dtype)
    w2_c = w2.astype(compute_dtype)
    b1_r = b1.reshape(1, H).astype(jnp.float32)
    b2_r = b2.reshape(1, C).astype(jnp.float32)

    itemsize = jnp.dtype(compute_dtype).itemsize
    cost = pl.CostEstimate(
        flops=4 * Mp * C * H,                       # 2*M*C*H (fc1) + 2*M*H*C (fc2)
        transcendentals=Mp * H,                     # one exp per hidden element (erf)
        bytes_accessed=(xm_c.size + w1_c.size + w2_c.size) * itemsize
                        + (b1_r.size + b2_r.size) * 4
                        + Mp * C * 4,
    )

    grid_spec = pltpu.PrefetchScalarGridSpec(
        num_scalar_prefetch=0,
        grid=(num_blocks,),
        in_specs=[
            pl.BlockSpec((block_rows, C), lambda i: (i, 0)),   # x rows
            pl.BlockSpec((C, H), lambda i: (0, 0)),            # W1 (resident)
            pl.BlockSpec((1, H), lambda i: (0, 0)),            # b1 (resident)
            pl.BlockSpec((H, C), lambda i: (0, 0)),            # W2 (resident)
            pl.BlockSpec((1, C), lambda i: (0, 0)),            # b2 (resident)
        ],
        out_specs=pl.BlockSpec((block_rows, C), lambda i: (i, 0)),
    )

    out = pl.pallas_call(
        _mlp_kernel,
        out_shape=jax.ShapeDtypeStruct((Mp, C), x.dtype),
        grid_spec=grid_spec,
        compiler_params=pltpu.CompilerParams(
            dimension_semantics=("parallel",),      # independent row tiles (2 TCs on v7x)
            vmem_limit_bytes=32 * 1024 * 1024,
        ),
        cost_estimate=cost,
    )(xm_c, w1_c, b1_r, w2_c, b2_r)

    if Mp != M:
        out = out[:M]
    return out.reshape(orig_shape)


def mlp_reference(x, w1, b1, w2, b2, *, cast_dtype=None):
    """Pure-JAX reference mirroring the PyTorch module (eval mode, p=0.0)."""
    def c(a):
        return a if cast_dtype is None else a.astype(cast_dtype)
    h = jnp.einsum("...c,ch->...h", c(x), c(w1),
                   preferred_element_type=jnp.float32) + b1
    h = jax.nn.gelu(h, approximate=False)           # torch nn.GELU default (erf)
    out = jnp.einsum("...h,hc->...c", c(h), c(w2),
                     preferred_element_type=jnp.float32) + b2
    return out.astype(x.dtype)


if __name__ == "__main__":
    # Small, module-consistent shapes (Swin-like: tokens (B, L, C), mlp_ratio=4).
    in_features = 128
    hidden_features = 4 * in_features   # 512
    batch = 2
    seq_len = 256                       # tokens per image

    key = jax.random.PRNGKey(0)
    kx, kw1, kb1, kw2, kb2 = jax.random.split(key, 5)

    x = jax.random.normal(kx, (batch, seq_len, in_features), dtype=jnp.float32)
    w1 = 0.05 * jax.random.normal(kw1, (in_features, hidden_features), jnp.float32)
    b1 = 0.05 * jax.random.normal(kb1, (hidden_features,), jnp.float32)
    w2 = 0.05 * jax.random.normal(kw2, (hidden_features, in_features), jnp.float32)
    b2 = 0.05 * jax.random.normal(kb2, (in_features,), jnp.float32)

    out = mlp_pallas(x, w1, b1, w2, b2)
    out = jax.block_until_ready(out)
    assert out.shape == x.shape and out.dtype == x.dtype

    # Tight check against a reference that mirrors the kernel's bf16 casts.
    ref_bf16 = mlp_reference(x, w1, b1, w2, b2, cast_dtype=jnp.bfloat16)
    err_bf16 = float(jnp.max(jnp.abs(out - ref_bf16)))
    assert err_bf16 < 5e-3, f"bf16-mirrored max abs err = {err_bf16}"

    # Loose check against the full-f32 PyTorch-equivalent forward.
    ref_f32 = mlp_reference(x, w1, b1, w2, b2, cast_dtype=None)
    err_f32 = float(jnp.max(jnp.abs(out - ref_f32)))
    assert err_f32 < 5e-2, f"f32 max abs err = {err_f32}"

    print("KERNEL_OK")
</pallas_src>

<mosaic_0001>
module attributes {stable_mosaic.version = 11 : i64} {
  func.func @_mlp_kernel(%arg0: i32, %arg1: memref<256x128xbf16, #tpu.memory_space<vmem>>, %arg2: memref<128x512xbf16, #tpu.memory_space<vmem>>, %arg3: memref<1x512xf32, #tpu.memory_space<vmem>>, %arg4: memref<512x128xbf16, #tpu.memory_space<vmem>>, %arg5: memref<1x128xf32, #tpu.memory_space<vmem>>, %arg6: memref<256x128xf32, #tpu.memory_space<vmem>>) attributes {dimension_semantics = [#tpu.dimension_semantics<parallel>], iteration_bounds = array<i64: 2>, scalar_prefetch = 0 : i64, scratch_operands = 0 : i64, tpu.core_type = #tpu.core_type<tc>, window_params = [{transform_indices = @transform_0, window_bounds = array<i64: 256, 128>}, {pipeline_mode = #tpu.pipeline_mode<synchronous>, transform_indices = @transform_1, window_bounds = array<i64: 128, 512>}, {pipeline_mode = #tpu.pipeline_mode<synchronous>, transform_indices = @transform_2, window_bounds = array<i64: 1, 512>}, {pipeline_mode = #tpu.pipeline_mode<synchronous>, transform_indices = @transform_3, window_bounds = array<i64: 512, 128>}, {pipeline_mode = #tpu.pipeline_mode<synchronous>, transform_indices = @transform_4, window_bounds = array<i64: 1, 128>}, {transform_indices = @transform_5, window_bounds = array<i64: 256, 128>}]} {
    %c0 = arith.constant 0 : index
    %c0_0 = arith.constant 0 : index
    %0 = vector.load %arg1[%c0, %c0_0] : memref<256x128xbf16, #tpu.memory_space<vmem>>, vector<256x128xbf16>
    %c0_1 = arith.constant 0 : index
    %c0_2 = arith.constant 0 : index
    %1 = vector.load %arg2[%c0_1, %c0_2] : memref<128x512xbf16, #tpu.memory_space<vmem>>, vector<128x512xbf16>
    %cst = arith.constant dense<0.000000e+00> : vector<256x512xf32>
    %2 = tpu.matmul %0, %1, %cst {dimension_numbers = #tpu.dot_dimension_numbers<[1], [0], [0], [1], [0, 0, 1, 1], [], []>} : vector<256x128xbf16>, vector<128x512xbf16>, vector<256x512xf32> -> vector<256x512xf32>
    %c0_3 = arith.constant 0 : index
    %c0_4 = arith.constant 0 : index
    %3 = vector.load %arg3[%c0_3, %c0_4] : memref<1x512xf32, #tpu.memory_space<vmem>>, vector<1x512xf32>
    %4 = vector.broadcast %3 : vector<1x512xf32> to vector<256x512xf32>
    %5 = arith.addf %2, %4 : vector<256x512xf32>
    %cst_5 = arith.constant 5.000000e-01 : f32
    %6 = vector.broadcast %cst_5 : f32 to vector<256x512xf32>
    %7 = arith.mulf %6, %5 : vector<256x512xf32>
    %cst_6 = arith.constant 0.707106769 : f32
    %8 = vector.broadcast %cst_6 : f32 to vector<256x512xf32>
    %9 = arith.mulf %5, %8 : vector<256x512xf32>
    %10 = math.absf %9 : vector<256x512xf32>
    %cst_7 = arith.constant 0.327591091 : f32
    %11 = vector.broadcast %cst_7 : f32 to vector<256x512xf32>
    %12 = arith.mulf %11, %10 : vector<256x512xf32>
    %cst_8 = arith.constant 1.000000e+00 : f32
    %13 = vector.broadcast %cst_8 : f32 to vector<256x512xf32>
    %14 = arith.addf %13, %12 : vector<256x512xf32>
    %cst_9 = arith.constant 1.000000e+00 : f32
    %15 = vector.broadcast %cst_9 : f32 to vector<256x512xf32>
    %16 = arith.divf %15, %14 : vector<256x512xf32>
    %cst_10 = arith.constant 1.06140542 : f32
    %17 = vector.broadcast %cst_10 : f32 to vector<256x512xf32>
    %18 = arith.mulf %17, %16 : vector<256x512xf32>
    %cst_11 = arith.constant -1.45315206 : f32
    %19 = vector.broadcast %cst_11 : f32 to vector<256x512xf32>
    %20 = arith.addf %18, %19 : vector<256x512xf32>
    %21 = arith.mulf %20, %16 : vector<256x512xf32>
    %cst_12 = arith.constant 1.42141378 : f32
    %22 = vector.broadcast %cst_12 : f32 to vector<256x512xf32>
    %23 = arith.addf %21, %22 : vector<256x512xf32>
    %24 = arith.mulf %23, %16 : vector<256x512xf32>
    %cst_13 = arith.constant -0.284496725 : f32
    %25 = vector.broadcast %cst_13 : f32 to vector<256x512xf32>
    %26 = arith.addf %24, %25 : vector<256x512xf32>
    %27 = arith.mulf %26, %16 : vector<256x512xf32>
    %cst_14 = arith.constant 0.254829586 : f32
    %28 = vector.broadcast %cst_14 : f32 to vector<256x512xf32>
    %29 = arith.addf %27, %28 : vector<256x512xf32>
    %30 = arith.mulf %29, %16 : vector<256x512xf32>
    %31 = arith.mulf %10, %10 : vector<256x512xf32>
    %cst_15 = arith.constant 0.000000e+00 : f32
    %32 = vector.broadcast %cst_15 : f32 to vector<256x512xf32>
    %33 = arith.subf %32, %31 : vector<256x512xf32>
    %34 = math.exp %33 : vector<256x512xf32>
    %35 = arith.mulf %30, %34 : vector<256x512xf32>
    %cst_16 = arith.constant 1.000000e+00 : f32
    %36 = vector.broadcast %cst_16 : f32 to vector<256x512xf32>
    %37 = arith.subf %36, %35 : vector<256x512xf32>
    %cst_17 = arith.constant 0.000000e+00 : f32
    %38 = vector.broadcast %cst_17 : f32 to vector<256x512xf32>
    %39 = arith.cmpf olt, %9, %38 : vector<256x512xf32>
    %cst_18 = arith.constant 0.000000e+00 : f32
    %40 = vector.broadcast %cst_18 : f32 to vector<256x512xf32>
    %41 = arith.subf %40, %37 : vector<256x512xf32>
    %42 = arith.select %39, %41, %37 : vector<256x512xi1>, vector<256x512xf32>
    %cst_19 = arith.constant 1.000000e+00 : f32
    %43 = vector.broadcast %cst_19 : f32 to vector<256x512xf32>
    %44 = arith.addf %43, %42 : vector<256x512xf32>
    %45 = arith.mulf %7, %44 : vector<256x512xf32>
    %46 = arith.truncf %45 : vector<256x512xf32> to vector<256x512xbf16>
    %c0_20 = arith.constant 0 : index
    %c0_21 = arith.constant 0 : index
    %47 = vector.load %arg4[%c0_20, %c0_21] : memref<512x128xbf16, #tpu.memory_space<vmem>>, vector<512x128xbf16>
    %cst_22 = arith.constant dense<0.000000e+00> : vector<256x128xf32>
    %48 = tpu.matmul %46, %47, %cst_22 {dimension_numbers = #tpu.dot_dimension_numbers<[1], [0], [0], [1], [0, 0, 1, 1], [], []>} : vector<256x512xbf16>, vector<512x128xbf16>, vector<256x128xf32> -> vector<256x128xf32>
    %c0_23 = arith.constant 0 : index
    %c0_24 = arith.constant 0 : index
    %49 = vector.load %arg5[%c0_23, %c0_24] : memref<1x128xf32, #tpu.memory_space<vmem>>, vector<1x128xf32>
    %50 = vector.broadcast %49 : vector<1x128xf32> to vector<256x128xf32>
    %51 = arith.addf %48, %50 : vector<256x128xf32>
    %c0_25 = arith.constant 0 : index
    %c0_26 = arith.constant 0 : index
    %52 = vector.load %arg6[%c0_25, %c0_26] : memref<256x128xf32, #tpu.memory_space<vmem>>, vector<256x128xf32>
    tpu.vector_store %arg6[%c0_25, %c0_26], %51 {strides = array<i32>} : memref<256x128xf32, #tpu.memory_space<vmem>>, vector<256x128xf32>,
    return
  }
  func.func @transform_0(%arg0: i32) -> (i32, i32) {
    %c0_i32 = arith.constant 0 : i32
    %c0_i32_0 = arith.constant 0 : i32
    return %arg0, %c0_i32 : i32, i32
  }
  func.func @transform_1(%arg0: i32) -> (i32, i32) {
    %c0_i32 = arith.constant 0 : i32
    %c0_i32_0 = arith.constant 0 : i32
    %c0_i32_1 = arith.constant 0 : i32
    return %c0_i32, %c0_i32_0 : i32, i32
  }
  func.func @transform_2(%arg0: i32) -> (i32, i32) {
    %c0_i32 = arith.constant 0 : i32
    %c0_i32_0 = arith.constant 0 : i32
    %c0_i32_1 = arith.constant 0 : i32
    return %c0_i32, %c0_i32_0 : i32, i32
  }
  func.func @transform_3(%arg0: i32) -> (i32, i32) {
    %c0_i32 = arith.constant 0 : i32
    %c0_i32_0 = arith.constant 0 : i32
    %c0_i32_1 = arith.constant 0 : i32
    return %c0_i32, %c0_i32_0 : i32, i32
  }
  func.func @transform_4(%arg0: i32) -> (i32, i32) {
    %c0_i32 = arith.constant 0 : i32
    %c0_i32_0 = arith.constant 0 : i32
    %c0_i32_1 = arith.constant 0 : i32
    return %c0_i32, %c0_i32_0 : i32, i32
  }
  func.func @transform_5(%arg0: i32) -> (i32, i32) {
    %c0_i32 = arith.constant 0 : i32
    %c0_i32_0 = arith.constant 0 : i32
    return %arg0, %c0_i32 : i32, i32
  }
}

</mosaic_0001>

<llo_original>
// kernel: tpu_custom_call.1
$region0: #{tpu_custom_call.1}
  #allocation0 [shape = 'u32[]', space=smem, size = 0x4, offset = 0x4, fixed_abs, tag = 'smem constant byte address 0x4 - core index']
  #allocation1 [shape = 'u32[144,128]{1,0:T(1,128)}', space=vmem, size = 0x12000, scoped, tag = 'internal scratch']
  %s0 = inlined_call_operand.hbm [shape: bf16[512,128], index: 0, kind: input, shape index: {}]
  %s1 = inlined_call_operand.hbm [shape: bf16[128,512], index: 1, kind: input, shape index: {}]
  %s2 = inlined_call_operand.vmem [shape: f32[1,512], index: 2, kind: input, shape index: {}]
  %s3 = inlined_call_operand.hbm [shape: bf16[512,128], index: 3, kind: input, shape index: {}]
  %s4 = inlined_call_operand.vmem [shape: f32[1,128], index: 4, kind: input, shape index: {}]
  %s5 = inlined_call_operand.hbm [shape: f32[512,128], index: 5, kind: output, shape index: {}]
  %s6 = sld [smem:[#allocation0]]
  $region65: #{tpu_custom_call.1} parent=0
    _
  %s8 = ssub.s32 1, %s6
  %s9 = scalar_select 0, %s8, %s6
  $region1: #{tpu_custom_call.1} parent=0
    #allocation2 [shape = 'u8[131072]{0}', space=vmem, size = 0x20000, scoped, tag = 'input window, operand 0']
    #allocation3 [shape = 's32[2]{0}', space=sflag, size = 0x8, scoped, tag = 'scoped memory for tpu_custom_call.1']
    #allocation4 [shape = 's32[2]{0}', space=sflag, size = 0x8, scoped, tag = 'scoped memory for tpu_custom_call.1']
    #allocation5 [shape = 'u8[131072]{0}', space=vmem, size = 0x20000, scoped, tag = 'input window, operand 1, single buffered']
    #allocation6 [shape = 's32[1]{0}', space=sflag, size = 0x4, scoped, tag = 'scoped memory for tpu_custom_call.1']
    #allocation7 [shape = 'u8[131072]{0}', space=vmem, size = 0x20000, scoped, tag = 'input window, operand 3, single buffered']
    #allocation8 [shape = 'u8[262144]{0}', space=vmem, size = 0x40000, scoped, tag = 'output window, operand 0']
    %10 = vsyncpa [#allocation3], 0
    %s11 = scalar_lea.sflag [#allocation3], 1
    %12 = vsyncpa %s11, 0
    %13 = vsyncpa [#allocation6], 0
    %14 = vsyncpa [#allocation4], 0
    %s15 = scalar_lea.sflag [#allocation4], 1
    %16 = vsyncpa %s15, 0
    loop: start=0, step=1, limit=4
    $region2: #{tpu_custom_call.1} parent=1 // loop_pre_header
      _
    $region3: #{tpu_custom_call.1} parent=1 // loop_header
      %s18 = sphi 0, %s22
      %p19 = scmp.ge.s32.totalorder %s18, 4
      %s28 = sphi 0, %s30
      %s31 = sphi 0, %s28
      %s32 = sphi 0, %s31
      %s48 = sphi 0, %s32
      %s52 = sphi 0, %s52
      %s54 = sphi 0, %s52
      %s55 = sphi 0, %s54
      %s69 = sphi 0, %s55
      %s73 = sphi 0, %s73
      %s75 = sphi 0, %s73
      %s76 = sphi 0, %s75
      %s90 = sphi 0, %s76
      %s94 = sphi 0, %s94
      %s96 = sphi 0, %s94
      %s97 = sphi 0, %s96
      %s111 = sphi 0, %s97
      %s115 = sphi 0, %s115
      %s117 = sphi 0, %s115
      %s118 = sphi 0, %s117
      %s132 = sphi 0, %s118
      %s138 = sphi 0, %s140
      %s141 = sphi 0, %s138
      %s142 = sphi 0, %s141
      %s158 = sphi 0, %s142
    $region4: #{tpu_custom_call.1} parent=1 // loop_header_branch
      %21 = sbr.rel (%p19) target = $region8
    $region5: #{tpu_custom_call.1} parent=1 // loop_body
      %s23 = ssub.s32 %s18, 1
      %s24 = ssub.s32 %s18, 2
      %s25 = sadd.s32 %s18, 1
      %s26 = ssub.s32 %s18, %s25
      %p27 = scmp.eq.s32.totalorder %s26, 0
      %s29 = sadd.s32 %s28, 1
      %s30 = scalar_select %p27, %s28, %s29
      %p33 = pneg %p27
      %p34 = scmp.eq.s32.totalorder %s18, 1
      %p35 = por %p33, %p34
      %p36 = scmp.ne.s32.totalorder %s28, %s31
      %p37 = scmp.eq.s32.totalorder %s18, 0
      %p38 = por %p36, %p37
      %p39 = scmp.ne.s32.totalorder %s28, %s31
      %p40 = scmp.eq.s32.totalorder %s23, 1
      %p41 = por %p39, %p40
      %p42 = scmp.ne.s32.totalorder %s31, %s32
      %p43 = scmp.eq.s32.totalorder %s23, 0
      %p44 = por %p42, %p43
      %p45 = scmp.ne.s32.totalorder %s31, %s32
      %p46 = scmp.eq.s32.totalorder %s24, 1
      %p47 = por %p45, %p46
      %p49 = scmp.ne.s32.totalorder %s32, %s48
      %p50 = scmp.eq.s32.totalorder %s24, 0
      %p51 = por %p49, %p50
      %s53 = sadd.s32 %s52, 1
      %p56 = scmp.eq.s32.totalorder %s18, 1
      %p57 = scmp.ne.s32.totalorder %s52, %s54
      %p58 = scmp.eq.s32.totalorder %s18, 0
      %p59 = por %p57, %p58
      %p60 = scmp.ne.s32.totalorder %s52, %s54
      %p61 = scmp.eq.s32.totalorder %s23, 1
      %p62 = por %p60, %p61
      %p63 = scmp.ne.s32.totalorder %s54, %s55
      %p64 = scmp.eq.s32.totalorder %s23, 0
      %p65 = por %p63, %p64
      %p66 = scmp.ne.s32.totalorder %s54, %s55
      %p67 = scmp.eq.s32.totalorder %s24, 1
      %p68 = por %p66, %p67
      %p70 = scmp.ne.s32.totalorder %s55, %s69
      %p71 = scmp.eq.s32.totalorder %s24, 0
      %p72 = por %p70, %p71
      %s74 = sadd.s32 %s73, 1
      %p77 = scmp.eq.s32.totalorder %s18, 1
      %p78 = scmp.ne.s32.totalorder %s73, %s75
      %p79 = scmp.eq.s32.totalorder %s18, 0
      %p80 = por %p78, %p79
      %p81 = scmp.ne.s32.totalorder %s73, %s75
      %p82 = scmp.eq.s32.totalorder %s23, 1
      %p83 = por %p81, %p82
      %p84 = scmp.ne.s32.totalorder %s75, %s76
      %p85 = scmp.eq.s32.totalorder %s23, 0
      %p86 = por %p84, %p85
      %p87 = scmp.ne.s32.totalorder %s75, %s76
      %p88 = scmp.eq.s32.totalorder %s24, 1
      %p89 = por %p87, %p88
      %p91 = scmp.ne.s32.totalorder %s76, %s90
      %p92 = scmp.eq.s32.totalorder %s24, 0
      %p93 = por %p91, %p92
      %s95 = sadd.s32 %s94, 1
      %p98 = scmp.eq.s32.totalorder %s18, 1
      %p99 = scmp.ne.s32.totalorder %s94, %s96
      %p100 = scmp.eq.s32.totalorder %s18, 0
      %p101 = por %p99, %p100
      %p102 = scmp.ne.s32.totalorder %s94, %s96
      %p103 = scmp.eq.s32.totalorder %s23, 1
      %p104 = por %p102, %p103
      %p105 = scmp.ne.s32.totalorder %s96, %s97
      %p106 = scmp.eq.s32.totalorder %s23, 0
      %p107 = por %p105, %p106
      %p108 = scmp.ne.s32.totalorder %s96, %s97
      %p109 = scmp.eq.s32.totalorder %s24, 1
      %p110 = por %p108, %p109
      %p112 = scmp.ne.s32.totalorder %s97, %s111
      %p113 = scmp.eq.s32.totalorder %s24, 0
      %p114 = por %p112, %p113
      %s116 = sadd.s32 %s115, 1
      %p119 = scmp.eq.s32.totalorder %s18, 1
      %p120 = scmp.ne.s32.totalorder %s115, %s117
      %p121 = scmp.eq.s32.totalorder %s18, 0
      %p122 = por %p120, %p121
      %p123 = scmp.ne.s32.totalorder %s115, %s117
      %p124 = scmp.eq.s32.totalorder %s23, 1
      %p125 = por %p123, %p124
      %p126 = scmp.ne.s32.totalorder %s117, %s118
      %p127 = scmp.eq.s32.totalorder %s23, 0
      %p128 = por %p126, %p127
      %p129 = scmp.ne.s32.totalorder %s117, %s118
      %p130 = scmp.eq.s32.totalorder %s24, 1
      %p131 = por %p129, %p130
      %p133 = scmp.ne.s32.totalorder %s118, %s132
      %p134 = scmp.eq.s32.totalorder %s24, 0
      %p135 = por %p133, %p134
      %s136 = ssub.s32 %s18, %s25
      %p137 = scmp.eq.s32.totalorder %s136, 0
      %s139 = sadd.s32 %s138, 1
      %s140 = scalar_select %p137, %s138, %s139
      %p143 = pneg %p137
      %p144 = scmp.eq.s32.totalorder %s18, 1
      %p145 = por %p143, %p144
      %p146 = scmp.ne.s32.totalorder %s138, %s141
      %p147 = scmp.eq.s32.totalorder %s18, 0
      %p148 = por %p146, %p147
      %p149 = scmp.ne.s32.totalorder %s138, %s141
      %p150 = scmp.eq.s32.totalorder %s23, 1
      %p151 = por %p149, %p150
      %p152 = scmp.ne.s32.totalorder %s141, %s142
      %p153 = scmp.eq.s32.totalorder %s23, 0
      %p154 = por %p152, %p153
      %p155 = scmp.ne.s32.totalorder %s141, %s142
      %p156 = scmp.eq.s32.totalorder %s24, 1
      %p157 = por %p155, %p156
      %p159 = scmp.ne.s32.totalorder %s142, %s158
      %p160 = scmp.eq.s32.totalorder %s24, 0
      %p161 = por %p159, %p160
      %p162 = scmp.le.s32.totalorder 1, %s18
      %p163 = scmp.lt.s32.totalorder %s18, 3
      %p164 = pnand %p162, %p163
      %p165 = pneg %p164
      // Predicated region
      $region9: #{tpu_custom_call.1} parent=5 // pred_check
        _
      $region10: #{tpu_custom_call.1} parent=5 // pred_check_branch
        %167 = sbr.rel (%p164) target = $region12
      $region11: #{tpu_custom_call.1} parent=5 // pred_region
        %s168 = ssub.s32 %s18, 1
        // Predicated region
        $region13: #{tpu_custom_call.1} parent=11 // pred_check
          %p169 = pneg %p65
        $region14: #{tpu_custom_call.1} parent=11 // pred_check_branch
          %171 = sbr.rel (%p169) target = $region16
        $region15: #{tpu_custom_call.1} parent=11 // pred_region
          %s173 = ssub.s32 4096, 4096
          %174 = vsyncadd [#allocation6], %s173
          %s175 = sshll.u32 [#allocation5], 4
          %s176 = int_to_ptr.vmem [resolvable:$true] %s175
          %181 = dma.hbm_to_vmem [thread:$0]  %s1, 4096, %s176, [#allocation6], 256, 256, 16
        $region16: #{tpu_custom_call.1} parent=11 // pred_fallthru
          _
        // Predicated region
        $region17: #{tpu_custom_call.1} parent=11 // pred_check
          %p182 = pneg %p86
        $region18: #{tpu_custom_call.1} parent=11 // pred_check_branch
          %184 = sbr.rel (%p182) target = $region20
        $region19: #{tpu_custom_call.1} parent=11 // pred_region
          _
        $region20: #{tpu_custom_call.1} parent=11 // pred_fallthru
          _
        // Predicated region
        $region21: #{tpu_custom_call.1} parent=11 // pred_check
          %p185 = pneg %p107
        $region22: #{tpu_custom_call.1} parent=11 // pred_check_branch
          %187 = sbr.rel (%p185) target = $region24
        $region23: #{tpu_custom_call.1} parent=11 // pred_region
          %s189 = ssub.s32 4096, 4096
          %190 = vsyncadd [#allocation6], %s189
          %s191 = sshll.u32 [#allocation7], 4
          %s192 = int_to_ptr.vmem [resolvable:$true] %s191
          %197 = dma.hbm_to_vmem [thread:$0]  %s3, 4096, %s192, [#allocation6], 64, 64, 4
        $region24: #{tpu_custom_call.1} parent=11 // pred_fallthru
          _
        // Predicated region
        $region25: #{tpu_custom_call.1} parent=11 // pred_check
          %p198 = pneg %p128
        $region26: #{tpu_custom_call.1} parent=11 // pred_check_branch
          %200 = sbr.rel (%p198) target = $region28
        $region27: #{tpu_custom_call.1} parent=11 // pred_region
          _
        $region28: #{tpu_custom_call.1} parent=11 // pred_fallthru
          _
      $region12: #{tpu_custom_call.1} parent=5 // pred_fallthru
        _
      %p201 = scmp.lt.s32.totalorder %s18, 2
      // Predicated region
      $region29: #{tpu_custom_call.1} parent=5 // pred_check
        %p202 = pneg %p201
      $region30: #{tpu_custom_call.1} parent=5 // pred_check_branch
        %204 = sbr.rel (%p202) target = $region32
      $region31: #{tpu_custom_call.1} parent=5 // pred_region
        // Predicated region
        $region33: #{tpu_custom_call.1} parent=31 // pred_check
          %p205 = pneg %p38
        $region34: #{tpu_custom_call.1} parent=31 // pred_check_branch
          %207 = sbr.rel (%p205) target = $region36
        $region35: #{tpu_custom_call.1} parent=31 // pred_region
          %s208 = sand.u32 %s28, 1
          %s209 = scalar_lea.sflag [#allocation3], %s208
          %s210 = sand.u32 %s28, 1
          %s211 = smul.addr %s210, 128
          %s212 = scalar_lea.vmem [#allocation2], %s211
          %s213 = smul.u32 32, %s18
          %s215 = ssub.s32 2048, 2048
          %216 = vsyncadd %s209, %s215
          %s217 = smul.addr %s213, 64
          %s218 = scalar_lea.hbm %s0, %s217
          %s219 = sshll.u32 %s212, 4
          %s220 = int_to_ptr.vmem [resolvable:$true] %s219
          %225 = dma.hbm_to_vmem [thread:$0]  %s218, 2048, %s220, %s209, 64, 64, 4
        $region36: #{tpu_custom_call.1} parent=31 // pred_fallthru
          _
      $region32: #{tpu_custom_call.1} parent=5 // pred_fallthru
        _
      %p226 = scmp.le.s32.totalorder 1, %s18
      %p227 = scmp.lt.s32.totalorder %s18, 3
      %p228 = pnand %p226, %p227
      %p229 = pneg %p228
      // Predicated region
      $region37: #{tpu_custom_call.1} parent=5 // pred_check
        _
      $region38: #{tpu_custom_call.1} parent=5 // pred_check_branch
        %231 = sbr.rel (%p228) target = $region40
      $region39: #{tpu_custom_call.1} parent=5 // pred_region
        %s232 = ssub.s32 %s18, 1
        %s233 = sand.u32 %s31, 1
        %s234 = scalar_lea.sflag [#allocation3], %s233
        %s235 = sand.u32 %s31, 1
        %s236 = smul.addr %s235, 128
        %s237 = scalar_lea.vmem [#allocation2], %s236
        // Predicated region
        $region41: #{tpu_custom_call.1} parent=39 // pred_check
          %p238 = pneg %p44
        $region42: #{tpu_custom_call.1} parent=39 // pred_check_branch
          %240 = sbr.rel (%p238) target = $region44
        $region43: #{tpu_custom_call.1} parent=39 // pred_region
          %241 = dma.done %s234, 2048
        $region44: #{tpu_custom_call.1} parent=39 // pred_fallthru
          _
        // Predicated region
        $region45: #{tpu_custom_call.1} parent=39 // pred_check
          %p242 = pneg %p65
        $region46: #{tpu_custom_call.1} parent=39 // pred_check_branch
          %244 = sbr.rel (%p242) target = $region48
        $region47: #{tpu_custom_call.1} parent=39 // pred_region
          %245 = dma.done [#allocation6], 4096
        $region48: #{tpu_custom_call.1} parent=39 // pred_fallthru
          _
        // Predicated region
        $region49: #{tpu_custom_call.1} parent=39 // pred_check
          %p246 = pneg %p107
        $region50: #{tpu_custom_call.1} parent=39 // pred_check_branch
          %248 = sbr.rel (%p246) target = $region52
        $region51: #{tpu_custom_call.1} parent=39 // pred_region
          %249 = dma.done [#allocation6], 4096
        $region52: #{tpu_custom_call.1} parent=39 // pred_fallthru
          _
        %s250 = sand.u32 %s31, 1
        %s251 = scalar_lea.sflag [#allocation3], %s250
        %s252 = sand.u32 %s31, 1
        %s253 = smul.addr %s252, 128
        %s254 = scalar_lea.vmem [#allocation2], %s253
        %p255 = pneg %p44
        %p256 = pneg %p41
        %p257 = pneg %p65
        %p258 = pneg %p62
        %p259 = pneg %p86
        %p260 = pneg %p83
        %p261 = pneg %p107
        %p262 = pneg %p104
        %p263 = pneg %p128
        %p264 = pneg %p125
        %p265 = pneg %p154
        %p266 = pneg %p151
        %s267 = sand.u32 %s141, 1
        %s268 = scalar_lea.sflag [#allocation4], %s267
        %s269 = sand.u32 %s141, 1
        %s270 = smul.addr %s269, 256
        %s271 = scalar_lea.vmem [#allocation8], %s270
        %s272 = smul.u32 32, %s23
        %s273 = smul.u32 32, %s23
        %v275 = vld [vmem:[%s237] sm:$0xf]
        %v276 = vld [vmem:[%s237 + $0x4] sm:$0xf]
        %v277 = vld [vmem:[%s237 + $0x8] sm:$0xf]
        %v278 = vld [vmem:[%s237 + $0xc] sm:$0xf]
        %v279 = vld [vmem:[%s237 + $0x10] sm:$0xf]
        %v280 = vld [vmem:[%s237 + $0x14] sm:$0xf]
        %v281 = vld [vmem:[%s237 + $0x18] sm:$0xf]
        %v282 = vld [vmem:[%s237 + $0x1c] sm:$0xf]
        %v283 = vld [vmem:[%s237 + $0x20] sm:$0xf]
        %v284 = vld [vmem:[%s237 + $0x24] sm:$0xf]
        %v285 = vld [vmem:[%s237 + $0x28] sm:$0xf]
        %v286 = vld [vmem:[%s237 + $0x2c] sm:$0xf]
        %v287 = vld [vmem:[%s237 + $0x30] sm:$0xf]
        %v288 = vld [vmem:[%s237 + $0x34] sm:$0xf]
        %v289 = vld [vmem:[%s237 + $0x38] sm:$0xf]
        %v290 = vld [vmem:[%s237 + $0x3c] sm:$0xf]
        %v291 = vld [vmem:[%s237 + $0x40] sm:$0xf]
        %v292 = vld [vmem:[%s237 + $0x44] sm:$0xf]
        %v293 = vld [vmem:[%s237 + $0x48] sm:$0xf]
        %v294 = vld [vmem:[%s237 + $0x4c] sm:$0xf]
        %v295 = vld [vmem:[%s237 + $0x50] sm:$0xf]
        %v296 = vld [vmem:[%s237 + $0x54] sm:$0xf]
        %v297 = vld [vmem:[%s237 + $0x58] sm:$0xf]
        %v298 = vld [vmem:[%s237 + $0x5c] sm:$0xf]
        %v299 = vld [vmem:[%s237 + $0x60] sm:$0xf]
        %v300 = vld [vmem:[%s237 + $0x64] sm:$0xf]
        %v301 = vld [vmem:[%s237 + $0x68] sm:$0xf]
        %v302 = vld [vmem:[%s237 + $0x6c] sm:$0xf]
        %v303 = vld [vmem:[%s237 + $0x70] sm:$0xf]
        %v304 = vld [vmem:[%s237 + $0x74] sm:$0xf]
        %v305 = vld [vmem:[%s237 + $0x78] sm:$0xf]
        %v306 = vld [vmem:[%s237 + $0x7c] sm:$0xf]
        %v307 = vld [vmem:[#allocation5] sm:$0xff]
        %v308 = vld [vmem:[#allocation5 + $0x8] sm:$0xff]
        %v309 = vld [vmem:[#allocation5 + $0x10] sm:$0xff]
        %v310 = vld [vmem:[#allocation5 + $0x18] sm:$0xff]
        %v311 = vld [vmem:[#allocation5 + $0x20] sm:$0xff]
        %v312 = vld [vmem:[#allocation5 + $0x28] sm:$0xff]
        %v313 = vld [vmem:[#allocation5 + $0x30] sm:$0xff]
        %v314 = vld [vmem:[#allocation5 + $0x38] sm:$0xff]
        %v315 = vld [vmem:[#allocation5 + $0x40] sm:$0xff]
        %v316 = vld [vmem:[#allocation5 + $0x48] sm:$0xff]
        %v317 = vld [vmem:[#allocation5 + $0x50] sm:$0xff]
        %v318 = vld [vmem:[#allocation5 + $0x58] sm:$0xff]
        %v319 = vld [vmem:[#allocation5 + $0x60] sm:$0xff]
        %v320 = vld [vmem:[#allocation5 + $0x68] sm:$0xff]
        %v321 = vld [vmem:[#allocation5 + $0x70] sm:$0xff]
        %v322 = vld [vmem:[#allocation5 + $0x78] sm:$0xff]
        %v323 = vld [vmem:[#allocation5 + $0x80] sm:$0xff]
        %v324 = vld [vmem:[#allocation5 + $0x88] sm:$0xff]
        %v325 = vld [vmem:[#allocation5 + $0x90] sm:$0xff]
        %v326 = vld [vmem:[#allocation5 + $0x98] sm:$0xff]
        %v327 = vld [vmem:[#allocation5 + $0xa0] sm:$0xff]
        %v328 = vld [vmem:[#allocation5 + $0xa8] sm:$0xff]
        %v329 = vld [vmem:[#allocation5 + $0xb0] sm:$0xff]
        %v330 = vld [vmem:[#allocation5 + $0xb8] sm:$0xff]
        %v331 = vld [vmem:[#allocation5 + $0xc0] sm:$0xff]
        %v332 = vld [vmem:[#allocation5 + $0xc8] sm:$0xff]
        %v333 = vld [vmem:[#allocation5 + $0xd0] sm:$0xff]
        %v334 = vld [vmem:[#allocation5 + $0xd8] sm:$0xff]
        %v335 = vld [vmem:[#allocation5 + $0xe0] sm:$0xff]
        %v336 = vld [vmem:[#allocation5 + $0xe8] sm:$0xff]
        %v337 = vld [vmem:[#allocation5 + $0xf0] sm:$0xff]
        %v338 = vld [vmem:[#allocation5 + $0xf8] sm:$0xff]
        %v339 = vld [vmem:[%s2] sm:$0xf]
        %v341 = vlaneseq
        %v342 = vshrl.u32 %v341, 7
        %v343 = vsub.s32 0, %v342
        %v344 = vrot.slane %v339, %v343
        %v345 = vlaneseq
        %v346 = vshrl.u32 %v345, 7
        %v347 = vsub.s32 1, %v346
        %v348 = vrot.slane %v339, %v347
        %v349 = vlaneseq
        %v350 = vshrl.u32 %v349, 7
        %v351 = vsub.s32 2, %v350
        %v352 = vrot.slane %v339, %v351
        %v353 = vlaneseq
        %v354 = vshrl.u32 %v353, 7
        %v355 = vsub.s32 3, %v354
        %v356 = vrot.slane %v339, %v355
        %v393 = vunpack.c.l.b16 %v275
        %v394 = vunpack.c.l.b16 %v276
        %v395 = vunpack.c.l.b16 %v277
        %v396 = vunpack.c.l.b16 %v278
        %v397 = vunpack.c.l.b16 %v279
        %v398 = vunpack.c.l.b16 %v280
        %v399 = vunpack.c.l.b16 %v281
        %v400 = vunpack.c.l.b16 %v282
        %v401 = vunpack.c.l.b16 %v283
        %v402 = vunpack.c.l.b16 %v284
        %v403 = vunpack.c.l.b16 %v285
        %v404 = vunpack.c.l.b16 %v286
        %v405 = vunpack.c.l.b16 %v287
        %v406 = vunpack.c.l.b16 %v288
        %v407 = vunpack.c.l.b16 %v289
        %v408 = vunpack.c.l.b16 %v290
        %v409 = vunpack.c.l.b16 %v291
        %v410 = vunpack.c.l.b16 %v292
        %v411 = vunpack.c.l.b16 %v293
        %v412 = vunpack.c.l.b16 %v294
        %v413 = vunpack.c.l.b16 %v295
        %v414 = vunpack.c.l.b16 %v296
        %v415 = vunpack.c.l.b16 %v297
        %v416 = vunpack.c.l.b16 %v298
        %v417 = vunpack.c.l.b16 %v299
        %v418 = vunpack.c.l.b16 %v300
        %v419 = vunpack.c.l.b16 %v301
        %v420 = vunpack.c.l.b16 %v302
        %v421 = vunpack.c.l.b16 %v303
        %v422 = vunpack.c.l.b16 %v304
        %v423 = vunpack.c.l.b16 %v305
        %v424 = vunpack.c.l.b16 %v306
        %v425 = vpack.c.b16 %v394, %v393
        %v426 = vpack.c.b16 %v396, %v395
        %v427 = vpack.c.b16 %v398, %v397
        %v428 = vpack.c.b16 %v400, %v399
        %v429 = vpack.c.b16 %v402, %v401
        %v430 = vpack.c.b16 %v404, %v403
        %v431 = vpack.c.b16 %v406, %v405
        %v432 = vpack.c.b16 %v408, %v407
        %v433 = vpack.c.b16 %v410, %v409
        %v434 = vpack.c.b16 %v412, %v411
        %v435 = vpack.c.b16 %v414, %v413
        %v436 = vpack.c.b16 %v416, %v415
        %v437 = vpack.c.b16 %v418, %v417
        %v438 = vpack.c.b16 %v420, %v419
        %v439 = vpack.c.b16 %v422, %v421
        %v440 = vpack.c.b16 %v424, %v423
        %v489 = vunpack.c.l.b16 %v307
        %v490 = vunpack.c.h.b16 %v307
        %v491 = vunpack.c.l.b16 %v308
        %v492 = vunpack.c.h.b16 %v308
        %v493 = vunpack.c.l.b16 %v309
        %v494 = vunpack.c.h.b16 %v309
        %v495 = vunpack.c.l.b16 %v310
        %v496 = vunpack.c.h.b16 %v310
        %v497 = vunpack.c.l.b16 %v311
        %v498 = vunpack.c.h.b16 %v311
        %v499 = vunpack.c.l.b16 %v312
        %v500 = vunpack.c.h.b16 %v312
        %v501 = vunpack.c.l.b16 %v313
        %v502 = vunpack.c.h.b16 %v313
        %v503 = vunpack.c.l.b16 %v314
        %v504 = vunpack.c.h.b16 %v314
        %v505 = vunpack.c.l.b16 %v315
        %v506 = vunpack.c.h.b16 %v315
        %v507 = vunpack.c.l.b16 %v316
        %v508 = vunpack.c.h.b16 %v316
        %v509 = vunpack.c.l.b16 %v317
        %v510 = vunpack.c.h.b16 %v317
        %v511 = vunpack.c.l.b16 %v318
        %v512 = vunpack.c.h.b16 %v318
        %v513 = vunpack.c.l.b16 %v319
        %v514 = vunpack.c.h.b16 %v319
        %v515 = vunpack.c.l.b16 %v320
        %v516 = vunpack.c.h.b16 %v320
        %v517 = vunpack.c.l.b16 %v321
        %v518 = vunpack.c.h.b16 %v321
        %v519 = vunpack.c.l.b16 %v322
        %v520 = vunpack.c.h.b16 %v322
        %v521 = vunpack.c.l.b16 %v323
        %v522 = vunpack.c.h.b16 %v323
        %v523 = vunpack.c.l.b16 %v324
        %v524 = vunpack.c.h.b16 %v324
        %v525 = vunpack.c.l.b16 %v325
        %v526 = vunpack.c.h.b16 %v325
        %v527 = vunpack.c.l.b16 %v326
        %v528 = vunpack.c.h.b16 %v326
        %v529 = vunpack.c.l.b16 %v327
        %v530 = vunpack.c.h.b16 %v327
        %v531 = vunpack.c.l.b16 %v328
        %v532 = vunpack.c.h.b16 %v328
        %v533 = vunpack.c.l.b16 %v329
        %v534 = vunpack.c.h.b16 %v329
        %v535 = vunpack.c.l.b16 %v330
        %v536 = vunpack.c.h.b16 %v330
        %v537 = vunpack.c.l.b16 %v331
        %v538 = vunpack.c.h.b16 %v331
        %v539 = vunpack.c.l.b16 %v332
        %v540 = vunpack.c.h.b16 %v332
        %v541 = vunpack.c.l.b16 %v333
        %v542 = vunpack.c.h.b16 %v333
        %v543 = vunpack.c.l.b16 %v334
        %v544 = vunpack.c.h.b16 %v334
        %v545 = vunpack.c.l.b16 %v335
        %v546 = vunpack.c.h.b16 %v335
        %v547 = vunpack.c.l.b16 %v336
        %v548 = vunpack.c.h.b16 %v336
        %v549 = vunpack.c.l.b16 %v337
        %v550 = vunpack.c.h.b16 %v337
        %v551 = vunpack.c.l.b16 %v338
        %v552 = vunpack.c.h.b16 %v338
        %v553 = vpack.c.b16 %v493, %v489
        %v554 = vpack.c.b16 %v494, %v490
        %v555 = vpack.c.b16 %v495, %v491
        %v556 = vpack.c.b16 %v496, %v492
        %v557 = vpack.c.b16 %v501, %v497
        %v558 = vpack.c.b16 %v502, %v498
        %v559 = vpack.c.b16 %v503, %v499
        %v560 = vpack.c.b16 %v504, %v500
        %v561 = vpack.c.b16 %v509, %v505
        %v562 = vpack.c.b16 %v510, %v506
        %v563 = vpack.c.b16 %v511, %v507
        %v564 = vpack.c.b16 %v512, %v508
        %v565 = vpack.c.b16 %v517, %v513
        %v566 = vpack.c.b16 %v518, %v514
        %v567 = vpack.c.b16 %v519, %v515
        %v568 = vpack.c.b16 %v520, %v516
        %v569 = vpack.c.b16 %v525, %v521
        %v570 = vpack.c.b16 %v526, %v522
        %v571 = vpack.c.b16 %v527, %v523
        %v572 = vpack.c.b16 %v528, %v524
        %v573 = vpack.c.b16 %v533, %v529
        %v574 = vpack.c.b16 %v534, %v530
        %v575 = vpack.c.b16 %v535, %v531
        %v576 = vpack.c.b16 %v536, %v532
        %v577 = vpack.c.b16 %v541, %v537
        %v578 = vpack.c.b16 %v542, %v538
        %v579 = vpack.c.b16 %v543, %v539
        %v580 = vpack.c.b16 %v544, %v540
        %v581 = vpack.c.b16 %v549, %v545
        %v582 = vpack.c.b16 %v550, %v546
        %v583 = vpack.c.b16 %v551, %v547
        %v584 = vpack.c.b16 %v552, %v548
        %617 = vmatprep.subr.bf16.mxu0 %v554
        %618 = vmatpush1.bf16.msra.mxu0 %v553
        %619 = vmatprep.subr.bf16.mxu0 %v558
        %620 = vmatpush1.bf16.msra.mxu0 %v557
        %621 = vmatprep.subr.bf16.mxu0 %v562
        %622 = vmatpush1.bf16.msra.mxu0 %v561
        %623 = vmatprep.subr.bf16.mxu0 %v566
        %624 = vmatpush1.bf16.msra.mxu0 %v565
        %625 = vmatprep.subr.bf16.mxu0 %v570
        %626 = vmatpush1.bf16.msra.mxu0 %v569
        %627 = vmatprep.subr.bf16.mxu0 %v574
        %628 = vmatpush1.bf16.msra.mxu0 %v573
        %629 = vmatprep.subr.bf16.mxu0 %v578
        %630 = vmatpush1.bf16.msra.mxu0 %v577
        %631 = vmatprep.subr.bf16.mxu0 %v582
        %632 = vmatpush1.bf16.msra.mxu0 %v581
        %633 = vmatprep.subr.bf16.mxu0 0
        %634 = vmatpush1.bf16.msra.mxu0 0
        %635 = vmatprep.subr.bf16.mxu0 0
        %636 = vmatpush1.bf16.msra.mxu0 0
        %637 = vmatprep.subr.bf16.mxu0 0
        %638 = vmatpush1.bf16.msra.mxu0 0
        %639 = vmatprep.subr.bf16.mxu0 0
        %640 = vmatpush1.bf16.msra.mxu0 0
        %641 = vmatprep.subr.bf16.mxu0 0
        %642 = vmatpush1.bf16.msra.mxu0 0
        %643 = vmatprep.subr.bf16.mxu0 0
        %644 = vmatpush1.bf16.msra.mxu0 0
        %645 = vmatprep.subr.bf16.mxu0 0
        %646 = vmatpush1.bf16.msra.mxu0 0
        %647 = vmatprep.subr.bf16.mxu0 0
        %648 = vmatpush1.bf16.msra.mxu0 0
        %649 = vmatprep.mubr.bf16.mxu0 0
        %650 = vmatmul.mubr.bf16.gmra.mrb[0].mxu0 %v425
        %v651 = vpop.f32.mrb[0].mxu0
        %v652 = vadd.f32 %v344, %v651
        %v653 = vpop.f32.mrb[0].mxu0
        %v654 = vadd.f32 %v348, %v653
        %v655 = vpop.f32.mrb[0].mxu0
        %v656 = vadd.f32 %v344, %v655
        %v657 = vpop.f32.mrb[0].mxu0
        %v658 = vadd.f32 %v348, %v657
        %659 = vmatprep.mubr.bf16.mxu0 0
        %660 = vmatmul.mubr.bf16.gmra.mrb[0].mxu0 %v426
        %v661 = vpop.f32.mrb[0].mxu0
        %v662 = vadd.f32 %v344, %v661
        %v663 = vpop.f32.mrb[0].mxu0
        %v664 = vadd.f32 %v348, %v663
        %v665 = vpop.f32.mrb[0].mxu0
        %v666 = vadd.f32 %v344, %v665
        %v667 = vpop.f32.mrb[0].mxu0
        %v668 = vadd.f32 %v348, %v667
        %669 = vmatprep.mubr.bf16.mxu0 0
        %670 = vmatmul.mubr.bf16.gmra.mrb[0].mxu0 %v427
        %v671 = vpop.f32.mrb[0].mxu0
        %v672 = vadd.f32 %v344, %v671
        %v673 = vpop.f32.mrb[0].mxu0
        %v674 = vadd.f32 %v348, %v673
        %v675 = vpop.f32.mrb[0].mxu0
        %v676 = vadd.f32 %v344, %v675
        %v677 = vpop.f32.mrb[0].mxu0
        %v678 = vadd.f32 %v348, %v677
        %679 = vmatprep.mubr.bf16.mxu0 0
        %680 = vmatmul.mubr.bf16.gmra.mrb[0].mxu0 %v428
        %v681 = vpop.f32.mrb[0].mxu0
        %v682 = vadd.f32 %v344, %v681
        %v683 = vpop.f32.mrb[0].mxu0
        %v684 = vadd.f32 %v348, %v683
        %v685 = vpop.f32.mrb[0].mxu0
        %v686 = vadd.f32 %v344, %v685
        %v687 = vpop.f32.mrb[0].mxu0
        %v688 = vadd.f32 %v348, %v687
        %689 = vmatprep.mubr.bf16.mxu0 0
        %690 = vmatmul.mubr.bf16.gmra.mrb[0].mxu0 %v429
        %v691 = vpop.f32.mrb[0].mxu0
        %v692 = vadd.f32 %v344, %v691
        %v693 = vpop.f32.mrb[0].mxu0
        %v694 = vadd.f32 %v348, %v693
        %v695 = vpop.f32.mrb[0].mxu0
        %v696 = vadd.f32 %v344, %v695
        %v697 = vpop.f32.mrb[0].mxu0
        %v698 = vadd.f32 %v348, %v697
        %699 = vmatprep.mubr.bf16.mxu0 0
        %700 = vmatmul.mubr.bf16.gmra.mrb[0].mxu0 %v430
        %v701 = vpop.f32.mrb[0].mxu0
        %v702 = vadd.f32 %v344, %v701
        %v703 = vpop.f32.mrb[0].mxu0
        %v704 = vadd.f32 %v348, %v703
        %v705 = vpop.f32.mrb[0].mxu0
        %v706 = vadd.f32 %v344, %v705
        %v707 = vpop.f32.mrb[0].mxu0
        %v708 = vadd.f32 %v348, %v707
        %709 = vmatprep.mubr.bf16.mxu0 0
        %710 = vmatmul.mubr.bf16.gmra.mrb[0].mxu0 %v431
        %v711 = vpop.f32.mrb[0].mxu0
        %v712 = vadd.f32 %v344, %v711
        %v713 = vpop.f32.mrb[0].mxu0
        %v714 = vadd.f32 %v348, %v713
        %v715 = vpop.f32.mrb[0].mxu0
        %v716 = vadd.f32 %v344, %v715
        %v717 = vpop.f32.mrb[0].mxu0
        %v718 = vadd.f32 %v348, %v717
        %719 = vmatprep.mubr.bf16.mxu0 0
        %720 = vmatmul.mubr.bf16.gmra.mrb[0].mxu0 %v432
        %v721 = vpop.f32.mrb[0].mxu0
        %v722 = vadd.f32 %v344, %v721
        %v723 = vpop.f32.mrb[0].mxu0
        %v724 = vadd.f32 %v348, %v723
        %v725 = vpop.f32.mrb[0].mxu0
        %v726 = vadd.f32 %v344, %v725
        %v727 = vpop.f32.mrb[0].mxu0
        %v728 = vadd.f32 %v348, %v727
        %729 = vmatprep.mubr.bf16.mxu0 0
        %730 = vmatmul.mubr.bf16.gmra.mrb[0].mxu0 %v433
        %v731 = vpop.f32.mrb[0].mxu0
        %v732 = vadd.f32 %v344, %v731
        %v733 = vpop.f32.mrb[0].mxu0
        %v734 = vadd.f32 %v348, %v733
        %v735 = vpop.f32.mrb[0].mxu0
        %v736 = vadd.f32 %v344, %v735
        %v737 = vpop.f32.mrb[0].mxu0
        %v738 = vadd.f32 %v348, %v737
        %739 = vmatprep.mubr.bf16.mxu0 0
        %740 = vmatmul.mubr.bf16.gmra.mrb[0].mxu0 %v434
        %v741 = vpop.f32.mrb[0].mxu0
        %v742 = vadd.f32 %v344, %v741
        %v743 = vpop.f32.mrb[0].mxu0
        %v744 = vadd.f32 %v348, %v743
        %v745 = vpop.f32.mrb[0].mxu0
        %v746 = vadd.f32 %v344, %v745
        %v747 = vpop.f32.mrb[0].mxu0
        %v748 = vadd.f32 %v348, %v747
        %749 = vmatprep.mubr.bf16.mxu0 0
        %750 = vmatmul.mubr.bf16.gmra.mrb[0].mxu0 %v435
        %v751 = vpop.f32.mrb[0].mxu0
        %v752 = vadd.f32 %v344, %v751
        %v753 = vpop.f32.mrb[0].mxu0
        %v754 = vadd.f32 %v348, %v753
        %v755 = vpop.f32.mrb[0].mxu0
        %v756 = vadd.f32 %v344, %v755
        %v757 = vpop.f32.mrb[0].mxu0
        %v758 = vadd.f32 %v348, %v757
        %759 = vmatprep.mubr.bf16.mxu0 0
        %760 = vmatmul.mubr.bf16.gmra.mrb[0].mxu0 %v436
        %v761 = vpop.f32.mrb[0].mxu0
        %v762 = vadd.f32 %v344, %v761
        %v763 = vpop.f32.mrb[0].mxu0
        %v764 = vadd.f32 %v348, %v763
        %v765 = vpop.f32.mrb[0].mxu0
        %v766 = vadd.f32 %v344, %v765
        %v767 = vpop.f32.mrb[0].mxu0
        %v768 = vadd.f32 %v348, %v767
        %769 = vmatprep.mubr.bf16.mxu0 0
        %770 = vmatmul.mubr.bf16.gmra.mrb[0].mxu0 %v437
        %v771 = vpop.f32.mrb[0].mxu0
        %v772 = vadd.f32 %v344, %v771
        %v773 = vpop.f32.mrb[0].mxu0
        %v774 = vadd.f32 %v348, %v773
        %v775 = vpop.f32.mrb[0].mxu0
        %v776 = vadd.f32 %v344, %v775
        %v777 = vpop.f32.mrb[0].mxu0
        %v778 = vadd.f32 %v348, %v777
        %779 = vmatprep.mubr.bf16.mxu0 0
        %780 = vmatmul.mubr.bf16.gmra.mrb[0].mxu0 %v438
        %v781 = vpop.f32.mrb[0].mxu0
        %v782 = vadd.f32 %v344, %v781
        %v783 = vpop.f32.mrb[0].mxu0
        %v784 = vadd.f32 %v348, %v783
        %v785 = vpop.f32.mrb[0].mxu0
        %v786 = vadd.f32 %v344, %v785
        %v787 = vpop.f32.mrb[0].mxu0
        %v788 = vadd.f32 %v348, %v787
        %789 = vmatprep.mubr.bf16.mxu0 0
        %790 = vmatmul.mubr.bf16.gmra.mrb[0].mxu0 %v439
        %v791 = vpop.f32.mrb[0].mxu0
        %v792 = vadd.f32 %v344, %v791
        %v793 = vpop.f32.mrb[0].mxu0
        %v794 = vadd.f32 %v348, %v793
        %v795 = vpop.f32.mrb[0].mxu0
        %v796 = vadd.f32 %v344, %v795
        %v797 = vpop.f32.mrb[0].mxu0
        %v798 = vadd.f32 %v348, %v797
        %799 = vmatprep.mubr.bf16.mxu0 0
        %800 = vmatmul.mubr.bf16.gmra.mrb[0].mxu0 %v440
        %v801 = vpop.f32.mrb[0].mxu0
        %v802 = vadd.f32 %v344, %v801
        %v803 = vpop.f32.mrb[0].mxu0
        %v804 = vadd.f32 %v348, %v803
        %v805 = vpop.f32.mrb[0].mxu0
        %v806 = vadd.f32 %v344, %v805
        %v807 = vpop.f32.mrb[0].mxu0
        %v808 = vadd.f32 %v348, %v807
        %809 = vdwg.mxu0
        %810 = vmatprep.subr.bf16.mxu0 %v556
        %811 = vmatpush1.bf16.msra.mxu0 %v555
        %812 = vmatprep.subr.bf16.mxu0 %v560
        %813 = vmatpush1.bf16.msra.mxu0 %v559
        %814 = vmatprep.subr.bf16.mxu0 %v564
        %815 = vmatpush1.bf16.msra.mxu0 %v563
        %816 = vmatprep.subr.bf16.mxu0 %v568
        %817 = vmatpush1.bf16.msra.mxu0 %v567
        %818 = vmatprep.subr.bf16.mxu0 %v572
        %819 = vmatpush1.bf16.msra.mxu0 %v571
        %820 = vmatprep.subr.bf16.mxu0 %v576
        %821 = vmatpush1.bf16.msra.mxu0 %v575
        %822 = vmatprep.subr.bf16.mxu0 %v580
        %823 = vmatpush1.bf16.msra.mxu0 %v579
        %824 = vmatprep.subr.bf16.mxu0 %v584
        %825 = vmatpush1.bf16.msra.mxu0 %v583
        %826 = vmatprep.subr.bf16.mxu0 0
        %827 = vmatpush1.bf16.msra.mxu0 0
        %828 = vmatprep.subr.bf16.mxu0 0
        %829 = vmatpush1.bf16.msra.mxu0 0
        %830 = vmatprep.subr.bf16.mxu0 0
        %831 = vmatpush1.bf16.msra.mxu0 0
        %832 = vmatprep.subr.bf16.mxu0 0
        %833 = vmatpush1.bf16.msra.mxu0 0
        %834 = vmatprep.subr.bf16.mxu0 0
        %835 = vmatpush1.bf16.msra.mxu0 0
        %836 = vmatprep.subr.bf16.mxu0 0
        %837 = vmatpush1.bf16.msra.mxu0 0
        %838 = vmatprep.subr.bf16.mxu0 0
        %839 = vmatpush1.bf16.msra.mxu0 0
        %840 = vmatprep.subr.bf16.mxu0 0
        %841 = vmatpush1.bf16.msra.mxu0 0
        %842 = vmatprep.mubr.bf16.mxu0 0
        %843 = vmatmul.mubr.bf16.gmra.mrb[0].mxu0 %v425
        %v844 = vpop.f32.mrb[0].mxu0
        %v845 = vadd.f32 %v352, %v844
        %v846 = vpop.f32.mrb[0].mxu0
        %v847 = vadd.f32 %v356, %v846
        %v848 = vpop.f32.mrb[0].mxu0
        %v849 = vadd.f32 %v352, %v848
        %v850 = vpop.f32.mrb[0].mxu0
        %v851 = vadd.f32 %v356, %v850
        %852 = vmatprep.mubr.bf16.mxu0 0
        %853 = vmatmul.mubr.bf16.gmra.mrb[0].mxu0 %v426
        %v854 = vpop.f32.mrb[0].mxu0
        %v855 = vadd.f32 %v352, %v854
        %v856 = vpop.f32.mrb[0].mxu0
        %v857 = vadd.f32 %v356, %v856
        %v858 = vpop.f32.mrb[0].mxu0
        %v859 = vadd.f32 %v352, %v858
        %v860 = vpop.f32.mrb[0].mxu0
        %v861 = vadd.f32 %v356, %v860
        %862 = vmatprep.mubr.bf16.mxu0 0
        %863 = vmatmul.mubr.bf16.gmra.mrb[0].mxu0 %v427
        %v864 = vpop.f32.mrb[0].mxu0
        %v865 = vadd.f32 %v352, %v864
        %v866 = vpop.f32.mrb[0].mxu0
        %v867 = vadd.f32 %v356, %v866
        %v868 = vpop.f32.mrb[0].mxu0
        %v869 = vadd.f32 %v352, %v868
        %v870 = vpop.f32.mrb[0].mxu0
        %v871 = vadd.f32 %v356, %v870
        %872 = vmatprep.mubr.bf16.mxu0 0
        %873 = vmatmul.mubr.bf16.gmra.mrb[0].mxu0 %v428
        %v874 = vpop.f32.mrb[0].mxu0
        %v875 = vadd.f32 %v352, %v874
        %v876 = vpop.f32.mrb[0].mxu0
        %v877 = vadd.f32 %v356, %v876
        %v878 = vpop.f32.mrb[0].mxu0
        %v879 = vadd.f32 %v352, %v878
        %v880 = vpop.f32.mrb[0].mxu0
        %v881 = vadd.f32 %v356, %v880
        %882 = vmatprep.mubr.bf16.mxu0 0
        %883 = vmatmul.mubr.bf16.gmra.mrb[0].mxu0 %v429
        %v884 = vpop.f32.mrb[0].mxu0
        %v885 = vadd.f32 %v352, %v884
        %v886 = vpop.f32.mrb[0].mxu0
        %v887 = vadd.f32 %v356, %v886
        %v888 = vpop.f32.mrb[0].mxu0
        %v889 = vadd.f32 %v352, %v888
        %v890 = vpop.f32.mrb[0].mxu0
        %v891 = vadd.f32 %v356, %v890
        %892 = vmatprep.mubr.bf16.mxu0 0
        %893 = vmatmul.mubr.bf16.gmra.mrb[0].mxu0 %v430
        %v894 = vpop.f32.mrb[0].mxu0
        %v895 = vadd.f32 %v352, %v894
        %v896 = vpop.f32.mrb[0].mxu0
        %v897 = vadd.f32 %v356, %v896
        %v898 = vpop.f32.mrb[0].mxu0
        %v899 = vadd.f32 %v352, %v898
        %v900 = vpop.f32.mrb[0].mxu0
        %v901 = vadd.f32 %v356, %v900
        %902 = vmatprep.mubr.bf16.mxu0 0
        %903 = vmatmul.mubr.bf16.gmra.mrb[0].mxu0 %v431
        %v904 = vpop.f32.mrb[0].mxu0
        %v905 = vadd.f32 %v352, %v904
        %v906 = vpop.f32.mrb[0].mxu0
        %v907 = vadd.f32 %v356, %v906
        %v908 = vpop.f32.mrb[0].mxu0
        %v909 = vadd.f32 %v352, %v908
        %v910 = vpop.f32.mrb[0].mxu0
        %v911 = vadd.f32 %v356, %v910
        %912 = vmatprep.mubr.bf16.mxu0 0
        %913 = vmatmul.mubr.bf16.gmra.mrb[0].mxu0 %v432
        %v914 = vpop.f32.mrb[0].mxu0
        %v915 = vadd.f32 %v352, %v914
        %v916 = vpop.f32.mrb[0].mxu0
        %v917 = vadd.f32 %v356, %v916
        %v918 = vpop.f32.mrb[0].mxu0
        %v919 = vadd.f32 %v352, %v918
        %v920 = vpop.f32.mrb[0].mxu0
        %v921 = vadd.f32 %v356, %v920
        %922 = vmatprep.mubr.bf16.mxu0 0
        %923 = vmatmul.mubr.bf16.gmra.mrb[0].mxu0 %v433
        %v924 = vpop.f32.mrb[0].mxu0
        %v925 = vadd.f32 %v352, %v924
        %v926 = vpop.f32.mrb[0].mxu0
        %v927 = vadd.f32 %v356, %v926
        %v928 = vpop.f32.mrb[0].mxu0
        %v929 = vadd.f32 %v352, %v928
        %v930 = vpop.f32.mrb[0].mxu0
        %v931 = vadd.f32 %v356, %v930
        %932 = vmatprep.mubr.bf16.mxu0 0
        %933 = vmatmul.mubr.bf16.gmra.mrb[0].mxu0 %v434
        %v934 = vpop.f32.mrb[0].mxu0
        %v935 = vadd.f32 %v352, %v934
        %v936 = vpop.f32.mrb[0].mxu0
        %v937 = vadd.f32 %v356, %v936
        %v938 = vpop.f32.mrb[0].mxu0
        %v939 = vadd.f32 %v352, %v938
        %v940 = vpop.f32.mrb[0].mxu0
        %v941 = vadd.f32 %v356, %v940
        %942 = vmatprep.mubr.bf16.mxu0 0
        %943 = vmatmul.mubr.bf16.gmra.mrb[0].mxu0 %v435
        %v944 = vpop.f32.mrb[0].mxu0
        %v945 = vadd.f32 %v352, %v944
        %v946 = vpop.f32.mrb[0].mxu0
        %v947 = vadd.f32 %v356, %v946
        %v948 = vpop.f32.mrb[0].mxu0
        %v949 = vadd.f32 %v352, %v948
        %v950 = vpop.f32.mrb[0].mxu0
        %v951 = vadd.f32 %v356, %v950
        %952 = vmatprep.mubr.bf16.mxu0 0
        %953 = vmatmul.mubr.bf16.gmra.mrb[0].mxu0 %v436
        %v954 = vpop.f32.mrb[0].mxu0
        %v955 = vadd.f32 %v352, %v954
        %v956 = vpop.f32.mrb[0].mxu0
        %v957 = vadd.f32 %v356, %v956
        %v958 = vpop.f32.mrb[0].mxu0
        %v959 = vadd.f32 %v352, %v958
        %v960 = vpop.f32.mrb[0].mxu0
        %v961 = vadd.f32 %v356, %v960
        %962 = vmatprep.mubr.bf16.mxu0 0
        %963 = vmatmul.mubr.bf16.gmra.mrb[0].mxu0 %v437
        %v964 = vpop.f32.mrb[0].mxu0
        %v965 = vadd.f32 %v352, %v964
        %v966 = vpop.f32.mrb[0].mxu0
        %v967 = vadd.f32 %v356, %v966
        %v968 = vpop.f32.mrb[0].mxu0
        %v969 = vadd.f32 %v352, %v968
        %v970 = vpop.f32.mrb[0].mxu0
        %v971 = vadd.f32 %v356, %v970
        %972 = vmatprep.mubr.bf16.mxu0 0
        %973 = vmatmul.mubr.bf16.gmra.mrb[0].mxu0 %v438
        %v974 = vpop.f32.mrb[0].mxu0
        %v975 = vadd.f32 %v352, %v974
        %v976 = vpop.f32.mrb[0].mxu0
        %v977 = vadd.f32 %v356, %v976
        %v978 = vpop.f32.mrb[0].mxu0
        %v979 = vadd.f32 %v352, %v978
        %v980 = vpop.f32.mrb[0].mxu0
        %v981 = vadd.f32 %v356, %v980
        %982 = vmatprep.mubr.bf16.mxu0 0
        %983 = vmatmul.mubr.bf16.gmra.mrb[0].mxu0 %v439
        %v984 = vpop.f32.mrb[0].mxu0
        %v985 = vadd.f32 %v352, %v984
        %v986 = vpop.f32.mrb[0].mxu0
        %v987 = vadd.f32 %v356, %v986
        %v988 = vpop.f32.mrb[0].mxu0
        %v989 = vadd.f32 %v352, %v988
        %v990 = vpop.f32.mrb[0].mxu0
        %v991 = vadd.f32 %v356, %v990
        %992 = vmatprep.mubr.bf16.mxu0 0
        %993 = vmatmul.mubr.bf16.gmra.mrb[0].mxu0 %v440
        %v994 = vpop.f32.mrb[0].mxu0
        %v995 = vadd.f32 %v352, %v994
        %v996 = vpop.f32.mrb[0].mxu0
        %v997 = vadd.f32 %v356, %v996
        %v998 = vpop.f32.mrb[0].mxu0
        %v999 = vadd.f32 %v352, %v998
        %v1000 = vpop.f32.mrb[0].mxu0
        %v1001 = vadd.f32 %v356, %v1000
        %1002 = vdwg.mxu0
        %v1003 = vmul.f32 %v652, 0.5
        %v1004 = vmul.f32 %v654, 0.5
        %v1005 = vmul.f32 %v845, 0.5
        %v1006 = vmul.f32 %v847, 0.5
        %v1007 = vmul.f32 %v656, 0.5
        %v1008 = vmul.f32 %v658, 0.5
        %v1009 = vmul.f32 %v849, 0.5
        %v1010 = vmul.f32 %v851, 0.5
        %v1011 = vmul.f32 %v662, 0.5
        %v1012 = vmul.f32 %v664, 0.5
        %v1013 = vmul.f32 %v855, 0.5
        %v1014 = vmul.f32 %v857, 0.5
        %v1015 = vmul.f32 %v666, 0.5
        %v1016 = vmul.f32 %v668, 0.5
        %v1017 = vmul.f32 %v859, 0.5
        %v1018 = vmul.f32 %v861, 0.5
        %v1019 = vmul.f32 %v672, 0.5
        %v1020 = vmul.f32 %v674, 0.5
        %v1021 = vmul.f32 %v865, 0.5
        %v1022 = vmul.f32 %v867, 0.5
        %v1023 = vmul.f32 %v676, 0.5
        %v1024 = vmul.f32 %v678, 0.5
        %v1025 = vmul.f32 %v869, 0.5
        %v1026 = vmul.f32 %v871, 0.5
        %v1027 = vmul.f32 %v682, 0.5
        %v1028 = vmul.f32 %v684, 0.5
        %v1029 = vmul.f32 %v875, 0.5
        %v1030 = vmul.f32 %v877, 0.5
        %v1031 = vmul.f32 %v686, 0.5
        %v1032 = vmul.f32 %v688, 0.5
        %v1033 = vmul.f32 %v879, 0.5
        %v1034 = vmul.f32 %v881, 0.5
        %v1035 = vmul.f32 %v692, 0.5
        %v1036 = vmul.f32 %v694, 0.5
        %v1037 = vmul.f32 %v885, 0.5
        %v1038 = vmul.f32 %v887, 0.5
        %v1039 = vmul.f32 %v696, 0.5
        %v1040 = vmul.f32 %v698, 0.5
        %v1041 = vmul.f32 %v889, 0.5
        %v1042 = vmul.f32 %v891, 0.5
        %v1043 = vmul.f32 %v702, 0.5
        %v1044 = vmul.f32 %v704, 0.5
        %v1045 = vmul.f32 %v895, 0.5
        %v1046 = vmul.f32 %v897, 0.5
        %v1047 = vmul.f32 %v706, 0.5
        %v1048 = vmul.f32 %v708, 0.5
        %v1049 = vmul.f32 %v899, 0.5
        %v1050 = vmul.f32 %v901, 0.5
        %v1051 = vmul.f32 %v712, 0.5
        %v1052 = vmul.f32 %v714, 0.5
        %v1053 = vmul.f32 %v905, 0.5
        %v1054 = vmul.f32 %v907, 0.5
        %v1055 = vmul.f32 %v716, 0.5
        %v1056 = vmul.f32 %v718, 0.5
        %v1057 = vmul.f32 %v909, 0.5
        %v1058 = vmul.f32 %v911, 0.5
        %v1059 = vmul.f32 %v722, 0.5
        %v1060 = vmul.f32 %v724, 0.5
        %v1061 = vmul.f32 %v915, 0.5
        %v1062 = vmul.f32 %v917, 0.5
        %v1063 = vmul.f32 %v726, 0.5
        %v1064 = vmul.f32 %v728, 0.5
        %v1065 = vmul.f32 %v919, 0.5
        %v1066 = vmul.f32 %v921, 0.5
        %v1067 = vmul.f32 %v732, 0.5
        %v1068 = vmul.f32 %v734, 0.5
        %v1069 = vmul.f32 %v925, 0.5
        %v1070 = vmul.f32 %v927, 0.5
        %v1071 = vmul.f32 %v736, 0.5
        %v1072 = vmul.f32 %v738, 0.5
        %v1073 = vmul.f32 %v929, 0.5
        %v1074 = vmul.f32 %v931, 0.5
        %v1075 = vmul.f32 %v742, 0.5
        %v1076 = vmul.f32 %v744, 0.5
        %v1077 = vmul.f32 %v935, 0.5
        %v1078 = vmul.f32 %v937, 0.5
        %v1079 = vmul.f32 %v746, 0.5
        %v1080 = vmul.f32 %v748, 0.5
        %v1081 = vmul.f32 %v939, 0.5
        %v1082 = vmul.f32 %v941, 0.5
        %v1083 = vmul.f32 %v752, 0.5
        %v1084 = vmul.f32 %v754, 0.5
        %v1085 = vmul.f32 %v945, 0.5
        %v1086 = vmul.f32 %v947, 0.5
        %v1087 = vmul.f32 %v756, 0.5
        %v1088 = vmul.f32 %v758, 0.5
        %v1089 = vmul.f32 %v949, 0.5
        %v1090 = vmul.f32 %v951, 0.5
        %v1091 = vmul.f32 %v762, 0.5
        %v1092 = vmul.f32 %v764, 0.5
        %v1093 = vmul.f32 %v955, 0.5
        %v1094 = vmul.f32 %v957, 0.5
        %v1095 = vmul.f32 %v766, 0.5
        %v1096 = vmul.f32 %v768, 0.5
        %v1097 = vmul.f32 %v959, 0.5
        %v1098 = vmul.f32 %v961, 0.5
        %v1099 = vmul.f32 %v772, 0.5
        %v1100 = vmul.f32 %v774, 0.5
        %v1101 = vmul.f32 %v965, 0.5
        %v1102 = vmul.f32 %v967, 0.5
        %v1103 = vmul.f32 %v776, 0.5
        %v1104 = vmul.f32 %v778, 0.5
        %v1105 = vmul.f32 %v969, 0.5
        %v1106 = vmul.f32 %v971, 0.5
        %v1107 = vmul.f32 %v782, 0.5
        %v1108 = vmul.f32 %v784, 0.5
        %v1109 = vmul.f32 %v975, 0.5
        %v1110 = vmul.f32 %v977, 0.5
        %v1111 = vmul.f32 %v786, 0.5
        %v1112 = vmul.f32 %v788, 0.5
        %v1113 = vmul.f32 %v979, 0.5
        %v1114 = vmul.f32 %v981, 0.5
        %v1115 = vmul.f32 %v792, 0.5
        %v1116 = vmul.f32 %v794, 0.5
        %v1117 = vmul.f32 %v985, 0.5
        %v1118 = vmul.f32 %v987, 0.5
        %v1119 = vmul.f32 %v796, 0.5
        %v1120 = vmul.f32 %v798, 0.5
        %v1121 = vmul.f32 %v989, 0.5
        %v1122 = vmul.f32 %v991, 0.5
        %v1123 = vmul.f32 %v802, 0.5
        %v1124 = vmul.f32 %v804, 0.5
        %v1125 = vmul.f32 %v995, 0.5
        %v1126 = vmul.f32 %v997, 0.5
        %v1127 = vmul.f32 %v806, 0.5
        %v1128 = vmul.f32 %v808, 0.5
        %v1129 = vmul.f32 %v999, 0.5
        %v1130 = vmul.f32 %v1001, 0.5
        %v1131 = vmul.f32 %v652, 0.70710677
        %v1132 = vmul.f32 %v654, 0.70710677
        %v1133 = vmul.f32 %v845, 0.70710677
        %v1134 = vmul.f32 %v847, 0.70710677
        %v1135 = vmul.f32 %v656, 0.70710677
        %v1136 = vmul.f32 %v658, 0.70710677
        %v1137 = vmul.f32 %v849, 0.70710677
        %v1138 = vmul.f32 %v851, 0.70710677
        %v1139 = vmul.f32 %v662, 0.70710677
        %v1140 = vmul.f32 %v664, 0.70710677
        %v1141 = vmul.f32 %v855, 0.70710677
        %v1142 = vmul.f32 %v857, 0.70710677
        %v1143 = vmul.f32 %v666, 0.70710677
        %v1144 = vmul.f32 %v668, 0.70710677
        %v1145 = vmul.f32 %v859, 0.70710677
        %v1146 = vmul.f32 %v861, 0.70710677
        %v1147 = vmul.f32 %v672, 0.70710677
        %v1148 = vmul.f32 %v674, 0.70710677
        %v1149 = vmul.f32 %v865, 0.70710677
        %v1150 = vmul.f32 %v867, 0.70710677
        %v1151 = vmul.f32 %v676, 0.70710677
        %v1152 = vmul.f32 %v678, 0.70710677
        %v1153 = vmul.f32 %v869, 0.70710677
        %v1154 = vmul.f32 %v871, 0.70710677
        %v1155 = vmul.f32 %v682, 0.70710677
        %v1156 = vmul.f32 %v684, 0.70710677
        %v1157 = vmul.f32 %v875, 0.70710677
        %v1158 = vmul.f32 %v877, 0.70710677
        %v1159 = vmul.f32 %v686, 0.70710677
        %v1160 = vmul.f32 %v688, 0.70710677
        %v1161 = vmul.f32 %v879, 0.70710677
        %v1162 = vmul.f32 %v881, 0.70710677
        %v1163 = vmul.f32 %v692, 0.70710677
        %v1164 = vmul.f32 %v694, 0.70710677
        %v1165 = vmul.f32 %v885, 0.70710677
        %v1166 = vmul.f32 %v887, 0.70710677
        %v1167 = vmul.f32 %v696, 0.70710677
        %v1168 = vmul.f32 %v698, 0.70710677
        %v1169 = vmul.f32 %v889, 0.70710677
        %v1170 = vmul.f32 %v891, 0.70710677
        %v1171 = vmul.f32 %v702, 0.70710677
        %v1172 = vmul.f32 %v704, 0.70710677
        %v1173 = vmul.f32 %v895, 0.70710677
        %v1174 = vmul.f32 %v897, 0.70710677
        %v1175 = vmul.f32 %v706, 0.70710677
        %v1176 = vmul.f32 %v708, 0.70710677
        %v1177 = vmul.f32 %v899, 0.70710677
        %v1178 = vmul.f32 %v901, 0.70710677
        %v1179 = vmul.f32 %v712, 0.70710677
        %v1180 = vmul.f32 %v714, 0.70710677
        %v1181 = vmul.f32 %v905, 0.70710677
        %v1182 = vmul.f32 %v907, 0.70710677
        %v1183 = vmul.f32 %v716, 0.70710677
        %v1184 = vmul.f32 %v718, 0.70710677
        %v1185 = vmul.f32 %v909, 0.70710677
        %v1186 = vmul.f32 %v911, 0.70710677
        %v1187 = vmul.f32 %v722, 0.70710677
        %v1188 = vmul.f32 %v724, 0.70710677
        %v1189 = vmul.f32 %v915, 0.70710677
        %v1190 = vmul.f32 %v917, 0.70710677
        %v1191 = vmul.f32 %v726, 0.70710677
        %v1192 = vmul.f32 %v728, 0.70710677
        %v1193 = vmul.f32 %v919, 0.70710677
        %v1194 = vmul.f32 %v921, 0.70710677
        %v1195 = vmul.f32 %v732, 0.70710677
        %v1196 = vmul.f32 %v734, 0.70710677
        %v1197 = vmul.f32 %v925, 0.70710677
        %v1198 = vmul.f32 %v927, 0.70710677
        %v1199 = vmul.f32 %v736, 0.70710677
        %v1200 = vmul.f32 %v738, 0.70710677
        %v1201 = vmul.f32 %v929, 0.70710677
        %v1202 = vmul.f32 %v931, 0.70710677
        %v1203 = vmul.f32 %v742, 0.70710677
        %v1204 = vmul.f32 %v744, 0.70710677
        %v1205 = vmul.f32 %v935, 0.70710677
        %v1206 = vmul.f32 %v937, 0.70710677
        %v1207 = vmul.f32 %v746, 0.70710677
        %v1208 = vmul.f32 %v748, 0.70710677
        %v1209 = vmul.f32 %v939, 0.70710677
        %v1210 = vmul.f32 %v941, 0.70710677
        %v1211 = vmul.f32 %v752, 0.70710677
        %v1212 = vmul.f32 %v754, 0.70710677
        %v1213 = vmul.f32 %v945, 0.70710677
        %v1214 = vmul.f32 %v947, 0.70710677
        %v1215 = vmul.f32 %v756, 0.70710677
        %v1216 = vmul.f32 %v758, 0.70710677
        %v1217 = vmul.f32 %v949, 0.70710677
        %v1218 = vmul.f32 %v951, 0.70710677
        %v1219 = vmul.f32 %v762, 0.70710677
        %v1220 = vmul.f32 %v764, 0.70710677
        %v1221 = vmul.f32 %v955, 0.70710677
        %v1222 = vmul.f32 %v957, 0.70710677
        %v1223 = vmul.f32 %v766, 0.70710677
        %v1224 = vmul.f32 %v768, 0.70710677
        %v1225 = vmul.f32 %v959, 0.70710677
        %v1226 = vmul.f32 %v961, 0.70710677
        %v1227 = vmul.f32 %v772, 0.70710677
        %v1228 = vmul.f32 %v774, 0.70710677
        %v1229 = vmul.f32 %v965, 0.70710677
        %v1230 = vmul.f32 %v967, 0.70710677
        %v1231 = vmul.f32 %v776, 0.70710677
        %v1232 = vmul.f32 %v778, 0.70710677
        %v1233 = vmul.f32 %v969, 0.70710677
        %v1234 = vmul.f32 %v971, 0.70710677
        %v1235 = vmul.f32 %v782, 0.70710677
        %v1236 = vmul.f32 %v784, 0.70710677
        %v1237 = vmul.f32 %v975, 0.70710677
        %v1238 = vmul.f32 %v977, 0.70710677
        %v1239 = vmul.f32 %v786, 0.70710677
        %v1240 = vmul.f32 %v788, 0.70710677
        %v1241 = vmul.f32 %v979, 0.70710677
        %v1242 = vmul.f32 %v981, 0.70710677
        %v1243 = vmul.f32 %v792, 0.70710677
        %v1244 = vmul.f32 %v794, 0.70710677
        %v1245 = vmul.f32 %v985, 0.70710677
        %v1246 = vmul.f32 %v987, 0.70710677
        %v1247 = vmul.f32 %v796, 0.70710677
        %v1248 = vmul.f32 %v798, 0.70710677
        %v1249 = vmul.f32 %v989, 0.70710677
        %v1250 = vmul.f32 %v991, 0.70710677
        %v1251 = vmul.f32 %v802, 0.70710677
        %v1252 = vmul.f32 %v804, 0.70710677
        %v1253 = vmul.f32 %v995, 0.70710677
        %v1254 = vmul.f32 %v997, 0.70710677
        %v1255 = vmul.f32 %v806, 0.70710677
        %v1256 = vmul.f32 %v808, 0.70710677
        %v1257 = vmul.f32 %v999, 0.70710677
        %v1258 = vmul.f32 %v1001, 0.70710677
        %v1259 = vand.u32 2147483647, %v1131
        %v1260 = vand.u32 2147483647, %v1132
        %v1261 = vand.u32 2147483647, %v1133
        %v1262 = vand.u32 2147483647, %v1134
        %v1263 = vand.u32 2147483647, %v1135
        %v1264 = vand.u32 2147483647, %v1136
        %v1265 = vand.u32 2147483647, %v1137
        %v1266 = vand.u32 2147483647, %v1138
        %v1267 = vand.u32 2147483647, %v1139
        %v1268 = vand.u32 2147483647, %v1140
        %v1269 = vand.u32 2147483647, %v1141
        %v1270 = vand.u32 2147483647, %v1142
        %v1271 = vand.u32 2147483647, %v1143
        %v1272 = vand.u32 2147483647, %v1144
        %v1273 = vand.u32 2147483647, %v1145
        %v1274 = vand.u32 2147483647, %v1146
        %v1275 = vand.u32 2147483647, %v1147
        %v1276 = vand.u32 2147483647, %v1148
        %v1277 = vand.u32 2147483647, %v1149
        %v1278 = vand.u32 2147483647, %v1150
        %v1279 = vand.u32 2147483647, %v1151
        %v1280 = vand.u32 2147483647, %v1152
        %v1281 = vand.u32 2147483647, %v1153
        %v1282 = vand.u32 2147483647, %v1154
        %v1283 = vand.u32 2147483647, %v1155
        %v1284 = vand.u32 2147483647, %v1156
        %v1285 = vand.u32 2147483647, %v1157
        %v1286 = vand.u32 2147483647, %v1158
        %v1287 = vand.u32 2147483647, %v1159
        %v1288 = vand.u32 2147483647, %v1160
        %v1289 = vand.u32 2147483647, %v1161
        %v1290 = vand.u32 2147483647, %v1162
        %v1291 = vand.u32 2147483647, %v1163
        %v1292 = vand.u32 2147483647, %v1164
        %v1293 = vand.u32 2147483647, %v1165
        %v1294 = vand.u32 2147483647, %v1166
        %v1295 = vand.u32 2147483647, %v1167
        %v1296 = vand.u32 2147483647, %v1168
        %v1297 = vand.u32 2147483647, %v1169
        %v1298 = vand.u32 2147483647, %v1170
        %v1299 = vand.u32 2147483647, %v1171
        %v1300 = vand.u32 2147483647, %v1172
        %v1301 = vand.u32 2147483647, %v1173
        %v1302 = vand.u32 2147483647, %v1174
        %v1303 = vand.u32 2147483647, %v1175
        %v1304 = vand.u32 2147483647, %v1176
        %v1305 = vand.u32 2147483647, %v1177
        %v1306 = vand.u32 2147483647, %v1178
        %v1307 = vand.u32 2147483647, %v1179
        %v1308 = vand.u32 2147483647, %v1180
        %v1309 = vand.u32 2147483647, %v1181
        %v1310 = vand.u32 2147483647, %v1182
        %v1311 = vand.u32 2147483647, %v1183
        %v1312 = vand.u32 2147483647, %v1184
        %v1313 = vand.u32 2147483647, %v1185
        %v1314 = vand.u32 2147483647, %v1186
        %v1315 = vand.u32 2147483647, %v1187
        %v1316 = vand.u32 2147483647, %v1188
        %v1317 = vand.u32 2147483647, %v1189
        %v1318 = vand.u32 2147483647, %v1190
        %v1319 = vand.u32 2147483647, %v1191
        %v1320 = vand.u32 2147483647, %v1192
        %v1321 = vand.u32 2147483647, %v1193
        %v1322 = vand.u32 2147483647, %v1194
        %v1323 = vand.u32 2147483647, %v1195
        %v1324 = vand.u32 2147483647, %v1196
        %v1325 = vand.u32 2147483647, %v1197
        %v1326 = vand.u32 2147483647, %v1198
        %v1327 = vand.u32 2147483647, %v1199
        %v1328 = vand.u32 2147483647, %v1200
        %v1329 = vand.u32 2147483647, %v1201
        %v1330 = vand.u32 2147483647, %v1202
        %v1331 = vand.u32 2147483647, %v1203
        %v1332 = vand.u32 2147483647, %v1204
        %v1333 = vand.u32 2147483647, %v1205
        %v1334 = vand.u32 2147483647, %v1206
        %v1335 = vand.u32 2147483647, %v1207
        %v1336 = vand.u32 2147483647, %v1208
        %v1337 = vand.u32 2147483647, %v1209
        %v1338 = vand.u32 2147483647, %v1210
        %v1339 = vand.u32 2147483647, %v1211
        %v1340 = vand.u32 2147483647, %v1212
        %v1341 = vand.u32 2147483647, %v1213
        %v1342 = vand.u32 2147483647, %v1214
        %v1343 = vand.u32 2147483647, %v1215
        %v1344 = vand.u32 2147483647, %v1216
        %v1345 = vand.u32 2147483647, %v1217
        %v1346 = vand.u32 2147483647, %v1218
        %v1347 = vand.u32 2147483647, %v1219
        %v1348 = vand.u32 2147483647, %v1220
        %v1349 = vand.u32 2147483647, %v1221
        %v1350 = vand.u32 2147483647, %v1222
        %v1351 = vand.u32 2147483647, %v1223
        %v1352 = vand.u32 2147483647, %v1224
        %v1353 = vand.u32 2147483647, %v1225
        %v1354 = vand.u32 2147483647, %v1226
        %v1355 = vand.u32 2147483647, %v1227
        %v1356 = vand.u32 2147483647, %v1228
        %v1357 = vand.u32 2147483647, %v1229
        %v1358 = vand.u32 2147483647, %v1230
        %v1359 = vand.u32 2147483647, %v1231
        %v1360 = vand.u32 2147483647, %v1232
        %v1361 = vand.u32 2147483647, %v1233
        %v1362 = vand.u32 2147483647, %v1234
        %v1363 = vand.u32 2147483647, %v1235
        %v1364 = vand.u32 2147483647, %v1236
        %v1365 = vand.u32 2147483647, %v1237
        %v1366 = vand.u32 2147483647, %v1238
        %v1367 = vand.u32 2147483647, %v1239
        %v1368 = vand.u32 2147483647, %v1240
        %v1369 = vand.u32 2147483647, %v1241
        %v1370 = vand.u32 2147483647, %v1242
        %v1371 = vand.u32 2147483647, %v1243
        %v1372 = vand.u32 2147483647, %v1244
        %v1373 = vand.u32 2147483647, %v1245
        %v1374 = vand.u32 2147483647, %v1246
        %v1375 = vand.u32 2147483647, %v1247
        %v1376 = vand.u32 2147483647, %v1248
        %v1377 = vand.u32 2147483647, %v1249
        %v1378 = vand.u32 2147483647, %v1250
        %v1379 = vand.u32 2147483647, %v1251
        %v1380 = vand.u32 2147483647, %v1252
        %v1381 = vand.u32 2147483647, %v1253
        %v1382 = vand.u32 2147483647, %v1254
        %v1383 = vand.u32 2147483647, %v1255
        %v1384 = vand.u32 2147483647, %v1256
        %v1385 = vand.u32 2147483647, %v1257
        %v1386 = vand.u32 2147483647, %v1258
        %v1387 = vmul.f32 %v1259, 0.3275911
        %v1388 = vmul.f32 %v1260, 0.3275911
        %v1389 = vmul.f32 %v1261, 0.3275911
        %v1390 = vmul.f32 %v1262, 0.3275911
        %v1391 = vmul.f32 %v1263, 0.3275911
        %v1392 = vmul.f32 %v1264, 0.3275911
        %v1393 = vmul.f32 %v1265, 0.3275911
        %v1394 = vmul.f32 %v1266, 0.3275911
        %v1395 = vmul.f32 %v1267, 0.3275911
        %v1396 = vmul.f32 %v1268, 0.3275911
        %v1397 = vmul.f32 %v1269, 0.3275911
        %v1398 = vmul.f32 %v1270, 0.3275911
        %v1399 = vmul.f32 %v1271, 0.3275911
        %v1400 = vmul.f32 %v1272, 0.3275911
        %v1401 = vmul.f32 %v1273, 0.3275911
        %v1402 = vmul.f32 %v1274, 0.3275911
        %v1403 = vmul.f32 %v1275, 0.3275911
        %v1404 = vmul.f32 %v1276, 0.3275911
        %v1405 = vmul.f32 %v1277, 0.3275911
        %v1406 = vmul.f32 %v1278, 0.3275911
        %v1407 = vmul.f32 %v1279, 0.3275911
        %v1408 = vmul.f32 %v1280, 0.3275911
        %v1409 = vmul.f32 %v1281, 0.3275911
        %v1410 = vmul.f32 %v1282, 0.3275911
        %v1411 = vmul.f32 %v1283, 0.3275911
        %v1412 = vmul.f32 %v1284, 0.3275911
        %v1413 = vmul.f32 %v1285, 0.3275911
        %v1414 = vmul.f32 %v1286, 0.3275911
        %v1415 = vmul.f32 %v1287, 0.3275911
        %v1416 = vmul.f32 %v1288, 0.3275911
        %v1417 = vmul.f32 %v1289, 0.3275911
        %v1418 = vmul.f32 %v1290, 0.3275911
        %v1419 = vmul.f32 %v1291, 0.3275911
        %v1420 = vmul.f32 %v1292, 0.3275911
        %v1421 = vmul.f32 %v1293, 0.3275911
        %v1422 = vmul.f32 %v1294, 0.3275911
        %v1423 = vmul.f32 %v1295, 0.3275911
        %v1424 = vmul.f32 %v1296, 0.3275911
        %v1425 = vmul.f32 %v1297, 0.3275911
        %v1426 = vmul.f32 %v1298, 0.3275911
        %v1427 = vmul.f32 %v1299, 0.3275911
        %v1428 = vmul.f32 %v1300, 0.3275911
        %v1429 = vmul.f32 %v1301, 0.3275911
        %v1430 = vmul.f32 %v1302, 0.3275911
        %v1431 = vmul.f32 %v1303, 0.3275911
        %v1432 = vmul.f32 %v1304, 0.3275911
        %v1433 = vmul.f32 %v1305, 0.3275911
        %v1434 = vmul.f32 %v1306, 0.3275911
        %v1435 = vmul.f32 %v1307, 0.3275911
        %v1436 = vmul.f32 %v1308, 0.3275911
        %v1437 = vmul.f32 %v1309, 0.3275911
        %v1438 = vmul.f32 %v1310, 0.3275911
        %v1439 = vmul.f32 %v1311, 0.3275911
        %v1440 = vmul.f32 %v1312, 0.3275911
        %v1441 = vmul.f32 %v1313, 0.3275911
        %v1442 = vmul.f32 %v1314, 0.3275911
        %v1443 = vmul.f32 %v1315, 0.3275911
        %v1444 = vmul.f32 %v1316, 0.3275911
        %v1445 = vmul.f32 %v1317, 0.3275911
        %v1446 = vmul.f32 %v1318, 0.3275911
        %v1447 = vmul.f32 %v1319, 0.3275911
        %v1448 = vmul.f32 %v1320, 0.3275911
        %v1449 = vmul.f32 %v1321, 0.3275911
        %v1450 = vmul.f32 %v1322, 0.3275911
        %v1451 = vmul.f32 %v1323, 0.3275911
        %v1452 = vmul.f32 %v1324, 0.3275911
        %v1453 = vmul.f32 %v1325, 0.3275911
        %v1454 = vmul.f32 %v1326, 0.3275911
        %v1455 = vmul.f32 %v1327, 0.3275911
        %v1456 = vmul.f32 %v1328, 0.3275911
        %v1457 = vmul.f32 %v1329, 0.3275911
        %v1458 = vmul.f32 %v1330, 0.3275911
        %v1459 = vmul.f32 %v1331, 0.3275911
        %v1460 = vmul.f32 %v1332, 0.3275911
        %v1461 = vmul.f32 %v1333, 0.3275911
        %v1462 = vmul.f32 %v1334, 0.3275911
        %v1463 = vmul.f32 %v1335, 0.3275911
        %v1464 = vmul.f32 %v1336, 0.3275911
        %v1465 = vmul.f32 %v1337, 0.3275911
        %v1466 = vmul.f32 %v1338, 0.3275911
        %v1467 = vmul.f32 %v1339, 0.3275911
        %v1468 = vmul.f32 %v1340, 0.3275911
        %v1469 = vmul.f32 %v1341, 0.3275911
        %v1470 = vmul.f32 %v1342, 0.3275911
        %v1471 = vmul.f32 %v1343, 0.3275911
        %v1472 = vmul.f32 %v1344, 0.3275911
        %v1473 = vmul.f32 %v1345, 0.3275911
        %v1474 = vmul.f32 %v1346, 0.3275911
        %v1475 = vmul.f32 %v1347, 0.3275911
        %v1476 = vmul.f32 %v1348, 0.3275911
        %v1477 = vmul.f32 %v1349, 0.3275911
        %v1478 = vmul.f32 %v1350, 0.3275911
        %v1479 = vmul.f32 %v1351, 0.3275911
        %v1480 = vmul.f32 %v1352, 0.3275911
        %v1481 = vmul.f32 %v1353, 0.3275911
        %v1482 = vmul.f32 %v1354, 0.3275911
        %v1483 = vmul.f32 %v1355, 0.3275911
        %v1484 = vmul.f32 %v1356, 0.3275911
        %v1485 = vmul.f32 %v1357, 0.3275911
        %v1486 = vmul.f32 %v1358, 0.3275911
        %v1487 = vmul.f32 %v1359, 0.3275911
        %v1488 = vmul.f32 %v1360, 0.3275911
        %v1489 = vmul.f32 %v1361, 0.3275911
        %v1490 = vmul.f32 %v1362, 0.3275911
        %v1491 = vmul.f32 %v1363, 0.3275911
        %v1492 = vmul.f32 %v1364, 0.3275911
        %v1493 = vmul.f32 %v1365, 0.3275911
        %v1494 = vmul.f32 %v1366, 0.3275911
        %v1495 = vmul.f32 %v1367, 0.3275911
        %v1496 = vmul.f32 %v1368, 0.3275911
        %v1497 = vmul.f32 %v1369, 0.3275911
        %v1498 = vmul.f32 %v1370, 0.3275911
        %v1499 = vmul.f32 %v1371, 0.3275911
        %v1500 = vmul.f32 %v1372, 0.3275911
        %v1501 = vmul.f32 %v1373, 0.3275911
        %v1502 = vmul.f32 %v1374, 0.3275911
        %v1503 = vmul.f32 %v1375, 0.3275911
        %v1504 = vmul.f32 %v1376, 0.3275911
        %v1505 = vmul.f32 %v1377, 0.3275911
        %v1506 = vmul.f32 %v1378, 0.3275911
        %v1507 = vmul.f32 %v1379, 0.3275911
        %v1508 = vmul.f32 %v1380, 0.3275911
        %v1509 = vmul.f32 %v1381, 0.3275911
        %v1510 = vmul.f32 %v1382, 0.3275911
        %v1511 = vmul.f32 %v1383, 0.3275911
        %v1512 = vmul.f32 %v1384, 0.3275911
        %v1513 = vmul.f32 %v1385, 0.3275911
        %v1514 = vmul.f32 %v1386, 0.3275911
        %v1515 = vadd.f32 %v1387, 1.0
        %v1516 = vadd.f32 %v1388, 1.0
        %v1517 = vadd.f32 %v1389, 1.0
        %v1518 = vadd.f32 %v1390, 1.0
        %v1519 = vadd.f32 %v1391, 1.0
        %v1520 = vadd.f32 %v1392, 1.0
        %v1521 = vadd.f32 %v1393, 1.0
        %v1522 = vadd.f32 %v1394, 1.0
        %v1523 = vadd.f32 %v1395, 1.0
        %v1524 = vadd.f32 %v1396, 1.0
        %v1525 = vadd.f32 %v1397, 1.0
        %v1526 = vadd.f32 %v1398, 1.0
        %v1527 = vadd.f32 %v1399, 1.0
        %v1528 = vadd.f32 %v1400, 1.0
        %v1529 = vadd.f32 %v1401, 1.0
        %v1530 = vadd.f32 %v1402, 1.0
        %v1531 = vadd.f32 %v1403, 1.0
        %v1532 = vadd.f32 %v1404, 1.0
        %v1533 = vadd.f32 %v1405, 1.0
        %v1534 = vadd.f32 %v1406, 1.0
        %v1535 = vadd.f32 %v1407, 1.0
        %v1536 = vadd.f32 %v1408, 1.0
        %v1537 = vadd.f32 %v1409, 1.0
        %v1538 = vadd.f32 %v1410, 1.0
        %v1539 = vadd.f32 %v1411, 1.0
        %v1540 = vadd.f32 %v1412, 1.0
        %v1541 = vadd.f32 %v1413, 1.0
        %v1542 = vadd.f32 %v1414, 1.0
        %v1543 = vadd.f32 %v1415, 1.0
        %v1544 = vadd.f32 %v1416, 1.0
        %v1545 = vadd.f32 %v1417, 1.0
        %v1546 = vadd.f32 %v1418, 1.0
        %v1547 = vadd.f32 %v1419, 1.0
        %v1548 = vadd.f32 %v1420, 1.0
        %v1549 = vadd.f32 %v1421, 1.0
        %v1550 = vadd.f32 %v1422, 1.0
        %v1551 = vadd.f32 %v1423, 1.0
        %v1552 = vadd.f32 %v1424, 1.0
        %v1553 = vadd.f32 %v1425, 1.0
        %v1554 = vadd.f32 %v1426, 1.0
        %v1555 = vadd.f32 %v1427, 1.0
        %v1556 = vadd.f32 %v1428, 1.0
        %v1557 = vadd.f32 %v1429, 1.0
        %v1558 = vadd.f32 %v1430, 1.0
        %v1559 = vadd.f32 %v1431, 1.0
        %v1560 = vadd.f32 %v1432, 1.0
        %v1561 = vadd.f32 %v1433, 1.0
        %v1562 = vadd.f32 %v1434, 1.0
        %v1563 = vadd.f32 %v1435, 1.0
        %v1564 = vadd.f32 %v1436, 1.0
        %v1565 = vadd.f32 %v1437, 1.0
        %v1566 = vadd.f32 %v1438, 1.0
        %v1567 = vadd.f32 %v1439, 1.0
        %v1568 = vadd.f32 %v1440, 1.0
        %v1569 = vadd.f32 %v1441, 1.0
        %v1570 = vadd.f32 %v1442, 1.0
        %v1571 = vadd.f32 %v1443, 1.0
        %v1572 = vadd.f32 %v1444, 1.0
        %v1573 = vadd.f32 %v1445, 1.0
        %v1574 = vadd.f32 %v1446, 1.0
        %v1575 = vadd.f32 %v1447, 1.0
        %v1576 = vadd.f32 %v1448, 1.0
        %v1577 = vadd.f32 %v1449, 1.0
        %v1578 = vadd.f32 %v1450, 1.0
        %v1579 = vadd.f32 %v1451, 1.0
        %v1580 = vadd.f32 %v1452, 1.0
        %v1581 = vadd.f32 %v1453, 1.0
        %v1582 = vadd.f32 %v1454, 1.0
        %v1583 = vadd.f32 %v1455, 1.0
        %v1584 = vadd.f32 %v1456, 1.0
        %v1585 = vadd.f32 %v1457, 1.0
        %v1586 = vadd.f32 %v1458, 1.0
        %v1587 = vadd.f32 %v1459, 1.0
        %v1588 = vadd.f32 %v1460, 1.0
        %v1589 = vadd.f32 %v1461, 1.0
        %v1590 = vadd.f32 %v1462, 1.0
        %v1591 = vadd.f32 %v1463, 1.0
        %v1592 = vadd.f32 %v1464, 1.0
        %v1593 = vadd.f32 %v1465, 1.0
        %v1594 = vadd.f32 %v1466, 1.0
        %v1595 = vadd.f32 %v1467, 1.0
        %v1596 = vadd.f32 %v1468, 1.0
        %v1597 = vadd.f32 %v1469, 1.0
        %v1598 = vadd.f32 %v1470, 1.0
        %v1599 = vadd.f32 %v1471, 1.0
        %v1600 = vadd.f32 %v1472, 1.0
        %v1601 = vadd.f32 %v1473, 1.0
        %v1602 = vadd.f32 %v1474, 1.0
        %v1603 = vadd.f32 %v1475, 1.0
        %v1604 = vadd.f32 %v1476, 1.0
        %v1605 = vadd.f32 %v1477, 1.0
        %v1606 = vadd.f32 %v1478, 1.0
        %v1607 = vadd.f32 %v1479, 1.0
        %v1608 = vadd.f32 %v1480, 1.0
        %v1609 = vadd.f32 %v1481, 1.0
        %v1610 = vadd.f32 %v1482, 1.0
        %v1611 = vadd.f32 %v1483, 1.0
        %v1612 = vadd.f32 %v1484, 1.0
        %v1613 = vadd.f32 %v1485, 1.0
        %v1614 = vadd.f32 %v1486, 1.0
        %v1615 = vadd.f32 %v1487, 1.0
        %v1616 = vadd.f32 %v1488, 1.0
        %v1617 = vadd.f32 %v1489, 1.0
        %v1618 = vadd.f32 %v1490, 1.0
        %v1619 = vadd.f32 %v1491, 1.0
        %v1620 = vadd.f32 %v1492, 1.0
        %v1621 = vadd.f32 %v1493, 1.0
        %v1622 = vadd.f32 %v1494, 1.0
        %v1623 = vadd.f32 %v1495, 1.0
        %v1624 = vadd.f32 %v1496, 1.0
        %v1625 = vadd.f32 %v1497, 1.0
        %v1626 = vadd.f32 %v1498, 1.0
        %v1627 = vadd.f32 %v1499, 1.0
        %v1628 = vadd.f32 %v1500, 1.0
        %v1629 = vadd.f32 %v1501, 1.0
        %v1630 = vadd.f32 %v1502, 1.0
        %v1631 = vadd.f32 %v1503, 1.0
        %v1632 = vadd.f32 %v1504, 1.0
        %v1633 = vadd.f32 %v1505, 1.0
        %v1634 = vadd.f32 %v1506, 1.0
        %v1635 = vadd.f32 %v1507, 1.0
        %v1636 = vadd.f32 %v1508, 1.0
        %v1637 = vadd.f32 %v1509, 1.0
        %v1638 = vadd.f32 %v1510, 1.0
        %v1639 = vadd.f32 %v1511, 1.0
        %v1640 = vadd.f32 %v1512, 1.0
        %v1641 = vadd.f32 %v1513, 1.0
        %v1642 = vadd.f32 %v1514, 1.0
        %v1643 = vrcp.pop %v1515
        %v1644 = vmul.f32 1.0, %v1643
        %v1645 = vrcp.pop %v1516
        %v1646 = vmul.f32 1.0, %v1645
        %v1647 = vrcp.pop %v1517
        %v1648 = vmul.f32 1.0, %v1647
        %v1649 = vrcp.pop %v1518
        %v1650 = vmul.f32 1.0, %v1649
        %v1651 = vrcp.pop %v1519
        %v1652 = vmul.f32 1.0, %v1651
        %v1653 = vrcp.pop %v1520
        %v1654 = vmul.f32 1.0, %v1653
        %v1655 = vrcp.pop %v1521
        %v1656 = vmul.f32 1.0, %v1655
        %v1657 = vrcp.pop %v1522
        %v1658 = vmul.f32 1.0, %v1657
        %v1659 = vrcp.pop %v1523
        %v1660 = vmul.f32 1.0, %v1659
        %v1661 = vrcp.pop %v1524
        %v1662 = vmul.f32 1.0, %v1661
        %v1663 = vrcp.pop %v1525
        %v1664 = vmul.f32 1.0, %v1663
        %v1665 = vrcp.pop %v1526
        %v1666 = vmul.f32 1.0, %v1665
        %v1667 = vrcp.pop %v1527
        %v1668 = vmul.f32 1.0, %v1667
        %v1669 = vrcp.pop %v1528
        %v1670 = vmul.f32 1.0, %v1669
        %v1671 = vrcp.pop %v1529
        %v1672 = vmul.f32 1.0, %v1671
        %v1673 = vrcp.pop %v1530
        %v1674 = vmul.f32 1.0, %v1673
        %v1675 = vrcp.pop %v1531
        %v1676 = vmul.f32 1.0, %v1675
        %v1677 = vrcp.pop %v1532
        %v1678 = vmul.f32 1.0, %v1677
        %v1679 = vrcp.pop %v1533
        %v1680 = vmul.f32 1.0, %v1679
        %v1681 = vrcp.pop %v1534
        %v1682 = vmul.f32 1.0, %v1681
        %v1683 = vrcp.pop %v1535
        %v1684 = vmul.f32 1.0, %v1683
        %v1685 = vrcp.pop %v1536
        %v1686 = vmul.f32 1.0, %v1685
        %v1687 = vrcp.pop %v1537
        %v1688 = vmul.f32 1.0, %v1687
        %v1689 = vrcp.pop %v1538
        %v1690 = vmul.f32 1.0, %v1689
        %v1691 = vrcp.pop %v1539
        %v1692 = vmul.f32 1.0, %v1691
        %v1693 = vrcp.pop %v1540
        %v1694 = vmul.f32 1.0, %v1693
        %v1695 = vrcp.pop %v1541
        %v1696 = vmul.f32 1.0, %v1695
        %v1697 = vrcp.pop %v1542
        %v1698 = vmul.f32 1.0, %v1697
        %v1699 = vrcp.pop %v1543
        %v1700 = vmul.f32 1.0, %v1699
        %v1701 = vrcp.pop %v1544
        %v1702 = vmul.f32 1.0, %v1701
        %v1703 = vrcp.pop %v1545
        %v1704 = vmul.f32 1.0, %v1703
        %v1705 = vrcp.pop %v1546
        %v1706 = vmul.f32 1.0, %v1705
        %v1707 = vrcp.pop %v1547
        %v1708 = vmul.f32 1.0, %v1707
        %v1709 = vrcp.pop %v1548
        %v1710 = vmul.f32 1.0, %v1709
        %v1711 = vrcp.pop %v1549
        %v1712 = vmul.f32 1.0, %v1711
        %v1713 = vrcp.pop %v1550
        %v1714 = vmul.f32 1.0, %v1713
        %v1715 = vrcp.pop %v1551
        %v1716 = vmul.f32 1.0, %v1715
        %v1717 = vrcp.pop %v1552
        %v1718 = vmul.f32 1.0, %v1717
        %v1719 = vrcp.pop %v1553
        %v1720 = vmul.f32 1.0, %v1719
        %v1721 = vrcp.pop %v1554
        %v1722 = vmul.f32 1.0, %v1721
        %v1723 = vrcp.pop %v1555
        %v1724 = vmul.f32 1.0, %v1723
        %v1725 = vrcp.pop %v1556
        %v1726 = vmul.f32 1.0, %v1725
        %v1727 = vrcp.pop %v1557
        %v1728 = vmul.f32 1.0, %v1727
        %v1729 = vrcp.pop %v1558
        %v1730 = vmul.f32 1.0, %v1729
        %v1731 = vrcp.pop %v1559
        %v1732 = vmul.f32 1.0, %v1731
        %v1733 = vrcp.pop %v1560
        %v1734 = vmul.f32 1.0, %v1733
        %v1735 = vrcp.pop %v1561
        %v1736 = vmul.f32 1.0, %v1735
        %v1737 = vrcp.pop %v1562
        %v1738 = vmul.f32 1.0, %v1737
        %v1739 = vrcp.pop %v1563
        %v1740 = vmul.f32 1.0, %v1739
        %v1741 = vrcp.pop %v1564
        %v1742 = vmul.f32 1.0, %v1741
        %v1743 = vrcp.pop %v1565
        %v1744 = vmul.f32 1.0, %v1743
        %v1745 = vrcp.pop %v1566
        %v1746 = vmul.f32 1.0, %v1745
        %v1747 = vrcp.pop %v1567
        %v1748 = vmul.f32 1.0, %v1747
        %v1749 = vrcp.pop %v1568
        %v1750 = vmul.f32 1.0, %v1749
        %v1751 = vrcp.pop %v1569
        %v1752 = vmul.f32 1.0, %v1751
        %v1753 = vrcp.pop %v1570
        %v1754 = vmul.f32 1.0, %v1753
        %v1755 = vrcp.pop %v1571
        %v1756 = vmul.f32 1.0, %v1755
        %v1757 = vrcp.pop %v1572
        %v1758 = vmul.f32 1.0, %v1757
        %v1759 = vrcp.pop %v1573
        %v1760 = vmul.f32 1.0, %v1759
        %v1761 = vrcp.pop %v1574
        %v1762 = vmul.f32 1.0, %v1761
        %v1763 = vrcp.pop %v1575
        %v1764 = vmul.f32 1.0, %v1763
        %v1765 = vrcp.pop %v1576
        %v1766 = vmul.f32 1.0, %v1765
        %v1767 = vrcp.pop %v1577
        %v1768 = vmul.f32 1.0, %v1767
        %v1769 = vrcp.pop %v1578
        %v1770 = vmul.f32 1.0, %v1769
        %v1771 = vrcp.pop %v1579
        %v1772 = vmul.f32 1.0, %v1771
        %v1773 = vrcp.pop %v1580
        %v1774 = vmul.f32 1.0, %v1773
        %v1775 = vrcp.pop %v1581
        %v1776 = vmul.f32 1.0, %v1775
        %v1777 = vrcp.pop %v1582
        %v1778 = vmul.f32 1.0, %v1777
        %v1779 = vrcp.pop %v1583
        %v1780 = vmul.f32 1.0, %v1779
        %v1781 = vrcp.pop %v1584
        %v1782 = vmul.f32 1.0, %v1781
        %v1783 = vrcp.pop %v1585
        %v1784 = vmul.f32 1.0, %v1783
        %v1785 = vrcp.pop %v1586
        %v1786 = vmul.f32 1.0, %v1785
        %v1787 = vrcp.pop %v1587
        %v1788 = vmul.f32 1.0, %v1787
        %v1789 = vrcp.pop %v1588
        %v1790 = vmul.f32 1.0, %v1789
        %v1791 = vrcp.pop %v1589
        %v1792 = vmul.f32 1.0, %v1791
        %v1793 = vrcp.pop %v1590
        %v1794 = vmul.f32 1.0, %v1793
        %v1795 = vrcp.pop %v1591
        %v1796 = vmul.f32 1.0, %v1795
        %v1797 = vrcp.pop %v1592
        %v1798 = vmul.f32 1.0, %v1797
        %v1799 = vrcp.pop %v1593
        %v1800 = vmul.f32 1.0, %v1799
        %v1801 = vrcp.pop %v1594
        %v1802 = vmul.f32 1.0, %v1801
        %v1803 = vrcp.pop %v1595
        %v1804 = vmul.f32 1.0, %v1803
        %v1805 = vrcp.pop %v1596
        %v1806 = vmul.f32 1.0, %v1805
        %v1807 = vrcp.pop %v1597
        %v1808 = vmul.f32 1.0, %v1807
        %v1809 = vrcp.pop %v1598
        %v1810 = vmul.f32 1.0, %v1809
        %v1811 = vrcp.pop %v1599
        %v1812 = vmul.f32 1.0, %v1811
        %v1813 = vrcp.pop %v1600
        %v1814 = vmul.f32 1.0, %v1813
        %v1815 = vrcp.pop %v1601
        %v1816 = vmul.f32 1.0, %v1815
        %v1817 = vrcp.pop %v1602
        %v1818 = vmul.f32 1.0, %v1817
        %v1819 = vrcp.pop %v1603
        %v1820 = vmul.f32 1.0, %v1819
        %v1821 = vrcp.pop %v1604
        %v1822 = vmul.f32 1.0, %v1821
        %v1823 = vrcp.pop %v1605
        %v1824 = vmul.f32 1.0, %v1823
        %v1825 = vrcp.pop %v1606
        %v1826 = vmul.f32 1.0, %v1825
        %v1827 = vrcp.pop %v1607
        %v1828 = vmul.f32 1.0, %v1827
        %v1829 = vrcp.pop %v1608
        %v1830 = vmul.f32 1.0, %v1829
        %v1831 = vrcp.pop %v1609
        %v1832 = vmul.f32 1.0, %v1831
        %v1833 = vrcp.pop %v1610
        %v1834 = vmul.f32 1.0, %v1833
        %v1835 = vrcp.pop %v1611
        %v1836 = vmul.f32 1.0, %v1835
        %v1837 = vrcp.pop %v1612
        %v1838 = vmul.f32 1.0, %v1837
        %v1839 = vrcp.pop %v1613
        %v1840 = vmul.f32 1.0, %v1839
        %v1841 = vrcp.pop %v1614
        %v1842 = vmul.f32 1.0, %v1841
        %v1843 = vrcp.pop %v1615
        %v1844 = vmul.f32 1.0, %v1843
        %v1845 = vrcp.pop %v1616
        %v1846 = vmul.f32 1.0, %v1845
        %v1847 = vrcp.pop %v1617
        %v1848 = vmul.f32 1.0, %v1847
        %v1849 = vrcp.pop %v1618
        %v1850 = vmul.f32 1.0, %v1849
        %v1851 = vrcp.pop %v1619
        %v1852 = vmul.f32 1.0, %v1851
        %v1853 = vrcp.pop %v1620
        %v1854 = vmul.f32 1.0, %v1853
        %v1855 = vrcp.pop %v1621
        %v1856 = vmul.f32 1.0, %v1855
        %v1857 = vrcp.pop %v1622
        %v1858 = vmul.f32 1.0, %v1857
        %v1859 = vrcp.pop %v1623
        %v1860 = vmul.f32 1.0, %v1859
        %v1861 = vrcp.pop %v1624
        %v1862 = vmul.f32 1.0, %v1861
        %v1863 = vrcp.pop %v1625
        %v1864 = vmul.f32 1.0, %v1863
        %v1865 = vrcp.pop %v1626
        %v1866 = vmul.f32 1.0, %v1865
        %v1867 = vrcp.pop %v1627
        %v1868 = vmul.f32 1.0, %v1867
        %v1869 = vrcp.pop %v1628
        %v1870 = vmul.f32 1.0, %v1869
        %v1871 = vrcp.pop %v1629
        %v1872 = vmul.f32 1.0, %v1871
        %v1873 = vrcp.pop %v1630
        %v1874 = vmul.f32 1.0, %v1873
        %v1875 = vrcp.pop %v1631
        %v1876 = vmul.f32 1.0, %v1875
        %v1877 = vrcp.pop %v1632
        %v1878 = vmul.f32 1.0, %v1877
        %v1879 = vrcp.pop %v1633
        %v1880 = vmul.f32 1.0, %v1879
        %v1881 = vrcp.pop %v1634
        %v1882 = vmul.f32 1.0, %v1881
        %v1883 = vrcp.pop %v1635
        %v1884 = vmul.f32 1.0, %v1883
        %v1885 = vrcp.pop %v1636
        %v1886 = vmul.f32 1.0, %v1885
        %v1887 = vrcp.pop %v1637
        %v1888 = vmul.f32 1.0, %v1887
        %v1889 = vrcp.pop %v1638
        %v1890 = vmul.f32 1.0, %v1889
        %v1891 = vrcp.pop %v1639
        %v1892 = vmul.f32 1.0, %v1891
        %v1893 = vrcp.pop %v1640
        %v1894 = vmul.f32 1.0, %v1893
        %v1895 = vrcp.pop %v1641
        %v1896 = vmul.f32 1.0, %v1895
        %v1897 = vrcp.pop %v1642
        %v1898 = vmul.f32 1.0, %v1897
        %v1899 = vmul.f32 %v1644, 1.0614054
        %v1900 = vmul.f32 %v1646, 1.0614054
        %v1901 = vmul.f32 %v1648, 1.0614054
        %v1902 = vmul.f32 %v1650, 1.0614054
        %v1903 = vmul.f32 %v1652, 1.0614054
        %v1904 = vmul.f32 %v1654, 1.0614054
        %v1905 = vmul.f32 %v1656, 1.0614054
        %v1906 = vmul.f32 %v1658, 1.0614054
        %v1907 = vmul.f32 %v1660, 1.0614054
        %v1908 = vmul.f32 %v1662, 1.0614054
        %v1909 = vmul.f32 %v1664, 1.0614054
        %v1910 = vmul.f32 %v1666, 1.0614054
        %v1911 = vmul.f32 %v1668, 1.0614054
        %v1912 = vmul.f32 %v1670, 1.0614054
        %v1913 = vmul.f32 %v1672, 1.0614054
        %v1914 = vmul.f32 %v1674, 1.0614054
        %v1915 = vmul.f32 %v1676, 1.0614054
        %v1916 = vmul.f32 %v1678, 1.0614054
        %v1917 = vmul.f32 %v1680, 1.0614054
        %v1918 = vmul.f32 %v1682, 1.0614054
        %v1919 = vmul.f32 %v1684, 1.0614054
        %v1920 = vmul.f32 %v1686, 1.0614054
        %v1921 = vmul.f32 %v1688, 1.0614054
        %v1922 = vmul.f32 %v1690, 1.0614054
        %v1923 = vmul.f32 %v1692, 1.0614054
        %v1924 = vmul.f32 %v1694, 1.0614054
        %v1925 = vmul.f32 %v1696, 1.0614054
        %v1926 = vmul.f32 %v1698, 1.0614054
        %v1927 = vmul.f32 %v1700, 1.0614054
        %v1928 = vmul.f32 %v1702, 1.0614054
        %v1929 = vmul.f32 %v1704, 1.0614054
        %v1930 = vmul.f32 %v1706, 1.0614054
        %v1931 = vmul.f32 %v1708, 1.0614054
        %v1932 = vmul.f32 %v1710, 1.0614054
        %v1933 = vmul.f32 %v1712, 1.0614054
        %v1934 = vmul.f32 %v1714, 1.0614054
        %v1935 = vmul.f32 %v1716, 1.0614054
        %v1936 = vmul.f32 %v1718, 1.0614054
        %v1937 = vmul.f32 %v1720, 1.0614054
        %v1938 = vmul.f32 %v1722, 1.0614054
        %v1939 = vmul.f32 %v1724, 1.0614054
        %v1940 = vmul.f32 %v1726, 1.0614054
        %v1941 = vmul.f32 %v1728, 1.0614054
        %v1942 = vmul.f32 %v1730, 1.0614054
        %v1943 = vmul.f32 %v1732, 1.0614054
        %v1944 = vmul.f32 %v1734, 1.0614054
        %v1945 = vmul.f32 %v1736, 1.0614054
        %v1946 = vmul.f32 %v1738, 1.0614054
        %v1947 = vmul.f32 %v1740, 1.0614054
        %v1948 = vmul.f32 %v1742, 1.0614054
        %v1949 = vmul.f32 %v1744, 1.0614054
        %v1950 = vmul.f32 %v1746, 1.0614054
        %v1951 = vmul.f32 %v1748, 1.0614054
        %v1952 = vmul.f32 %v1750, 1.0614054
        %v1953 = vmul.f32 %v1752, 1.0614054
        %v1954 = vmul.f32 %v1754, 1.0614054
        %v1955 = vmul.f32 %v1756, 1.0614054
        %v1956 = vmul.f32 %v1758, 1.0614054
        %v1957 = vmul.f32 %v1760, 1.0614054
        %v1958 = vmul.f32 %v1762, 1.0614054
        %v1959 = vmul.f32 %v1764, 1.0614054
        %v1960 = vmul.f32 %v1766, 1.0614054
        %v1961 = vmul.f32 %v1768, 1.0614054
        %v1962 = vmul.f32 %v1770, 1.0614054
        %v1963 = vmul.f32 %v1772, 1.0614054
        %v1964 = vmul.f32 %v1774, 1.0614054
        %v1965 = vmul.f32 %v1776, 1.0614054
        %v1966 = vmul.f32 %v1778, 1.0614054
        %v1967 = vmul.f32 %v1780, 1.0614054
        %v1968 = vmul.f32 %v1782, 1.0614054
        %v1969 = vmul.f32 %v1784, 1.0614054
        %v1970 = vmul.f32 %v1786, 1.0614054
        %v1971 = vmul.f32 %v1788, 1.0614054
        %v1972 = vmul.f32 %v1790, 1.0614054
        %v1973 = vmul.f32 %v1792, 1.0614054
        %v1974 = vmul.f32 %v1794, 1.0614054
        %v1975 = vmul.f32 %v1796, 1.0614054
        %v1976 = vmul.f32 %v1798, 1.0614054
        %v1977 = vmul.f32 %v1800, 1.0614054
        %v1978 = vmul.f32 %v1802, 1.0614054
        %v1979 = vmul.f32 %v1804, 1.0614054
        %v1980 = vmul.f32 %v1806, 1.0614054
        %v1981 = vmul.f32 %v1808, 1.0614054
        %v1982 = vmul.f32 %v1810, 1.0614054
        %v1983 = vmul.f32 %v1812, 1.0614054
        %v1984 = vmul.f32 %v1814, 1.0614054
        %v1985 = vmul.f32 %v1816, 1.0614054
        %v1986 = vmul.f32 %v1818, 1.0614054
        %v1987 = vmul.f32 %v1820, 1.0614054
        %v1988 = vmul.f32 %v1822, 1.0614054
        %v1989 = vmul.f32 %v1824, 1.0614054
        %v1990 = vmul.f32 %v1826, 1.0614054
        %v1991 = vmul.f32 %v1828, 1.0614054
        %v1992 = vmul.f32 %v1830, 1.0614054
        %v1993 = vmul.f32 %v1832, 1.0614054
        %v1994 = vmul.f32 %v1834, 1.0614054
        %v1995 = vmul.f32 %v1836, 1.0614054
        %v1996 = vmul.f32 %v1838, 1.0614054
        %v1997 = vmul.f32 %v1840, 1.0614054
        %v1998 = vmul.f32 %v1842, 1.0614054
        %v1999 = vmul.f32 %v1844, 1.0614054
        %v2000 = vmul.f32 %v1846, 1.0614054
        %v2001 = vmul.f32 %v1848, 1.0614054
        %v2002 = vmul.f32 %v1850, 1.0614054
        %v2003 = vmul.f32 %v1852, 1.0614054
        %v2004 = vmul.f32 %v1854, 1.0614054
        %v2005 = vmul.f32 %v1856, 1.0614054
        %v2006 = vmul.f32 %v1858, 1.0614054
        %v2007 = vmul.f32 %v1860, 1.0614054
        %v2008 = vmul.f32 %v1862, 1.0614054
        %v2009 = vmul.f32 %v1864, 1.0614054
        %v2010 = vmul.f32 %v1866, 1.0614054
        %v2011 = vmul.f32 %v1868, 1.0614054
        %v2012 = vmul.f32 %v1870, 1.0614054
        %v2013 = vmul.f32 %v1872, 1.0614054
        %v2014 = vmul.f32 %v1874, 1.0614054
        %v2015 = vmul.f32 %v1876, 1.0614054
        %v2016 = vmul.f32 %v1878, 1.0614054
        %v2017 = vmul.f32 %v1880, 1.0614054
        %v2018 = vmul.f32 %v1882, 1.0614054
        %v2019 = vmul.f32 %v1884, 1.0614054
        %v2020 = vmul.f32 %v1886, 1.0614054
        %v2021 = vmul.f32 %v1888, 1.0614054
        %v2022 = vmul.f32 %v1890, 1.0614054
        %v2023 = vmul.f32 %v1892, 1.0614054
        %v2024 = vmul.f32 %v1894, 1.0614054
        %v2025 = vmul.f32 %v1896, 1.0614054
        %v2026 = vmul.f32 %v1898, 1.0614054
        %v2027 = vadd.f32 %v1899, -1.4531521
        %v2028 = vadd.f32 %v1900, -1.4531521
        %v2029 = vadd.f32 %v1901, -1.4531521
        %v2030 = vadd.f32 %v1902, -1.4531521
        %v2031 = vadd.f32 %v1903, -1.4531521
        %v2032 = vadd.f32 %v1904, -1.4531521
        %v2033 = vadd.f32 %v1905, -1.4531521
        %v2034 = vadd.f32 %v1906, -1.4531521
        %v2035 = vadd.f32 %v1907, -1.4531521
        %v2036 = vadd.f32 %v1908, -1.4531521
        %v2037 = vadd.f32 %v1909, -1.4531521
        %v2038 = vadd.f32 %v1910, -1.4531521
        %v2039 = vadd.f32 %v1911, -1.4531521
        %v2040 = vadd.f32 %v1912, -1.4531521
        %v2041 = vadd.f32 %v1913, -1.4531521
        %v2042 = vadd.f32 %v1914, -1.4531521
        %v2043 = vadd.f32 %v1915, -1.4531521
        %v2044 = vadd.f32 %v1916, -1.4531521
        %v2045 = vadd.f32 %v1917, -1.4531521
        %v2046 = vadd.f32 %v1918, -1.4531521
        %v2047 = vadd.f32 %v1919, -1.4531521
        %v2048 = vadd.f32 %v1920, -1.4531521
        %v2049 = vadd.f32 %v1921, -1.4531521
        %v2050 = vadd.f32 %v1922, -1.4531521
        %v2051 = vadd.f32 %v1923, -1.4531521
        %v2052 = vadd.f32 %v1924, -1.4531521
        %v2053 = vadd.f32 %v1925, -1.4531521
        %v2054 = vadd.f32 %v1926, -1.4531521
        %v2055 = vadd.f32 %v1927, -1.4531521
        %v2056 = vadd.f32 %v1928, -1.4531521
        %v2057 = vadd.f32 %v1929, -1.4531521
        %v2058 = vadd.f32 %v1930, -1.4531521
        %v2059 = vadd.f32 %v1931, -1.4531521
        %v2060 = vadd.f32 %v1932, -1.4531521
        %v2061 = vadd.f32 %v1933, -1.4531521
        %v2062 = vadd.f32 %v1934, -1.4531521
        %v2063 = vadd.f32 %v1935, -1.4531521
        %v2064 = vadd.f32 %v1936, -1.4531521
        %v2065 = vadd.f32 %v1937, -1.4531521
        %v2066 = vadd.f32 %v1938, -1.4531521
        %v2067 = vadd.f32 %v1939, -1.4531521
        %v2068 = vadd.f32 %v1940, -1.4531521
        %v2069 = vadd.f32 %v1941, -1.4531521
        %v2070 = vadd.f32 %v1942, -1.4531521
        %v2071 = vadd.f32 %v1943, -1.4531521
        %v2072 = vadd.f32 %v1944, -1.4531521
        %v2073 = vadd.f32 %v1945, -1.4531521
        %v2074 = vadd.f32 %v1946, -1.4531521
        %v2075 = vadd.f32 %v1947, -1.4531521
        %v2076 = vadd.f32 %v1948, -1.4531521
        %v2077 = vadd.f32 %v1949, -1.4531521
        %v2078 = vadd.f32 %v1950, -1.4531521
        %v2079 = vadd.f32 %v1951, -1.4531521
        %v2080 = vadd.f32 %v1952, -1.4531521
        %v2081 = vadd.f32 %v1953, -1.4531521
        %v2082 = vadd.f32 %v1954, -1.4531521
        %v2083 = vadd.f32 %v1955, -1.4531521
        %v2084 = vadd.f32 %v1956, -1.4531521
        %v2085 = vadd.f32 %v1957, -1.4531521
        %v2086 = vadd.f32 %v1958, -1.4531521
        %v2087 = vadd.f32 %v1959, -1.4531521
        %v2088 = vadd.f32 %v1960, -1.4531521
        %v2089 = vadd.f32 %v1961, -1.4531521
        %v2090 = vadd.f32 %v1962, -1.4531521
        %v2091 = vadd.f32 %v1963, -1.4531521
        %v2092 = vadd.f32 %v1964, -1.4531521
        %v2093 = vadd.f32 %v1965, -1.4531521
        %v2094 = vadd.f32 %v1966, -1.4531521
        %v2095 = vadd.f32 %v1967, -1.4531521
        %v2096 = vadd.f32 %v1968, -1.4531521
        %v2097 = vadd.f32 %v1969, -1.4531521
        %v2098 = vadd.f32 %v1970, -1.4531521
        %v2099 = vadd.f32 %v1971, -1.4531521
        %v2100 = vadd.f32 %v1972, -1.4531521
        %v2101 = vadd.f32 %v1973, -1.4531521
        %v2102 = vadd.f32 %v1974, -1.4531521
        %v2103 = vadd.f32 %v1975, -1.4531521
        %v2104 = vadd.f32 %v1976, -1.4531521
        %v2105 = vadd.f32 %v1977, -1.4531521
        %v2106 = vadd.f32 %v1978, -1.4531521
        %v2107 = vadd.f32 %v1979, -1.4531521
        %v2108 = vadd.f32 %v1980, -1.4531521
        %v2109 = vadd.f32 %v1981, -1.4531521
        %v2110 = vadd.f32 %v1982, -1.4531521
        %v2111 = vadd.f32 %v1983, -1.4531521
        %v2112 = vadd.f32 %v1984, -1.4531521
        %v2113 = vadd.f32 %v1985, -1.4531521
        %v2114 = vadd.f32 %v1986, -1.4531521
        %v2115 = vadd.f32 %v1987, -1.4531521
        %v2116 = vadd.f32 %v1988, -1.4531521
        %v2117 = vadd.f32 %v1989, -1.4531521
        %v2118 = vadd.f32 %v1990, -1.4531521
        %v2119 = vadd.f32 %v1991, -1.4531521
        %v2120 = vadd.f32 %v1992, -1.4531521
        %v2121 = vadd.f32 %v1993, -1.4531521
        %v2122 = vadd.f32 %v1994, -1.4531521
        %v2123 = vadd.f32 %v1995, -1.4531521
        %v2124 = vadd.f32 %v1996, -1.4531521
        %v2125 = vadd.f32 %v1997, -1.4531521
        %v2126 = vadd.f32 %v1998, -1.4531521
        %v2127 = vadd.f32 %v1999, -1.4531521
        %v2128 = vadd.f32 %v2000, -1.4531521
        %v2129 = vadd.f32 %v2001, -1.4531521
        %v2130 = vadd.f32 %v2002, -1.4531521
        %v2131 = vadd.f32 %v2003, -1.4531521
        %v2132 = vadd.f32 %v2004, -1.4531521
        %v2133 = vadd.f32 %v2005, -1.4531521
        %v2134 = vadd.f32 %v2006, -1.4531521
        %v2135 = vadd.f32 %v2007, -1.4531521
        %v2136 = vadd.f32 %v2008, -1.4531521
        %v2137 = vadd.f32 %v2009, -1.4531521
        %v2138 = vadd.f32 %v2010, -1.4531521
        %v2139 = vadd.f32 %v2011, -1.4531521
        %v2140 = vadd.f32 %v2012, -1.4531521
        %v2141 = vadd.f32 %v2013, -1.4531521
        %v2142 = vadd.f32 %v2014, -1.4531521
        %v2143 = vadd.f32 %v2015, -1.4531521
        %v2144 = vadd.f32 %v2016, -1.4531521
        %v2145 = vadd.f32 %v2017, -1.4531521
        %v2146 = vadd.f32 %v2018, -1.4531521
        %v2147 = vadd.f32 %v2019, -1.4531521
        %v2148 = vadd.f32 %v2020, -1.4531521
        %v2149 = vadd.f32 %v2021, -1.4531521
        %v2150 = vadd.f32 %v2022, -1.4531521
        %v2151 = vadd.f32 %v2023, -1.4531521
        %v2152 = vadd.f32 %v2024, -1.4531521
        %v2153 = vadd.f32 %v2025, -1.4531521
        %v2154 = vadd.f32 %v2026, -1.4531521
        %v2155 = vmul.f32 %v2027, %v1644
        %v2156 = vmul.f32 %v2028, %v1646
        %v2157 = vmul.f32 %v2029, %v1648
        %v2158 = vmul.f32 %v2030, %v1650
        %v2159 = vmul.f32 %v2031, %v1652
        %v2160 = vmul.f32 %v2032, %v1654
        %v2161 = vmul.f32 %v2033, %v1656
        %v2162 = vmul.f32 %v2034, %v1658
        %v2163 = vmul.f32 %v2035, %v1660
        %v2164 = vmul.f32 %v2036, %v1662
        %v2165 = vmul.f32 %v2037, %v1664
        %v2166 = vmul.f32 %v2038, %v1666
        %v2167 = vmul.f32 %v2039, %v1668
        %v2168 = vmul.f32 %v2040, %v1670
        %v2169 = vmul.f32 %v2041, %v1672
        %v2170 = vmul.f32 %v2042, %v1674
        %v2171 = vmul.f32 %v2043, %v1676
        %v2172 = vmul.f32 %v2044, %v1678
        %v2173 = vmul.f32 %v2045, %v1680
        %v2174 = vmul.f32 %v2046, %v1682
        %v2175 = vmul.f32 %v2047, %v1684
        %v2176 = vmul.f32 %v2048, %v1686
        %v2177 = vmul.f32 %v2049, %v1688
        %v2178 = vmul.f32 %v2050, %v1690
        %v2179 = vmul.f32 %v2051, %v1692
        %v2180 = vmul.f32 %v2052, %v1694
        %v2181 = vmul.f32 %v2053, %v1696
        %v2182 = vmul.f32 %v2054, %v1698
        %v2183 = vmul.f32 %v2055, %v1700
        %v2184 = vmul.f32 %v2056, %v1702
        %v2185 = vmul.f32 %v2057, %v1704
        %v2186 = vmul.f32 %v2058, %v1706
        %v2187 = vmul.f32 %v2059, %v1708
        %v2188 = vmul.f32 %v2060, %v1710
        %v2189 = vmul.f32 %v2061, %v1712
        %v2190 = vmul.f32 %v2062, %v1714
        %v2191 = vmul.f32 %v2063, %v1716
        %v2192 = vmul.f32 %v2064, %v1718
        %v2193 = vmul.f32 %v2065, %v1720
        %v2194 = vmul.f32 %v2066, %v1722
        %v2195 = vmul.f32 %v2067, %v1724
        %v2196 = vmul.f32 %v2068, %v1726
        %v2197 = vmul.f32 %v2069, %v1728
        %v2198 = vmul.f32 %v2070, %v1730
        %v2199 = vmul.f32 %v2071, %v1732
        %v2200 = vmul.f32 %v2072, %v1734
        %v2201 = vmul.f32 %v2073, %v1736
        %v2202 = vmul.f32 %v2074, %v1738
        %v2203 = vmul.f32 %v2075, %v1740
        %v2204 = vmul.f32 %v2076, %v1742
        %v2205 = vmul.f32 %v2077, %v1744
        %v2206 = vmul.f32 %v2078, %v1746
        %v2207 = vmul.f32 %v2079, %v1748
        %v2208 = vmul.f32 %v2080, %v1750
        %v2209 = vmul.f32 %v2081, %v1752
        %v2210 = vmul.f32 %v2082, %v1754
        %v2211 = vmul.f32 %v2083, %v1756
        %v2212 = vmul.f32 %v2084, %v1758
        %v2213 = vmul.f32 %v2085, %v1760
        %v2214 = vmul.f32 %v2086, %v1762
        %v2215 = vmul.f32 %v2087, %v1764
        %v2216 = vmul.f32 %v2088, %v1766
        %v2217 = vmul.f32 %v2089, %v1768
        %v2218 = vmul.f32 %v2090, %v1770
        %v2219 = vmul.f32 %v2091, %v1772
        %v2220 = vmul.f32 %v2092, %v1774
        %v2221 = vmul.f32 %v2093, %v1776
        %v2222 = vmul.f32 %v2094, %v1778
        %v2223 = vmul.f32 %v2095, %v1780
        %v2224 = vmul.f32 %v2096, %v1782
        %v2225 = vmul.f32 %v2097, %v1784
        %v2226 = vmul.f32 %v2098, %v1786
        %v2227 = vmul.f32 %v2099, %v1788
        %v2228 = vmul.f32 %v2100, %v1790
        %v2229 = vmul.f32 %v2101, %v1792
        %v2230 = vmul.f32 %v2102, %v1794
        %v2231 = vmul.f32 %v2103, %v1796
        %v2232 = vmul.f32 %v2104, %v1798
        %v2233 = vmul.f32 %v2105, %v1800
        %v2234 = vmul.f32 %v2106, %v1802
        %v2235 = vmul.f32 %v2107, %v1804
        %v2236 = vmul.f32 %v2108, %v1806
        %v2237 = vmul.f32 %v2109, %v1808
        %v2238 = vmul.f32 %v2110, %v1810
        %v2239 = vmul.f32 %v2111, %v1812
        %v2240 = vmul.f32 %v2112, %v1814
        %v2241 = vmul.f32 %v2113, %v1816
        %v2242 = vmul.f32 %v2114, %v1818
        %v2243 = vmul.f32 %v2115, %v1820
        %v2244 = vmul.f32 %v2116, %v1822
        %v2245 = vmul.f32 %v2117, %v1824
        %v2246 = vmul.f32 %v2118, %v1826
        %v2247 = vmul.f32 %v2119, %v1828
        %v2248 = vmul.f32 %v2120, %v1830
        %v2249 = vmul.f32 %v2121, %v1832
        %v2250 = vmul.f32 %v2122, %v1834
        %v2251 = vmul.f32 %v2123, %v1836
        %v2252 = vmul.f32 %v2124, %v1838
        %v2253 = vmul.f32 %v2125, %v1840
        %v2254 = vmul.f32 %v2126, %v1842
        %v2255 = vmul.f32 %v2127, %v1844
        %v2256 = vmul.f32 %v2128, %v1846
        %v2257 = vmul.f32 %v2129, %v1848
        %v2258 = vmul.f32 %v2130, %v1850
        %v2259 = vmul.f32 %v2131, %v1852
        %v2260 = vmul.f32 %v2132, %v1854
        %v2261 = vmul.f32 %v2133, %v1856
        %v2262 = vmul.f32 %v2134, %v1858
        %v2263 = vmul.f32 %v2135, %v1860
        %v2264 = vmul.f32 %v2136, %v1862
        %v2265 = vmul.f32 %v2137, %v1864
        %v2266 = vmul.f32 %v2138, %v1866
        %v2267 = vmul.f32 %v2139, %v1868
        %v2268 = vmul.f32 %v2140, %v1870
        %v2269 = vmul.f32 %v2141, %v1872
        %v2270 = vmul.f32 %v2142, %v1874
        %v2271 = vmul.f32 %v2143, %v1876
        %v2272 = vmul.f32 %v2144, %v1878
        %v2273 = vmul.f32 %v2145, %v1880
        %v2274 = vmul.f32 %v2146, %v1882
        %v2275 = vmul.f32 %v2147, %v1884
        %v2276 = vmul.f32 %v2148, %v1886
        %v2277 = vmul.f32 %v2149, %v1888
        %v2278 = vmul.f32 %v2150, %v1890
        %v2279 = vmul.f32 %v2151, %v1892
        %v2280 = vmul.f32 %v2152, %v1894
        %v2281 = vmul.f32 %v2153, %v1896
        %v2282 = vmul.f32 %v2154, %v1898
        %v2283 = vadd.f32 %v2155, 1.4214138
        %v2284 = vadd.f32 %v2156, 1.4214138
        %v2285 = vadd.f32 %v2157, 1.4214138
        %v2286 = vadd.f32 %v2158, 1.4214138
        %v2287 = vadd.f32 %v2159, 1.4214138
        %v2288 = vadd.f32 %v2160, 1.4214138
        %v2289 = vadd.f32 %v2161, 1.4214138
        %v2290 = vadd.f32 %v2162, 1.4214138
        %v2291 = vadd.f32 %v2163, 1.4214138
        %v2292 = vadd.f32 %v2164, 1.4214138
        %v2293 = vadd.f32 %v2165, 1.4214138
        %v2294 = vadd.f32 %v2166, 1.4214138
        %v2295 = vadd.f32 %v2167, 1.4214138
        %v2296 = vadd.f32 %v2168, 1.4214138
        %v2297 = vadd.f32 %v2169, 1.4214138
        %v2298 = vadd.f32 %v2170, 1.4214138
        %v2299 = vadd.f32 %v2171, 1.4214138
        %v2300 = vadd.f32 %v2172, 1.4214138
        %v2301 = vadd.f32 %v2173, 1.4214138
        %v2302 = vadd.f32 %v2174, 1.4214138
        %v2303 = vadd.f32 %v2175, 1.4214138
        %v2304 = vadd.f32 %v2176, 1.4214138
        %v2305 = vadd.f32 %v2177, 1.4214138
        %v2306 = vadd.f32 %v2178, 1.4214138
        %v2307 = vadd.f32 %v2179, 1.4214138
        %v2308 = vadd.f32 %v2180, 1.4214138
        %v2309 = vadd.f32 %v2181, 1.4214138
        %v2310 = vadd.f32 %v2182, 1.4214138
        %v2311 = vadd.f32 %v2183, 1.4214138
        %v2312 = vadd.f32 %v2184, 1.4214138
        %v2313 = vadd.f32 %v2185, 1.4214138
        %v2314 = vadd.f32 %v2186, 1.4214138
        %v2315 = vadd.f32 %v2187, 1.4214138
        %v2316 = vadd.f32 %v2188, 1.4214138
        %v2317 = vadd.f32 %v2189, 1.4214138
        %v2318 = vadd.f32 %v2190, 1.4214138
        %v2319 = vadd.f32 %v2191, 1.4214138
        %v2320 = vadd.f32 %v2192, 1.4214138
        %v2321 = vadd.f32 %v2193, 1.4214138
        %v2322 = vadd.f32 %v2194, 1.4214138
        %v2323 = vadd.f32 %v2195, 1.4214138
        %v2324 = vadd.f32 %v2196, 1.4214138
        %v2325 = vadd.f32 %v2197, 1.4214138
        %v2326 = vadd.f32 %v2198, 1.4214138
        %v2327 = vadd.f32 %v2199, 1.4214138
        %v2328 = vadd.f32 %v2200, 1.4214138
        %v2329 = vadd.f32 %v2201, 1.4214138
        %v2330 = vadd.f32 %v2202, 1.4214138
        %v2331 = vadd.f32 %v2203, 1.4214138
        %v2332 = vadd.f32 %v2204, 1.4214138
        %v2333 = vadd.f32 %v2205, 1.4214138
        %v2334 = vadd.f32 %v2206, 1.4214138
        %v2335 = vadd.f32 %v2207, 1.4214138
        %v2336 = vadd.f32 %v2208, 1.4214138
        %v2337 = vadd.f32 %v2209, 1.4214138
        %v2338 = vadd.f32 %v2210, 1.4214138
        %v2339 = vadd.f32 %v2211, 1.4214138
        %v2340 = vadd.f32 %v2212, 1.4214138
        %v2341 = vadd.f32 %v2213, 1.4214138
        %v2342 = vadd.f32 %v2214, 1.4214138
        %v2343 = vadd.f32 %v2215, 1.4214138
        %v2344 = vadd.f32 %v2216, 1.4214138
        %v2345 = vadd.f32 %v2217, 1.4214138
        %v2346 = vadd.f32 %v2218, 1.4214138
        %v2347 = vadd.f32 %v2219, 1.4214138
        %v2348 = vadd.f32 %v2220, 1.4214138
        %v2349 = vadd.f32 %v2221, 1.4214138
        %v2350 = vadd.f32 %v2222, 1.4214138
        %v2351 = vadd.f32 %v2223, 1.4214138
        %v2352 = vadd.f32 %v2224, 1.4214138
        %v2353 = vadd.f32 %v2225, 1.4214138
        %v2354 = vadd.f32 %v2226, 1.4214138
        %v2355 = vadd.f32 %v2227, 1.4214138
        %v2356 = vadd.f32 %v2228, 1.4214138
        %v2357 = vadd.f32 %v2229, 1.4214138
        %v2358 = vadd.f32 %v2230, 1.4214138
        %v2359 = vadd.f32 %v2231, 1.4214138
        %v2360 = vadd.f32 %v2232, 1.4214138
        %v2361 = vadd.f32 %v2233, 1.4214138
        %v2362 = vadd.f32 %v2234, 1.4214138
        %v2363 = vadd.f32 %v2235, 1.4214138
        %v2364 = vadd.f32 %v2236, 1.4214138
        %v2365 = vadd.f32 %v2237, 1.4214138
        %v2366 = vadd.f32 %v2238, 1.4214138
        %v2367 = vadd.f32 %v2239, 1.4214138
        %v2368 = vadd.f32 %v2240, 1.4214138
        %v2369 = vadd.f32 %v2241, 1.4214138
        %v2370 = vadd.f32 %v2242, 1.4214138
        %v2371 = vadd.f32 %v2243, 1.4214138
        %v2372 = vadd.f32 %v2244, 1.4214138
        %v2373 = vadd.f32 %v2245, 1.4214138
        %v2374 = vadd.f32 %v2246, 1.4214138
        %v2375 = vadd.f32 %v2247, 1.4214138
        %v2376 = vadd.f32 %v2248, 1.4214138
        %v2377 = vadd.f32 %v2249, 1.4214138
        %v2378 = vadd.f32 %v2250, 1.4214138
        %v2379 = vadd.f32 %v2251, 1.4214138
        %v2380 = vadd.f32 %v2252, 1.4214138
        %v2381 = vadd.f32 %v2253, 1.4214138
        %v2382 = vadd.f32 %v2254, 1.4214138
        %v2383 = vadd.f32 %v2255, 1.4214138
        %v2384 = vadd.f32 %v2256, 1.4214138
        %v2385 = vadd.f32 %v2257, 1.4214138
        %v2386 = vadd.f32 %v2258, 1.4214138
        %v2387 = vadd.f32 %v2259, 1.4214138
        %v2388 = vadd.f32 %v2260, 1.4214138
        %v2389 = vadd.f32 %v2261, 1.4214138
        %v2390 = vadd.f32 %v2262, 1.4214138
        %v2391 = vadd.f32 %v2263, 1.4214138
        %v2392 = vadd.f32 %v2264, 1.4214138
        %v2393 = vadd.f32 %v2265, 1.4214138
        %v2394 = vadd.f32 %v2266, 1.4214138
        %v2395 = vadd.f32 %v2267, 1.4214138
        %v2396 = vadd.f32 %v2268, 1.4214138
        %v2397 = vadd.f32 %v2269, 1.4214138
        %v2398 = vadd.f32 %v2270, 1.4214138
        %v2399 = vadd.f32 %v2271, 1.4214138
        %v2400 = vadd.f32 %v2272, 1.4214138
        %v2401 = vadd.f32 %v2273, 1.4214138
        %v2402 = vadd.f32 %v2274, 1.4214138
        %v2403 = vadd.f32 %v2275, 1.4214138
        %v2404 = vadd.f32 %v2276, 1.4214138
        %v2405 = vadd.f32 %v2277, 1.4214138
        %v2406 = vadd.f32 %v2278, 1.4214138
        %v2407 = vadd.f32 %v2279, 1.4214138
        %v2408 = vadd.f32 %v2280, 1.4214138
        %v2409 = vadd.f32 %v2281, 1.4214138
        %v2410 = vadd.f32 %v2282, 1.4214138
        %v2411 = vmul.f32 %v2283, %v1644
        %v2412 = vmul.f32 %v2284, %v1646
        %v2413 = vmul.f32 %v2285, %v1648
        %v2414 = vmul.f32 %v2286, %v1650
        %v2415 = vmul.f32 %v2287, %v1652
        %v2416 = vmul.f32 %v2288, %v1654
        %v2417 = vmul.f32 %v2289, %v1656
        %v2418 = vmul.f32 %v2290, %v1658
        %v2419 = vmul.f32 %v2291, %v1660
        %v2420 = vmul.f32 %v2292, %v1662
        %v2421 = vmul.f32 %v2293, %v1664
        %v2422 = vmul.f32 %v2294, %v1666
        %v2423 = vmul.f32 %v2295, %v1668
        %v2424 = vmul.f32 %v2296, %v1670
        %v2425 = vmul.f32 %v2297, %v1672
        %v2426 = vmul.f32 %v2298, %v1674
        %v2427 = vmul.f32 %v2299, %v1676
        %v2428 = vmul.f32 %v2300, %v1678
        %v2429 = vmul.f32 %v2301, %v1680
        %v2430 = vmul.f32 %v2302, %v1682
        %v2431 = vmul.f32 %v2303, %v1684
        %v2432 = vmul.f32 %v2304, %v1686
        %v2433 = vmul.f32 %v2305, %v1688
        %v2434 = vmul.f32 %v2306, %v1690
        %v2435 = vmul.f32 %v2307, %v1692
        %v2436 = vmul.f32 %v2308, %v1694
        %v2437 = vmul.f32 %v2309, %v1696
        %v2438 = vmul.f32 %v2310, %v1698
        %v2439 = vmul.f32 %v2311, %v1700
        %v2440 = vmul.f32 %v2312, %v1702
        %v2441 = vmul.f32 %v2313, %v1704
        %v2442 = vmul.f32 %v2314, %v1706
        %v2443 = vmul.f32 %v2315, %v1708
        %v2444 = vmul.f32 %v2316, %v1710
        %v2445 = vmul.f32 %v2317, %v1712
        %v2446 = vmul.f32 %v2318, %v1714
        %v2447 = vmul.f32 %v2319, %v1716
        %v2448 = vmul.f32 %v2320, %v1718
        %v2449 = vmul.f32 %v2321, %v1720
        %v2450 = vmul.f32 %v2322, %v1722
        %v2451 = vmul.f32 %v2323, %v1724
        %v2452 = vmul.f32 %v2324, %v1726
        %v2453 = vmul.f32 %v2325, %v1728
        %v2454 = vmul.f32 %v2326, %v1730
        %v2455 = vmul.f32 %v2327, %v1732
        %v2456 = vmul.f32 %v2328, %v1734
        %v2457 = vmul.f32 %v2329, %v1736
        %v2458 = vmul.f32 %v2330, %v1738
        %v2459 = vmul.f32 %v2331, %v1740
        %v2460 = vmul.f32 %v2332, %v1742
        %v2461 = vmul.f32 %v2333, %v1744
        %v2462 = vmul.f32 %v2334, %v1746
        %v2463 = vmul.f32 %v2335, %v1748
        %v2464 = vmul.f32 %v2336, %v1750
        %v2465 = vmul.f32 %v2337, %v1752
        %v2466 = vmul.f32 %v2338, %v1754
        %v2467 = vmul.f32 %v2339, %v1756
        %v2468 = vmul.f32 %v2340, %v1758
        %v2469 = vmul.f32 %v2341, %v1760
        %v2470 = vmul.f32 %v2342, %v1762
        %v2471 = vmul.f32 %v2343, %v1764
        %v2472 = vmul.f32 %v2344, %v1766
        %v2473 = vmul.f32 %v2345, %v1768
        %v2474 = vmul.f32 %v2346, %v1770
        %v2475 = vmul.f32 %v2347, %v1772
        %v2476 = vmul.f32 %v2348, %v1774
        %v2477 = vmul.f32 %v2349, %v1776
        %v2478 = vmul.f32 %v2350, %v1778
        %v2479 = vmul.f32 %v2351, %v1780
        %v2480 = vmul.f32 %v2352, %v1782
        %v2481 = vmul.f32 %v2353, %v1784
        %v2482 = vmul.f32 %v2354, %v1786
        %v2483 = vmul.f32 %v2355, %v1788
        %v2484 = vmul.f32 %v2356, %v1790
        %v2485 = vmul.f32 %v2357, %v1792
        %v2486 = vmul.f32 %v2358, %v1794
        %v2487 = vmul.f32 %v2359, %v1796
        %v2488 = vmul.f32 %v2360, %v1798
        %v2489 = vmul.f32 %v2361, %v1800
        %v2490 = vmul.f32 %v2362, %v1802
        %v2491 = vmul.f32 %v2363, %v1804
        %v2492 = vmul.f32 %v2364, %v1806
        %v2493 = vmul.f32 %v2365, %v1808
        %v2494 = vmul.f32 %v2366, %v1810
        %v2495 = vmul.f32 %v2367, %v1812
        %v2496 = vmul.f32 %v2368, %v1814
        %v2497 = vmul.f32 %v2369, %v1816
        %v2498 = vmul.f32 %v2370, %v1818
        %v2499 = vmul.f32 %v2371, %v1820
        %v2500 = vmul.f32 %v2372, %v1822
        %v2501 = vmul.f32 %v2373, %v1824
        %v2502 = vmul.f32 %v2374, %v1826
        %v2503 = vmul.f32 %v2375, %v1828
        %v2504 = vmul.f32 %v2376, %v1830
        %v2505 = vmul.f32 %v2377, %v1832
        %v2506 = vmul.f32 %v2378, %v1834
        %v2507 = vmul.f32 %v2379, %v1836
        %v2508 = vmul.f32 %v2380, %v1838
        %v2509 = vmul.f32 %v2381, %v1840
        %v2510 = vmul.f32 %v2382, %v1842
        %v2511 = vmul.f32 %v2383, %v1844
        %v2512 = vmul.f32 %v2384, %v1846
        %v2513 = vmul.f32 %v2385, %v1848
        %v2514 = vmul.f32 %v2386, %v1850
        %v2515 = vmul.f32 %v2387, %v1852
        %v2516 = vmul.f32 %v2388, %v1854
        %v2517 = vmul.f32 %v2389, %v1856
        %v2518 = vmul.f32 %v2390, %v1858
        %v2519 = vmul.f32 %v2391, %v1860
        %v2520 = vmul.f32 %v2392, %v1862
        %v2521 = vmul.f32 %v2393, %v1864
        %v2522 = vmul.f32 %v2394, %v1866
        %v2523 = vmul.f32 %v2395, %v1868
        %v2524 = vmul.f32 %v2396, %v1870
        %v2525 = vmul.f32 %v2397, %v1872
        %v2526 = vmul.f32 %v2398, %v1874
        %v2527 = vmul.f32 %v2399, %v1876
        %v2528 = vmul.f32 %v2400, %v1878
        %v2529 = vmul.f32 %v2401, %v1880
        %v2530 = vmul.f32 %v2402, %v1882
        %v2531 = vmul.f32 %v2403, %v1884
        %v2532 = vmul.f32 %v2404, %v1886
        %v2533 = vmul.f32 %v2405, %v1888
        %v2534 = vmul.f32 %v2406, %v1890
        %v2535 = vmul.f32 %v2407, %v1892
        %v2536 = vmul.f32 %v2408, %v1894
        %v2537 = vmul.f32 %v2409, %v1896
        %v2538 = vmul.f32 %v2410, %v1898
        %v2539 = vadd.f32 %v2411, -0.28449672
        %v2540 = vadd.f32 %v2412, -0.28449672
        %v2541 = vadd.f32 %v2413, -0.28449672
        %v2542 = vadd.f32 %v2414, -0.28449672
        %v2543 = vadd.f32 %v2415, -0.28449672
        %v2544 = vadd.f32 %v2416, -0.28449672
        %v2545 = vadd.f32 %v2417, -0.28449672
        %v2546 = vadd.f32 %v2418, -0.28449672
        %v2547 = vadd.f32 %v2419, -0.28449672
        %v2548 = vadd.f32 %v2420, -0.28449672
        %v2549 = vadd.f32 %v2421, -0.28449672
        %v2550 = vadd.f32 %v2422, -0.28449672
        %v2551 = vadd.f32 %v2423, -0.28449672
        %v2552 = vadd.f32 %v2424, -0.28449672
        %v2553 = vadd.f32 %v2425, -0.28449672
        %v2554 = vadd.f32 %v2426, -0.28449672
        %v2555 = vadd.f32 %v2427, -0.28449672
        %v2556 = vadd.f32 %v2428, -0.28449672
        %v2557 = vadd.f32 %v2429, -0.28449672
        %v2558 = vadd.f32 %v2430, -0.28449672
        %v2559 = vadd.f32 %v2431, -0.28449672
        %v2560 = vadd.f32 %v2432, -0.28449672
        %v2561 = vadd.f32 %v2433, -0.28449672
        %v2562 = vadd.f32 %v2434, -0.28449672
        %v2563 = vadd.f32 %v2435, -0.28449672
        %v2564 = vadd.f32 %v2436, -0.28449672
        %v2565 = vadd.f32 %v2437, -0.28449672
        %v2566 = vadd.f32 %v2438, -0.28449672
        %v2567 = vadd.f32 %v2439, -0.28449672
        %v2568 = vadd.f32 %v2440, -0.28449672
        %v2569 = vadd.f32 %v2441, -0.28449672
        %v2570 = vadd.f32 %v2442, -0.28449672
        %v2571 = vadd.f32 %v2443, -0.28449672
        %v2572 = vadd.f32 %v2444, -0.28449672
        %v2573 = vadd.f32 %v2445, -0.28449672
        %v2574 = vadd.f32 %v2446, -0.28449672
        %v2575 = vadd.f32 %v2447, -0.28449672
        %v2576 = vadd.f32 %v2448, -0.28449672
        %v2577 = vadd.f32 %v2449, -0.28449672
        %v2578 = vadd.f32 %v2450, -0.28449672
        %v2579 = vadd.f32 %v2451, -0.28449672
        %v2580 = vadd.f32 %v2452, -0.28449672
        %v2581 = vadd.f32 %v2453, -0.28449672
        %v2582 = vadd.f32 %v2454, -0.28449672
        %v2583 = vadd.f32 %v2455, -0.28449672
        %v2584 = vadd.f32 %v2456, -0.28449672
        %v2585 = vadd.f32 %v2457, -0.28449672
        %v2586 = vadd.f32 %v2458, -0.28449672
        %v2587 = vadd.f32 %v2459, -0.28449672
        %v2588 = vadd.f32 %v2460, -0.28449672
        %v2589 = vadd.f32 %v2461, -0.28449672
        %v2590 = vadd.f32 %v2462, -0.28449672
        %v2591 = vadd.f32 %v2463, -0.28449672
        %v2592 = vadd.f32 %v2464, -0.28449672
        %v2593 = vadd.f32 %v2465, -0.28449672
        %v2594 = vadd.f32 %v2466, -0.28449672
        %v2595 = vadd.f32 %v2467, -0.28449672
        %v2596 = vadd.f32 %v2468, -0.28449672
        %v2597 = vadd.f32 %v2469, -0.28449672
        %v2598 = vadd.f32 %v2470, -0.28449672
        %v2599 = vadd.f32 %v2471, -0.28449672
        %v2600 = vadd.f32 %v2472, -0.28449672
        %v2601 = vadd.f32 %v2473, -0.28449672
        %v2602 = vadd.f32 %v2474, -0.28449672
        %v2603 = vadd.f32 %v2475, -0.28449672
        %v2604 = vadd.f32 %v2476, -0.28449672
        %v2605 = vadd.f32 %v2477, -0.28449672
        %v2606 = vadd.f32 %v2478, -0.28449672
        %v2607 = vadd.f32 %v2479, -0.28449672
        %v2608 = vadd.f32 %v2480, -0.28449672
        %v2609 = vadd.f32 %v2481, -0.28449672
        %v2610 = vadd.f32 %v2482, -0.28449672
        %v2611 = vadd.f32 %v2483, -0.28449672
        %v2612 = vadd.f32 %v2484, -0.28449672
        %v2613 = vadd.f32 %v2485, -0.28449672
        %v2614 = vadd.f32 %v2486, -0.28449672
        %v2615 = vadd.f32 %v2487, -0.28449672
        %v2616 = vadd.f32 %v2488, -0.28449672
        %v2617 = vadd.f32 %v2489, -0.28449672
        %v2618 = vadd.f32 %v2490, -0.28449672
        %v2619 = vadd.f32 %v2491, -0.28449672
        %v2620 = vadd.f32 %v2492, -0.28449672
        %v2621 = vadd.f32 %v2493, -0.28449672
        %v2622 = vadd.f32 %v2494, -0.28449672
        %v2623 = vadd.f32 %v2495, -0.28449672
        %v2624 = vadd.f32 %v2496, -0.28449672
        %v2625 = vadd.f32 %v2497, -0.28449672
        %v2626 = vadd.f32 %v2498, -0.28449672
        %v2627 = vadd.f32 %v2499, -0.28449672
        %v2628 = vadd.f32 %v2500, -0.28449672
        %v2629 = vadd.f32 %v2501, -0.28449672
        %v2630 = vadd.f32 %v2502, -0.28449672
        %v2631 = vadd.f32 %v2503, -0.28449672
        %v2632 = vadd.f32 %v2504, -0.28449672
        %v2633 = vadd.f32 %v2505, -0.28449672
        %v2634 = vadd.f32 %v2506, -0.28449672
        %v2635 = vadd.f32 %v2507, -0.28449672
        %v2636 = vadd.f32 %v2508, -0.28449672
        %v2637 = vadd.f32 %v2509, -0.28449672
        %v2638 = vadd.f32 %v2510, -0.28449672
        %v2639 = vadd.f32 %v2511, -0.28449672
        %v2640 = vadd.f32 %v2512, -0.28449672
        %v2641 = vadd.f32 %v2513, -0.28449672
        %v2642 = vadd.f32 %v2514, -0.28449672
        %v2643 = vadd.f32 %v2515, -0.28449672
        %v2644 = vadd.f32 %v2516, -0.28449672
        %v2645 = vadd.f32 %v2517, -0.28449672
        %v2646 = vadd.f32 %v2518, -0.28449672
        %v2647 = vadd.f32 %v2519, -0.28449672
        %v2648 = vadd.f32 %v2520, -0.28449672
        %v2649 = vadd.f32 %v2521, -0.28449672
        %v2650 = vadd.f32 %v2522, -0.28449672
        %v2651 = vadd.f32 %v2523, -0.28449672
        %v2652 = vadd.f32 %v2524, -0.28449672
        %v2653 = vadd.f32 %v2525, -0.28449672
        %v2654 = vadd.f32 %v2526, -0.28449672
        %v2655 = vadd.f32 %v2527, -0.28449672
        %v2656 = vadd.f32 %v2528, -0.28449672
        %v2657 = vadd.f32 %v2529, -0.28449672
        %v2658 = vadd.f32 %v2530, -0.28449672
        %v2659 = vadd.f32 %v2531, -0.28449672
        %v2660 = vadd.f32 %v2532, -0.28449672
        %v2661 = vadd.f32 %v2533, -0.28449672
        %v2662 = vadd.f32 %v2534, -0.28449672
        %v2663 = vadd.f32 %v2535, -0.28449672
        %v2664 = vadd.f32 %v2536, -0.28449672
        %v2665 = vadd.f32 %v2537, -0.28449672
        %v2666 = vadd.f32 %v2538, -0.28449672
        %v2667 = vmul.f32 %v2539, %v1644
        %v2668 = vmul.f32 %v2540, %v1646
        %v2669 = vmul.f32 %v2541, %v1648
        %v2670 = vmul.f32 %v2542, %v1650
        %v2671 = vmul.f32 %v2543, %v1652
        %v2672 = vmul.f32 %v2544, %v1654
        %v2673 = vmul.f32 %v2545, %v1656
        %v2674 = vmul.f32 %v2546, %v1658
        %v2675 = vmul.f32 %v2547, %v1660
        %v2676 = vmul.f32 %v2548, %v1662
        %v2677 = vmul.f32 %v2549, %v1664
        %v2678 = vmul.f32 %v2550, %v1666
        %v2679 = vmul.f32 %v2551, %v1668
        %v2680 = vmul.f32 %v2552, %v1670
        %v2681 = vmul.f32 %v2553, %v1672
        %v2682 = vmul.f32 %v2554, %v1674
        %v2683 = vmul.f32 %v2555, %v1676
        %v2684 = vmul.f32 %v2556, %v1678
        %v2685 = vmul.f32 %v2557, %v1680
        %v2686 = vmul.f32 %v2558, %v1682
        %v2687 = vmul.f32 %v2559, %v1684
        %v2688 = vmul.f32 %v2560, %v1686
        %v2689 = vmul.f32 %v2561, %v1688
        %v2690 = vmul.f32 %v2562, %v1690
        %v2691 = vmul.f32 %v2563, %v1692
        %v2692 = vmul.f32 %v2564, %v1694
        %v2693 = vmul.f32 %v2565, %v1696
        %v2694 = vmul.f32 %v2566, %v1698
        %v2695 = vmul.f32 %v2567, %v1700
        %v2696 = vmul.f32 %v2568, %v1702
        %v2697 = vmul.f32 %v2569, %v1704
        %v2698 = vmul.f32 %v2570, %v1706
        %v2699 = vmul.f32 %v2571, %v1708
        %v2700 = vmul.f32 %v2572, %v1710
        %v2701 = vmul.f32 %v2573, %v1712
        %v2702 = vmul.f32 %v2574, %v1714
        %v2703 = vmul.f32 %v2575, %v1716
        %v2704 = vmul.f32 %v2576, %v1718
        %v2705 = vmul.f32 %v2577, %v1720
        %v2706 = vmul.f32 %v2578, %v1722
        %v2707 = vmul.f32 %v2579, %v1724
        %v2708 = vmul.f32 %v2580, %v1726
        %v2709 = vmul.f32 %v2581, %v1728
        %v2710 = vmul.f32 %v2582, %v1730
        %v2711 = vmul.f32 %v2583, %v1732
        %v2712 = vmul.f32 %v2584, %v1734
        %v2713 = vmul.f32 %v2585, %v1736
        %v2714 = vmul.f32 %v2586, %v1738
        %v2715 = vmul.f32 %v2587, %v1740
        %v2716 = vmul.f32 %v2588, %v1742
        %v2717 = vmul.f32 %v2589, %v1744
        %v2718 = vmul.f32 %v2590, %v1746
        %v2719 = vmul.f32 %v2591, %v1748
        %v2720 = vmul.f32 %v2592, %v1750
        %v2721 = vmul.f32 %v2593, %v1752
        %v2722 = vmul.f32 %v2594, %v1754
        %v2723 = vmul.f32 %v2595, %v1756
        %v2724 = vmul.f32 %v2596, %v1758
        %v2725 = vmul.f32 %v2597, %v1760
        %v2726 = vmul.f32 %v2598, %v1762
        %v2727 = vmul.f32 %v2599, %v1764
        %v2728 = vmul.f32 %v2600, %v1766
        %v2729 = vmul.f32 %v2601, %v1768
        %v2730 = vmul.f32 %v2602, %v1770
        %v2731 = vmul.f32 %v2603, %v1772
        %v2732 = vmul.f32 %v2604, %v1774
        %v2733 = vmul.f32 %v2605, %v1776
        %v2734 = vmul.f32 %v2606, %v1778
        %v2735 = vmul.f32 %v2607, %v1780
        %v2736 = vmul.f32 %v2608, %v1782
        %v2737 = vmul.f32 %v2609, %v1784
        %v2738 = vmul.f32 %v2610, %v1786
        %v2739 = vmul.f32 %v2611, %v1788
        %v2740 = vmul.f32 %v2612, %v1790
        %v2741 = vmul.f32 %v2613, %v1792
        %v2742 = vmul.f32 %v2614, %v1794
        %v2743 = vmul.f32 %v2615, %v1796
        %v2744 = vmul.f32 %v2616, %v1798
        %v2745 = vmul.f32 %v2617, %v1800
        %v2746 = vmul.f32 %v2618, %v1802
        %v2747 = vmul.f32 %v2619, %v1804
        %v2748 = vmul.f32 %v2620, %v1806
        %v2749 = vmul.f32 %v2621, %v1808
        %v2750 = vmul.f32 %v2622, %v1810
        %v2751 = vmul.f32 %v2623, %v1812
        %v2752 = vmul.f32 %v2624, %v1814
        %v2753 = vmul.f32 %v2625, %v1816
        %v2754 = vmul.f32 %v2626, %v1818
        %v2755 = vmul.f32 %v2627, %v1820
        %v2756 = vmul.f32 %v2628, %v1822
        %v2757 = vmul.f32 %v2629, %v1824
        %v2758 = vmul.f32 %v2630, %v1826
        %v2759 = vmul.f32 %v2631, %v1828
        %v2760 = vmul.f32 %v2632, %v1830
        %v2761 = vmul.f32 %v2633, %v1832
        %v2762 = vmul.f32 %v2634, %v1834
        %v2763 = vmul.f32 %v2635, %v1836
        %v2764 = vmul.f32 %v2636, %v1838
        %v2765 = vmul.f32 %v2637, %v1840
        %v2766 = vmul.f32 %v2638, %v1842
        %v2767 = vmul.f32 %v2639, %v1844
        %v2768 = vmul.f32 %v2640, %v1846
        %v2769 = vmul.f32 %v2641, %v1848
        %v2770 = vmul.f32 %v2642, %v1850
        %v2771 = vmul.f32 %v2643, %v1852
        %v2772 = vmul.f32 %v2644, %v1854
        %v2773 = vmul.f32 %v2645, %v1856
        %v2774 = vmul.f32 %v2646, %v1858
        %v2775 = vmul.f32 %v2647, %v1860
        %v2776 = vmul.f32 %v2648, %v1862
        %v2777 = vmul.f32 %v2649, %v1864
        %v2778 = vmul.f32 %v2650, %v1866
        %v2779 = vmul.f32 %v2651, %v1868
        %v2780 = vmul.f32 %v2652, %v1870
        %v2781 = vmul.f32 %v2653, %v1872
        %v2782 = vmul.f32 %v2654, %v1874
        %v2783 = vmul.f32 %v2655, %v1876
        %v2784 = vmul.f32 %v2656, %v1878
        %v2785 = vmul.f32 %v2657, %v1880
        %v2786 = vmul.f32 %v2658, %v1882
        %v2787 = vmul.f32 %v2659, %v1884
        %v2788 = vmul.f32 %v2660, %v1886
        %v2789 = vmul.f32 %v2661, %v1888
        %v2790 = vmul.f32 %v2662, %v1890
        %v2791 = vmul.f32 %v2663, %v1892
        %v2792 = vmul.f32 %v2664, %v1894
        %v2793 = vmul.f32 %v2665, %v1896
        %v2794 = vmul.f32 %v2666, %v1898
        %v2795 = vadd.f32 %v2667, 0.2548296
        %v2796 = vadd.f32 %v2668, 0.2548296
        %v2797 = vadd.f32 %v2669, 0.2548296
        %v2798 = vadd.f32 %v2670, 0.2548296
        %v2799 = vadd.f32 %v2671, 0.2548296
        %v2800 = vadd.f32 %v2672, 0.2548296
        %v2801 = vadd.f32 %v2673, 0.2548296
        %v2802 = vadd.f32 %v2674, 0.2548296
        %v2803 = vadd.f32 %v2675, 0.2548296
        %v2804 = vadd.f32 %v2676, 0.2548296
        %v2805 = vadd.f32 %v2677, 0.2548296
        %v2806 = vadd.f32 %v2678, 0.2548296
        %v2807 = vadd.f32 %v2679, 0.2548296
        %v2808 = vadd.f32 %v2680, 0.2548296
        %v2809 = vadd.f32 %v2681, 0.2548296
        %v2810 = vadd.f32 %v2682, 0.2548296
        %v2811 = vadd.f32 %v2683, 0.2548296
        %v2812 = vadd.f32 %v2684, 0.2548296
        %v2813 = vadd.f32 %v2685, 0.2548296
        %v2814 = vadd.f32 %v2686, 0.2548296
        %v2815 = vadd.f32 %v2687, 0.2548296
        %v2816 = vadd.f32 %v2688, 0.2548296
        %v2817 = vadd.f32 %v2689, 0.2548296
        %v2818 = vadd.f32 %v2690, 0.2548296
        %v2819 = vadd.f32 %v2691, 0.2548296
        %v2820 = vadd.f32 %v2692, 0.2548296
        %v2821 = vadd.f32 %v2693, 0.2548296
        %v2822 = vadd.f32 %v2694, 0.2548296
        %v2823 = vadd.f32 %v2695, 0.2548296
        %v2824 = vadd.f32 %v2696, 0.2548296
        %v2825 = vadd.f32 %v2697, 0.2548296
        %v2826 = vadd.f32 %v2698, 0.2548296
        %v2827 = vadd.f32 %v2699, 0.2548296
        %v2828 = vadd.f32 %v2700, 0.2548296
        %v2829 = vadd.f32 %v2701, 0.2548296
        %v2830 = vadd.f32 %v2702, 0.2548296
        %v2831 = vadd.f32 %v2703, 0.2548296
        %v2832 = vadd.f32 %v2704, 0.2548296
        %v2833 = vadd.f32 %v2705, 0.2548296
        %v2834 = vadd.f32 %v2706, 0.2548296
        %v2835 = vadd.f32 %v2707, 0.2548296
        %v2836 = vadd.f32 %v2708, 0.2548296
        %v2837 = vadd.f32 %v2709, 0.2548296
        %v2838 = vadd.f32 %v2710, 0.2548296
        %v2839 = vadd.f32 %v2711, 0.2548296
        %v2840 = vadd.f32 %v2712, 0.2548296
        %v2841 = vadd.f32 %v2713, 0.2548296
        %v2842 = vadd.f32 %v2714, 0.2548296
        %v2843 = vadd.f32 %v2715, 0.2548296
        %v2844 = vadd.f32 %v2716, 0.2548296
        %v2845 = vadd.f32 %v2717, 0.2548296
        %v2846 = vadd.f32 %v2718, 0.2548296
        %v2847 = vadd.f32 %v2719, 0.2548296
        %v2848 = vadd.f32 %v2720, 0.2548296
        %v2849 = vadd.f32 %v2721, 0.2548296
        %v2850 = vadd.f32 %v2722, 0.2548296
        %v2851 = vadd.f32 %v2723, 0.2548296
        %v2852 = vadd.f32 %v2724, 0.2548296
        %v2853 = vadd.f32 %v2725, 0.2548296
        %v2854 = vadd.f32 %v2726, 0.2548296
        %v2855 = vadd.f32 %v2727, 0.2548296
        %v2856 = vadd.f32 %v2728, 0.2548296
        %v2857 = vadd.f32 %v2729, 0.2548296
        %v2858 = vadd.f32 %v2730, 0.2548296
        %v2859 = vadd.f32 %v2731, 0.2548296
        %v2860 = vadd.f32 %v2732, 0.2548296
        %v2861 = vadd.f32 %v2733, 0.2548296
        %v2862 = vadd.f32 %v2734, 0.2548296
        %v2863 = vadd.f32 %v2735, 0.2548296
        %v2864 = vadd.f32 %v2736, 0.2548296
        %v2865 = vadd.f32 %v2737, 0.2548296
        %v2866 = vadd.f32 %v2738, 0.2548296
        %v2867 = vadd.f32 %v2739, 0.2548296
        %v2868 = vadd.f32 %v2740, 0.2548296
        %v2869 = vadd.f32 %v2741, 0.2548296
        %v2870 = vadd.f32 %v2742, 0.2548296
        %v2871 = vadd.f32 %v2743, 0.2548296
        %v2872 = vadd.f32 %v2744, 0.2548296
        %v2873 = vadd.f32 %v2745, 0.2548296
        %v2874 = vadd.f32 %v2746, 0.2548296
        %v2875 = vadd.f32 %v2747, 0.2548296
        %v2876 = vadd.f32 %v2748, 0.2548296
        %v2877 = vadd.f32 %v2749, 0.2548296
        %v2878 = vadd.f32 %v2750, 0.2548296
        %v2879 = vadd.f32 %v2751, 0.2548296
        %v2880 = vadd.f32 %v2752, 0.2548296
        %v2881 = vadd.f32 %v2753, 0.2548296
        %v2882 = vadd.f32 %v2754, 0.2548296
        %v2883 = vadd.f32 %v2755, 0.2548296
        %v2884 = vadd.f32 %v2756, 0.2548296
        %v2885 = vadd.f32 %v2757, 0.2548296
        %v2886 = vadd.f32 %v2758, 0.2548296
        %v2887 = vadd.f32 %v2759, 0.2548296
        %v2888 = vadd.f32 %v2760, 0.2548296
        %v2889 = vadd.f32 %v2761, 0.2548296
        %v2890 = vadd.f32 %v2762, 0.2548296
        %v2891 = vadd.f32 %v2763, 0.2548296
        %v2892 = vadd.f32 %v2764, 0.2548296
        %v2893 = vadd.f32 %v2765, 0.2548296
        %v2894 = vadd.f32 %v2766, 0.2548296
        %v2895 = vadd.f32 %v2767, 0.2548296
        %v2896 = vadd.f32 %v2768, 0.2548296
        %v2897 = vadd.f32 %v2769, 0.2548296
        %v2898 = vadd.f32 %v2770, 0.2548296
        %v2899 = vadd.f32 %v2771, 0.2548296
        %v2900 = vadd.f32 %v2772, 0.2548296
        %v2901 = vadd.f32 %v2773, 0.2548296
        %v2902 = vadd.f32 %v2774, 0.2548296
        %v2903 = vadd.f32 %v2775, 0.2548296
        %v2904 = vadd.f32 %v2776, 0.2548296
        %v2905 = vadd.f32 %v2777, 0.2548296
        %v2906 = vadd.f32 %v2778, 0.2548296
        %v2907 = vadd.f32 %v2779, 0.2548296
        %v2908 = vadd.f32 %v2780, 0.2548296
        %v2909 = vadd.f32 %v2781, 0.2548296
        %v2910 = vadd.f32 %v2782, 0.2548296
        %v2911 = vadd.f32 %v2783, 0.2548296
        %v2912 = vadd.f32 %v2784, 0.2548296
        %v2913 = vadd.f32 %v2785, 0.2548296
        %v2914 = vadd.f32 %v2786, 0.2548296
        %v2915 = vadd.f32 %v2787, 0.2548296
        %v2916 = vadd.f32 %v2788, 0.2548296
        %v2917 = vadd.f32 %v2789, 0.2548296
        %v2918 = vadd.f32 %v2790, 0.2548296
        %v2919 = vadd.f32 %v2791, 0.2548296
        %v2920 = vadd.f32 %v2792, 0.2548296
        %v2921 = vadd.f32 %v2793, 0.2548296
        %v2922 = vadd.f32 %v2794, 0.2548296
        %v2923 = vmul.f32 %v2795, %v1644
        %v2924 = vmul.f32 %v2796, %v1646
        %v2925 = vmul.f32 %v2797, %v1648
        %v2926 = vmul.f32 %v2798, %v1650
        %v2927 = vmul.f32 %v2799, %v1652
        %v2928 = vmul.f32 %v2800, %v1654
        %v2929 = vmul.f32 %v2801, %v1656
        %v2930 = vmul.f32 %v2802, %v1658
        %v2931 = vmul.f32 %v2803, %v1660
        %v2932 = vmul.f32 %v2804, %v1662
        %v2933 = vmul.f32 %v2805, %v1664
        %v2934 = vmul.f32 %v2806, %v1666
        %v2935 = vmul.f32 %v2807, %v1668
        %v2936 = vmul.f32 %v2808, %v1670
        %v2937 = vmul.f32 %v2809, %v1672
        %v2938 = vmul.f32 %v2810, %v1674
        %v2939 = vmul.f32 %v2811, %v1676
        %v2940 = vmul.f32 %v2812, %v1678
        %v2941 = vmul.f32 %v2813, %v1680
        %v2942 = vmul.f32 %v2814, %v1682
        %v2943 = vmul.f32 %v2815, %v1684
        %v2944 = vmul.f32 %v2816, %v1686
        %v2945 = vmul.f32 %v2817, %v1688
        %v2946 = vmul.f32 %v2818, %v1690
        %v2947 = vmul.f32 %v2819, %v1692
        %v2948 = vmul.f32 %v2820, %v1694
        %v2949 = vmul.f32 %v2821, %v1696
        %v2950 = vmul.f32 %v2822, %v1698
        %v2951 = vmul.f32 %v2823, %v1700
        %v2952 = vmul.f32 %v2824, %v1702
        %v2953 = vmul.f32 %v2825, %v1704
        %v2954 = vmul.f32 %v2826, %v1706
        %v2955 = vmul.f32 %v2827, %v1708
        %v2956 = vmul.f32 %v2828, %v1710
        %v2957 = vmul.f32 %v2829, %v1712
        %v2958 = vmul.f32 %v2830, %v1714
        %v2959 = vmul.f32 %v2831, %v1716
        %v2960 = vmul.f32 %v2832, %v1718
        %v2961 = vmul.f32 %v2833, %v1720
        %v2962 = vmul.f32 %v2834, %v1722
        %v2963 = vmul.f32 %v2835, %v1724
        %v2964 = vmul.f32 %v2836, %v1726
        %v2965 = vmul.f32 %v2837, %v1728
        %v2966 = vmul.f32 %v2838, %v1730
        %v2967 = vmul.f32 %v2839, %v1732
        %v2968 = vmul.f32 %v2840, %v1734
        %v2969 = vmul.f32 %v2841, %v1736
        %v2970 = vmul.f32 %v2842, %v1738
        %v2971 = vmul.f32 %v2843, %v1740
        %v2972 = vmul.f32 %v2844, %v1742
        %v2973 = vmul.f32 %v2845, %v1744
        %v2974 = vmul.f32 %v2846, %v1746
        %v2975 = vmul.f32 %v2847, %v1748
        %v2976 = vmul.f32 %v2848, %v1750
        %v2977 = vmul.f32 %v2849, %v1752
        %v2978 = vmul.f32 %v2850, %v1754
        %v2979 = vmul.f32 %v2851, %v1756
        %v2980 = vmul.f32 %v2852, %v1758
        %v2981 = vmul.f32 %v2853, %v1760
        %v2982 = vmul.f32 %v2854, %v1762
        %v2983 = vmul.f32 %v2855, %v1764
        %v2984 = vmul.f32 %v2856, %v1766
        %v2985 = vmul.f32 %v2857, %v1768
        %v2986 = vmul.f32 %v2858, %v1770
        %v2987 = vmul.f32 %v2859, %v1772
        %v2988 = vmul.f32 %v2860, %v1774
        %v2989 = vmul.f32 %v2861, %v1776
        %v2990 = vmul.f32 %v2862, %v1778
        %v2991 = vmul.f32 %v2863, %v1780
        %v2992 = vmul.f32 %v2864, %v1782
        %v2993 = vmul.f32 %v2865, %v1784
        %v2994 = vmul.f32 %v2866, %v1786
        %v2995 = vmul.f32 %v2867, %v1788
        %v2996 = vmul.f32 %v2868, %v1790
        %v2997 = vmul.f32 %v2869, %v1792
        %v2998 = vmul.f32 %v2870, %v1794
        %v2999 = vmul.f32 %v2871, %v1796
        %v3000 = vmul.f32 %v2872, %v1798
        %v3001 = vmul.f32 %v2873, %v1800
        %v3002 = vmul.f32 %v2874, %v1802
        %v3003 = vmul.f32 %v2875, %v1804
        %v3004 = vmul.f32 %v2876, %v1806
        %v3005 = vmul.f32 %v2877, %v1808
        %v3006 = vmul.f32 %v2878, %v1810
        %v3007 = vmul.f32 %v2879, %v1812
        %v3008 = vmul.f32 %v2880, %v1814
        %v3009 = vmul.f32 %v2881, %v1816
        %v3010 = vmul.f32 %v2882, %v1818
        %v3011 = vmul.f32 %v2883, %v1820
        %v3012 = vmul.f32 %v2884, %v1822
        %v3013 = vmul.f32 %v2885, %v1824
        %v3014 = vmul.f32 %v2886, %v1826
        %v3015 = vmul.f32 %v2887, %v1828
        %v3016 = vmul.f32 %v2888, %v1830
        %v3017 = vmul.f32 %v2889, %v1832
        %v3018 = vmul.f32 %v2890, %v1834
        %v3019 = vmul.f32 %v2891, %v1836
        %v3020 = vmul.f32 %v2892, %v1838
        %v3021 = vmul.f32 %v2893, %v1840
        %v3022 = vmul.f32 %v2894, %v1842
        %v3023 = vmul.f32 %v2895, %v1844
        %v3024 = vmul.f32 %v2896, %v1846
        %v3025 = vmul.f32 %v2897, %v1848
        %v3026 = vmul.f32 %v2898, %v1850
        %v3027 = vmul.f32 %v2899, %v1852
        %v3028 = vmul.f32 %v2900, %v1854
        %v3029 = vmul.f32 %v2901, %v1856
        %v3030 = vmul.f32 %v2902, %v1858
        %v3031 = vmul.f32 %v2903, %v1860
        %v3032 = vmul.f32 %v2904, %v1862
        %v3033 = vmul.f32 %v2905, %v1864
        %v3034 = vmul.f32 %v2906, %v1866
        %v3035 = vmul.f32 %v2907, %v1868
        %v3036 = vmul.f32 %v2908, %v1870
        %v3037 = vmul.f32 %v2909, %v1872
        %v3038 = vmul.f32 %v2910, %v1874
        %v3039 = vmul.f32 %v2911, %v1876
        %v3040 = vmul.f32 %v2912, %v1878
        %v3041 = vmul.f32 %v2913, %v1880
        %v3042 = vmul.f32 %v2914, %v1882
        %v3043 = vmul.f32 %v2915, %v1884
        %v3044 = vmul.f32 %v2916, %v1886
        %v3045 = vmul.f32 %v2917, %v1888
        %v3046 = vmul.f32 %v2918, %v1890
        %v3047 = vmul.f32 %v2919, %v1892
        %v3048 = vmul.f32 %v2920, %v1894
        %v3049 = vmul.f32 %v2921, %v1896
        %v3050 = vmul.f32 %v2922, %v1898
        %v3051 = vmul.f32 %v1259, %v1259
        %v3052 = vmul.f32 %v1260, %v1260
        %v3053 = vmul.f32 %v1261, %v1261
        %v3054 = vmul.f32 %v1262, %v1262
        %v3055 = vmul.f32 %v1263, %v1263
        %v3056 = vmul.f32 %v1264, %v1264
        %v3057 = vmul.f32 %v1265, %v1265
        %v3058 = vmul.f32 %v1266, %v1266
        %v3059 = vmul.f32 %v1267, %v1267
        %v3060 = vmul.f32 %v1268, %v1268
        %v3061 = vmul.f32 %v1269, %v1269
        %v3062 = vmul.f32 %v1270, %v1270
        %v3063 = vmul.f32 %v1271, %v1271
        %v3064 = vmul.f32 %v1272, %v1272
        %v3065 = vmul.f32 %v1273, %v1273
        %v3066 = vmul.f32 %v1274, %v1274
        %v3067 = vmul.f32 %v1275, %v1275
        %v3068 = vmul.f32 %v1276, %v1276
        %v3069 = vmul.f32 %v1277, %v1277
        %v3070 = vmul.f32 %v1278, %v1278
        %v3071 = vmul.f32 %v1279, %v1279
        %v3072 = vmul.f32 %v1280, %v1280
        %v3073 = vmul.f32 %v1281, %v1281
        %v3074 = vmul.f32 %v1282, %v1282
        %v3075 = vmul.f32 %v1283, %v1283
        %v3076 = vmul.f32 %v1284, %v1284
        %v3077 = vmul.f32 %v1285, %v1285
        %v3078 = vmul.f32 %v1286, %v1286
        %v3079 = vmul.f32 %v1287, %v1287
        %v3080 = vmul.f32 %v1288, %v1288
        %v3081 = vmul.f32 %v1289, %v1289
        %v3082 = vmul.f32 %v1290, %v1290
        %v3083 = vmul.f32 %v1291, %v1291
        %v3084 = vmul.f32 %v1292, %v1292
        %v3085 = vmul.f32 %v1293, %v1293
        %v3086 = vmul.f32 %v1294, %v1294
        %v3087 = vmul.f32 %v1295, %v1295
        %v3088 = vmul.f32 %v1296, %v1296
        %v3089 = vmul.f32 %v1297, %v1297
        %v3090 = vmul.f32 %v1298, %v1298
        %v3091 = vmul.f32 %v1299, %v1299
        %v3092 = vmul.f32 %v1300, %v1300
        %v3093 = vmul.f32 %v1301, %v1301
        %v3094 = vmul.f32 %v1302, %v1302
        %v3095 = vmul.f32 %v1303, %v1303
        %v3096 = vmul.f32 %v1304, %v1304
        %v3097 = vmul.f32 %v1305, %v1305
        %v3098 = vmul.f32 %v1306, %v1306
        %v3099 = vmul.f32 %v1307, %v1307
        %v3100 = vmul.f32 %v1308, %v1308
        %v3101 = vmul.f32 %v1309, %v1309
        %v3102 = vmul.f32 %v1310, %v1310
        %v3103 = vmul.f32 %v1311, %v1311
        %v3104 = vmul.f32 %v1312, %v1312
        %v3105 = vmul.f32 %v1313, %v1313
        %v3106 = vmul.f32 %v1314, %v1314
        %v3107 = vmul.f32 %v1315, %v1315
        %v3108 = vmul.f32 %v1316, %v1316
        %v3109 = vmul.f32 %v1317, %v1317
        %v3110 = vmul.f32 %v1318, %v1318
        %v3111 = vmul.f32 %v1319, %v1319
        %v3112 = vmul.f32 %v1320, %v1320
        %v3113 = vmul.f32 %v1321, %v1321
        %v3114 = vmul.f32 %v1322, %v1322
        %v3115 = vmul.f32 %v1323, %v1323
        %v3116 = vmul.f32 %v1324, %v1324
        %v3117 = vmul.f32 %v1325, %v1325
        %v3118 = vmul.f32 %v1326, %v1326
        %v3119 = vmul.f32 %v1327, %v1327
        %v3120 = vmul.f32 %v1328, %v1328
        %v3121 = vmul.f32 %v1329, %v1329
        %v3122 = vmul.f32 %v1330, %v1330
        %v3123 = vmul.f32 %v1331, %v1331
        %v3124 = vmul.f32 %v1332, %v1332
        %v3125 = vmul.f32 %v1333, %v1333
        %v3126 = vmul.f32 %v1334, %v1334
        %v3127 = vmul.f32 %v1335, %v1335
        %v3128 = vmul.f32 %v1336, %v1336
        %v3129 = vmul.f32 %v1337, %v1337
        %v3130 = vmul.f32 %v1338, %v1338
        %v3131 = vmul.f32 %v1339, %v1339
        %v3132 = vmul.f32 %v1340, %v1340
        %v3133 = vmul.f32 %v1341, %v1341
        %v3134 = vmul.f32 %v1342, %v1342
        %v3135 = vmul.f32 %v1343, %v1343
        %v3136 = vmul.f32 %v1344, %v1344
        %v3137 = vmul.f32 %v1345, %v1345
        %v3138 = vmul.f32 %v1346, %v1346
        %v3139 = vmul.f32 %v1347, %v1347
        %v3140 = vmul.f32 %v1348, %v1348
        %v3141 = vmul.f32 %v1349, %v1349
        %v3142 = vmul.f32 %v1350, %v1350
        %v3143 = vmul.f32 %v1351, %v1351
        %v3144 = vmul.f32 %v1352, %v1352
        %v3145 = vmul.f32 %v1353, %v1353
        %v3146 = vmul.f32 %v1354, %v1354
        %v3147 = vmul.f32 %v1355, %v1355
        %v3148 = vmul.f32 %v1356, %v1356
        %v3149 = vmul.f32 %v1357, %v1357
        %v3150 = vmul.f32 %v1358, %v1358
        %v3151 = vmul.f32 %v1359, %v1359
        %v3152 = vmul.f32 %v1360, %v1360
        %v3153 = vmul.f32 %v1361, %v1361
        %v3154 = vmul.f32 %v1362, %v1362
        %v3155 = vmul.f32 %v1363, %v1363
        %v3156 = vmul.f32 %v1364, %v1364
        %v3157 = vmul.f32 %v1365, %v1365
        %v3158 = vmul.f32 %v1366, %v1366
        %v3159 = vmul.f32 %v1367, %v1367
        %v3160 = vmul.f32 %v1368, %v1368
        %v3161 = vmul.f32 %v1369, %v1369
        %v3162 = vmul.f32 %v1370, %v1370
        %v3163 = vmul.f32 %v1371, %v1371
        %v3164 = vmul.f32 %v1372, %v1372
        %v3165 = vmul.f32 %v1373, %v1373
        %v3166 = vmul.f32 %v1374, %v1374
        %v3167 = vmul.f32 %v1375, %v1375
        %v3168 = vmul.f32 %v1376, %v1376
        %v3169 = vmul.f32 %v1377, %v1377
        %v3170 = vmul.f32 %v1378, %v1378
        %v3171 = vmul.f32 %v1379, %v1379
        %v3172 = vmul.f32 %v1380, %v1380
        %v3173 = vmul.f32 %v1381, %v1381
        %v3174 = vmul.f32 %v1382, %v1382
        %v3175 = vmul.f32 %v1383, %v1383
        %v3176 = vmul.f32 %v1384, %v1384
        %v3177 = vmul.f32 %v1385, %v1385
        %v3178 = vmul.f32 %v1386, %v1386
        %v3179 = vsub.f32 0.0, %v3051
        %v3180 = vsub.f32 0.0, %v3052
        %v3181 = vsub.f32 0.0, %v3053
        %v3182 = vsub.f32 0.0, %v3054
        %v3183 = vsub.f32 0.0, %v3055
        %v3184 = vsub.f32 0.0, %v3056
        %v3185 = vsub.f32 0.0, %v3057
        %v3186 = vsub.f32 0.0, %v3058
        %v3187 = vsub.f32 0.0, %v3059
        %v3188 = vsub.f32 0.0, %v3060
        %v3189 = vsub.f32 0.0, %v3061
        %v3190 = vsub.f32 0.0, %v3062
        %v3191 = vsub.f32 0.0, %v3063
        %v3192 = vsub.f32 0.0, %v3064
        %v3193 = vsub.f32 0.0, %v3065
        %v3194 = vsub.f32 0.0, %v3066
        %v3195 = vsub.f32 0.0, %v3067
        %v3196 = vsub.f32 0.0, %v3068
        %v3197 = vsub.f32 0.0, %v3069
        %v3198 = vsub.f32 0.0, %v3070
        %v3199 = vsub.f32 0.0, %v3071
        %v3200 = vsub.f32 0.0, %v3072
        %v3201 = vsub.f32 0.0, %v3073
        %v3202 = vsub.f32 0.0, %v3074
        %v3203 = vsub.f32 0.0, %v3075
        %v3204 = vsub.f32 0.0, %v3076
        %v3205 = vsub.f32 0.0, %v3077
        %v3206 = vsub.f32 0.0, %v3078
        %v3207 = vsub.f32 0.0, %v3079
        %v3208 = vsub.f32 0.0, %v3080
        %v3209 = vsub.f32 0.0, %v3081
        %v3210 = vsub.f32 0.0, %v3082
        %v3211 = vsub.f32 0.0, %v3083
        %v3212 = vsub.f32 0.0, %v3084
        %v3213 = vsub.f32 0.0, %v3085
        %v3214 = vsub.f32 0.0, %v3086
        %v3215 = vsub.f32 0.0, %v3087
        %v3216 = vsub.f32 0.0, %v3088
        %v3217 = vsub.f32 0.0, %v3089
        %v3218 = vsub.f32 0.0, %v3090
        %v3219 = vsub.f32 0.0, %v3091
        %v3220 = vsub.f32 0.0, %v3092
        %v3221 = vsub.f32 0.0, %v3093
        %v3222 = vsub.f32 0.0, %v3094
        %v3223 = vsub.f32 0.0, %v3095
        %v3224 = vsub.f32 0.0, %v3096
        %v3225 = vsub.f32 0.0, %v3097
        %v3226 = vsub.f32 0.0, %v3098
        %v3227 = vsub.f32 0.0, %v3099
        %v3228 = vsub.f32 0.0, %v3100
        %v3229 = vsub.f32 0.0, %v3101
        %v3230 = vsub.f32 0.0, %v3102
        %v3231 = vsub.f32 0.0, %v3103
        %v3232 = vsub.f32 0.0, %v3104
        %v3233 = vsub.f32 0.0, %v3105
        %v3234 = vsub.f32 0.0, %v3106
        %v3235 = vsub.f32 0.0, %v3107
        %v3236 = vsub.f32 0.0, %v3108
        %v3237 = vsub.f32 0.0, %v3109
        %v3238 = vsub.f32 0.0, %v3110
        %v3239 = vsub.f32 0.0, %v3111
        %v3240 = vsub.f32 0.0, %v3112
        %v3241 = vsub.f32 0.0, %v3113
        %v3242 = vsub.f32 0.0, %v3114
        %v3243 = vsub.f32 0.0, %v3115
        %v3244 = vsub.f32 0.0, %v3116
        %v3245 = vsub.f32 0.0, %v3117
        %v3246 = vsub.f32 0.0, %v3118
        %v3247 = vsub.f32 0.0, %v3119
        %v3248 = vsub.f32 0.0, %v3120
        %v3249 = vsub.f32 0.0, %v3121
        %v3250 = vsub.f32 0.0, %v3122
        %v3251 = vsub.f32 0.0, %v3123
        %v3252 = vsub.f32 0.0, %v3124
        %v3253 = vsub.f32 0.0, %v3125
        %v3254 = vsub.f32 0.0, %v3126
        %v3255 = vsub.f32 0.0, %v3127
        %v3256 = vsub.f32 0.0, %v3128
        %v3257 = vsub.f32 0.0, %v3129
        %v3258 = vsub.f32 0.0, %v3130
        %v3259 = vsub.f32 0.0, %v3131
        %v3260 = vsub.f32 0.0, %v3132
        %v3261 = vsub.f32 0.0, %v3133
        %v3262 = vsub.f32 0.0, %v3134
        %v3263 = vsub.f32 0.0, %v3135
        %v3264 = vsub.f32 0.0, %v3136
        %v3265 = vsub.f32 0.0, %v3137
        %v3266 = vsub.f32 0.0, %v3138
        %v3267 = vsub.f32 0.0, %v3139
        %v3268 = vsub.f32 0.0, %v3140
        %v3269 = vsub.f32 0.0, %v3141
        %v3270 = vsub.f32 0.0, %v3142
        %v3271 = vsub.f32 0.0, %v3143
        %v3272 = vsub.f32 0.0, %v3144
        %v3273 = vsub.f32 0.0, %v3145
        %v3274 = vsub.f32 0.0, %v3146
        %v3275 = vsub.f32 0.0, %v3147
        %v3276 = vsub.f32 0.0, %v3148
        %v3277 = vsub.f32 0.0, %v3149
        %v3278 = vsub.f32 0.0, %v3150
        %v3279 = vsub.f32 0.0, %v3151
        %v3280 = vsub.f32 0.0, %v3152
        %v3281 = vsub.f32 0.0, %v3153
        %v3282 = vsub.f32 0.0, %v3154
        %v3283 = vsub.f32 0.0, %v3155
        %v3284 = vsub.f32 0.0, %v3156
        %v3285 = vsub.f32 0.0, %v3157
        %v3286 = vsub.f32 0.0, %v3158
        %v3287 = vsub.f32 0.0, %v3159
        %v3288 = vsub.f32 0.0, %v3160
        %v3289 = vsub.f32 0.0, %v3161
        %v3290 = vsub.f32 0.0, %v3162
        %v3291 = vsub.f32 0.0, %v3163
        %v3292 = vsub.f32 0.0, %v3164
        %v3293 = vsub.f32 0.0, %v3165
        %v3294 = vsub.f32 0.0, %v3166
        %v3295 = vsub.f32 0.0, %v3167
        %v3296 = vsub.f32 0.0, %v3168
        %v3297 = vsub.f32 0.0, %v3169
        %v3298 = vsub.f32 0.0, %v3170
        %v3299 = vsub.f32 0.0, %v3171
        %v3300 = vsub.f32 0.0, %v3172
        %v3301 = vsub.f32 0.0, %v3173
        %v3302 = vsub.f32 0.0, %v3174
        %v3303 = vsub.f32 0.0, %v3175
        %v3304 = vsub.f32 0.0, %v3176
        %v3305 = vsub.f32 0.0, %v3177
        %v3306 = vsub.f32 0.0, %v3178
        %v3307 = vmul.f32 %v3179, 1.442695
        %v3308 = vpow.pop %v3307
        %v3309 = vmul.f32 %v3180, 1.442695
        %v3310 = vpow.pop %v3309
        %v3311 = vmul.f32 %v3181, 1.442695
        %v3312 = vpow.pop %v3311
        %v3313 = vmul.f32 %v3182, 1.442695
        %v3314 = vpow.pop %v3313
        %v3315 = vmul.f32 %v3183, 1.442695
        %v3316 = vpow.pop %v3315
        %v3317 = vmul.f32 %v3184, 1.442695
        %v3318 = vpow.pop %v3317
        %v3319 = vmul.f32 %v3185, 1.442695
        %v3320 = vpow.pop %v3319
        %v3321 = vmul.f32 %v3186, 1.442695
        %v3322 = vpow.pop %v3321
        %v3323 = vmul.f32 %v3187, 1.442695
        %v3324 = vpow.pop %v3323
        %v3325 = vmul.f32 %v3188, 1.442695
        %v3326 = vpow.pop %v3325
        %v3327 = vmul.f32 %v3189, 1.442695
        %v3328 = vpow.pop %v3327
        %v3329 = vmul.f32 %v3190, 1.442695
        %v3330 = vpow.pop %v3329
        %v3331 = vmul.f32 %v3191, 1.442695
        %v3332 = vpow.pop %v3331
        %v3333 = vmul.f32 %v3192, 1.442695
        %v3334 = vpow.pop %v3333
        %v3335 = vmul.f32 %v3193, 1.442695
        %v3336 = vpow.pop %v3335
        %v3337 = vmul.f32 %v3194, 1.442695
        %v3338 = vpow.pop %v3337
        %v3339 = vmul.f32 %v3195, 1.442695
        %v3340 = vpow.pop %v3339
        %v3341 = vmul.f32 %v3196, 1.442695
        %v3342 = vpow.pop %v3341
        %v3343 = vmul.f32 %v3197, 1.442695
        %v3344 = vpow.pop %v3343
        %v3345 = vmul.f32 %v3198, 1.442695
        %v3346 = vpow.pop %v3345
        %v3347 = vmul.f32 %v3199, 1.442695
        %v3348 = vpow.pop %v3347
        %v3349 = vmul.f32 %v3200, 1.442695
        %v3350 = vpow.pop %v3349
        %v3351 = vmul.f32 %v3201, 1.442695
        %v3352 = vpow.pop %v3351
        %v3353 = vmul.f32 %v3202, 1.442695
        %v3354 = vpow.pop %v3353
        %v3355 = vmul.f32 %v3203, 1.442695
        %v3356 = vpow.pop %v3355
        %v3357 = vmul.f32 %v3204, 1.442695
        %v3358 = vpow.pop %v3357
        %v3359 = vmul.f32 %v3205, 1.442695
        %v3360 = vpow.pop %v3359
        %v3361 = vmul.f32 %v3206, 1.442695
        %v3362 = vpow.pop %v3361
        %v3363 = vmul.f32 %v3207, 1.442695
        %v3364 = vpow.pop %v3363
        %v3365 = vmul.f32 %v3208, 1.442695
        %v3366 = vpow.pop %v3365
        %v3367 = vmul.f32 %v3209, 1.442695
        %v3368 = vpow.pop %v3367
        %v3369 = vmul.f32 %v3210, 1.442695
        %v3370 = vpow.pop %v3369
        %v3371 = vmul.f32 %v3211, 1.442695
        %v3372 = vpow.pop %v3371
        %v3373 = vmul.f32 %v3212, 1.442695
        %v3374 = vpow.pop %v3373
        %v3375 = vmul.f32 %v3213, 1.442695
        %v3376 = vpow.pop %v3375
        %v3377 = vmul.f32 %v3214, 1.442695
        %v3378 = vpow.pop %v3377
        %v3379 = vmul.f32 %v3215, 1.442695
        %v3380 = vpow.pop %v3379
        %v3381 = vmul.f32 %v3216, 1.442695
        %v3382 = vpow.pop %v3381
        %v3383 = vmul.f32 %v3217, 1.442695
        %v3384 = vpow.pop %v3383
        %v3385 = vmul.f32 %v3218, 1.442695
        %v3386 = vpow.pop %v3385
        %v3387 = vmul.f32 %v3219, 1.442695
        %v3388 = vpow.pop %v3387
        %v3389 = vmul.f32 %v3220, 1.442695
        %v3390 = vpow.pop %v3389
        %v3391 = vmul.f32 %v3221, 1.442695
        %v3392 = vpow.pop %v3391
        %v3393 = vmul.f32 %v3222, 1.442695
        %v3394 = vpow.pop %v3393
        %v3395 = vmul.f32 %v3223, 1.442695
        %v3396 = vpow.pop %v3395
        %v3397 = vmul.f32 %v3224, 1.442695
        %v3398 = vpow.pop %v3397
        %v3399 = vmul.f32 %v3225, 1.442695
        %v3400 = vpow.pop %v3399
        %v3401 = vmul.f32 %v3226, 1.442695
        %v3402 = vpow.pop %v3401
        %v3403 = vmul.f32 %v3227, 1.442695
        %v3404 = vpow.pop %v3403
        %v3405 = vmul.f32 %v3228, 1.442695
        %v3406 = vpow.pop %v3405
        %v3407 = vmul.f32 %v3229, 1.442695
        %v3408 = vpow.pop %v3407
        %v3409 = vmul.f32 %v3230, 1.442695
        %v3410 = vpow.pop %v3409
        %v3411 = vmul.f32 %v3231, 1.442695
        %v3412 = vpow.pop %v3411
        %v3413 = vmul.f32 %v3232, 1.442695
        %v3414 = vpow.pop %v3413
        %v3415 = vmul.f32 %v3233, 1.442695
        %v3416 = vpow.pop %v3415
        %v3417 = vmul.f32 %v3234, 1.442695
        %v3418 = vpow.pop %v3417
        %v3419 = vmul.f32 %v3235, 1.442695
        %v3420 = vpow.pop %v3419
        %v3421 = vmul.f32 %v3236, 1.442695
        %v3422 = vpow.pop %v3421
        %v3423 = vmul.f32 %v3237, 1.442695
        %v3424 = vpow.pop %v3423
        %v3425 = vmul.f32 %v3238, 1.442695
        %v3426 = vpow.pop %v3425
        %v3427 = vmul.f32 %v3239, 1.442695
        %v3428 = vpow.pop %v3427
        %v3429 = vmul.f32 %v3240, 1.442695
        %v3430 = vpow.pop %v3429
        %v3431 = vmul.f32 %v3241, 1.442695
        %v3432 = vpow.pop %v3431
        %v3433 = vmul.f32 %v3242, 1.442695
        %v3434 = vpow.pop %v3433
        %v3435 = vmul.f32 %v3243, 1.442695
        %v3436 = vpow.pop %v3435
        %v3437 = vmul.f32 %v3244, 1.442695
        %v3438 = vpow.pop %v3437
        %v3439 = vmul.f32 %v3245, 1.442695
        %v3440 = vpow.pop %v3439
        %v3441 = vmul.f32 %v3246, 1.442695
        %v3442 = vpow.pop %v3441
        %v3443 = vmul.f32 %v3247, 1.442695
        %v3444 = vpow.pop %v3443
        %v3445 = vmul.f32 %v3248, 1.442695
        %v3446 = vpow.pop %v3445
        %v3447 = vmul.f32 %v3249, 1.442695
        %v3448 = vpow.pop %v3447
        %v3449 = vmul.f32 %v3250, 1.442695
        %v3450 = vpow.pop %v3449
        %v3451 = vmul.f32 %v3251, 1.442695
        %v3452 = vpow.pop %v3451
        %v3453 = vmul.f32 %v3252, 1.442695
        %v3454 = vpow.pop %v3453
        %v3455 = vmul.f32 %v3253, 1.442695
        %v3456 = vpow.pop %v3455
        %v3457 = vmul.f32 %v3254, 1.442695
        %v3458 = vpow.pop %v3457
        %v3459 = vmul.f32 %v3255, 1.442695
        %v3460 = vpow.pop %v3459
        %v3461 = vmul.f32 %v3256, 1.442695
        %v3462 = vpow.pop %v3461
        %v3463 = vmul.f32 %v3257, 1.442695
        %v3464 = vpow.pop %v3463
        %v3465 = vmul.f32 %v3258, 1.442695
        %v3466 = vpow.pop %v3465
        %v3467 = vmul.f32 %v3259, 1.442695
        %v3468 = vpow.pop %v3467
        %v3469 = vmul.f32 %v3260, 1.442695
        %v3470 = vpow.pop %v3469
        %v3471 = vmul.f32 %v3261, 1.442695
        %v3472 = vpow.pop %v3471
        %v3473 = vmul.f32 %v3262, 1.442695
        %v3474 = vpow.pop %v3473
        %v3475 = vmul.f32 %v3263, 1.442695
        %v3476 = vpow.pop %v3475
        %v3477 = vmul.f32 %v3264, 1.442695
        %v3478 = vpow.pop %v3477
        %v3479 = vmul.f32 %v3265, 1.442695
        %v3480 = vpow.pop %v3479
        %v3481 = vmul.f32 %v3266, 1.442695
        %v3482 = vpow.pop %v3481
        %v3483 = vmul.f32 %v3267, 1.442695
        %v3484 = vpow.pop %v3483
        %v3485 = vmul.f32 %v3268, 1.442695
        %v3486 = vpow.pop %v3485
        %v3487 = vmul.f32 %v3269, 1.442695
        %v3488 = vpow.pop %v3487
        %v3489 = vmul.f32 %v3270, 1.442695
        %v3490 = vpow.pop %v3489
        %v3491 = vmul.f32 %v3271, 1.442695
        %v3492 = vpow.pop %v3491
        %v3493 = vmul.f32 %v3272, 1.442695
        %v3494 = vpow.pop %v3493
        %v3495 = vmul.f32 %v3273, 1.442695
        %v3496 = vpow.pop %v3495
        %v3497 = vmul.f32 %v3274, 1.442695
        %v3498 = vpow.pop %v3497
        %v3499 = vmul.f32 %v3275, 1.442695
        %v3500 = vpow.pop %v3499
        %v3501 = vmul.f32 %v3276, 1.442695
        %v3502 = vpow.pop %v3501
        %v3503 = vmul.f32 %v3277, 1.442695
        %v3504 = vpow.pop %v3503
        %v3505 = vmul.f32 %v3278, 1.442695
        %v3506 = vpow.pop %v3505
        %v3507 = vmul.f32 %v3279, 1.442695
        %v3508 = vpow.pop %v3507
        %v3509 = vmul.f32 %v3280, 1.442695
        %v3510 = vpow.pop %v3509
        %v3511 = vmul.f32 %v3281, 1.442695
        %v3512 = vpow.pop %v3511
        %v3513 = vmul.f32 %v3282, 1.442695
        %v3514 = vpow.pop %v3513
        %v3515 = vmul.f32 %v3283, 1.442695
        %v3516 = vpow.pop %v3515
        %v3517 = vmul.f32 %v3284, 1.442695
        %v3518 = vpow.pop %v3517
        %v3519 = vmul.f32 %v3285, 1.442695
        %v3520 = vpow.pop %v3519
        %v3521 = vmul.f32 %v3286, 1.442695
        %v3522 = vpow.pop %v3521
        %v3523 = vmul.f32 %v3287, 1.442695
        %v3524 = vpow.pop %v3523
        %v3525 = vmul.f32 %v3288, 1.442695
        %v3526 = vpow.pop %v3525
        %v3527 = vmul.f32 %v3289, 1.442695
        %v3528 = vpow.pop %v3527
        %v3529 = vmul.f32 %v3290, 1.442695
        %v3530 = vpow.pop %v3529
        %v3531 = vmul.f32 %v3291, 1.442695
        %v3532 = vpow.pop %v3531
        %v3533 = vmul.f32 %v3292, 1.442695
        %v3534 = vpow.pop %v3533
        %v3535 = vmul.f32 %v3293, 1.442695
        %v3536 = vpow.pop %v3535
        %v3537 = vmul.f32 %v3294, 1.442695
        %v3538 = vpow.pop %v3537
        %v3539 = vmul.f32 %v3295, 1.442695
        %v3540 = vpow.pop %v3539
        %v3541 = vmul.f32 %v3296, 1.442695
        %v3542 = vpow.pop %v3541
        %v3543 = vmul.f32 %v3297, 1.442695
        %v3544 = vpow.pop %v3543
        %v3545 = vmul.f32 %v3298, 1.442695
        %v3546 = vpow.pop %v3545
        %v3547 = vmul.f32 %v3299, 1.442695
        %v3548 = vpow.pop %v3547
        %v3549 = vmul.f32 %v3300, 1.442695
        %v3550 = vpow.pop %v3549
        %v3551 = vmul.f32 %v3301, 1.442695
        %v3552 = vpow.pop %v3551
        %v3553 = vmul.f32 %v3302, 1.442695
        %v3554 = vpow.pop %v3553
        %v3555 = vmul.f32 %v3303, 1.442695
        %v3556 = vpow.pop %v3555
        %v3557 = vmul.f32 %v3304, 1.442695
        %v3558 = vpow.pop %v3557
        %v3559 = vmul.f32 %v3305, 1.442695
        %v3560 = vpow.pop %v3559
        %v3561 = vmul.f32 %v3306, 1.442695
        %v3562 = vpow.pop %v3561
        %v3563 = vmul.f32 %v2923, %v3308
        %v3564 = vmul.f32 %v2924, %v3310
        %v3565 = vmul.f32 %v2925, %v3312
        %v3566 = vmul.f32 %v2926, %v3314
        %v3567 = vmul.f32 %v2927, %v3316
        %v3568 = vmul.f32 %v2928, %v3318
        %v3569 = vmul.f32 %v2929, %v3320
        %v3570 = vmul.f32 %v2930, %v3322
        %v3571 = vmul.f32 %v2931, %v3324
        %v3572 = vmul.f32 %v2932, %v3326
        %v3573 = vmul.f32 %v2933, %v3328
        %v3574 = vmul.f32 %v2934, %v3330
        %v3575 = vmul.f32 %v2935, %v3332
        %v3576 = vmul.f32 %v2936, %v3334
        %v3577 = vmul.f32 %v2937, %v3336
        %v3578 = vmul.f32 %v2938, %v3338
        %v3579 = vmul.f32 %v2939, %v3340
        %v3580 = vmul.f32 %v2940, %v3342
        %v3581 = vmul.f32 %v2941, %v3344
        %v3582 = vmul.f32 %v2942, %v3346
        %v3583 = vmul.f32 %v2943, %v3348
        %v3584 = vmul.f32 %v2944, %v3350
        %v3585 = vmul.f32 %v2945, %v3352
        %v3586 = vmul.f32 %v2946, %v3354
        %v3587 = vmul.f32 %v2947, %v3356
        %v3588 = vmul.f32 %v2948, %v3358
        %v3589 = vmul.f32 %v2949, %v3360
        %v3590 = vmul.f32 %v2950, %v3362
        %v3591 = vmul.f32 %v2951, %v3364
        %v3592 = vmul.f32 %v2952, %v3366
        %v3593 = vmul.f32 %v2953, %v3368
        %v3594 = vmul.f32 %v2954, %v3370
        %v3595 = vmul.f32 %v2955, %v3372
        %v3596 = vmul.f32 %v2956, %v3374
        %v3597 = vmul.f32 %v2957, %v3376
        %v3598 = vmul.f32 %v2958, %v3378
        %v3599 = vmul.f32 %v2959, %v3380
        %v3600 = vmul.f32 %v2960, %v3382
        %v3601 = vmul.f32 %v2961, %v3384
        %v3602 = vmul.f32 %v2962, %v3386
        %v3603 = vmul.f32 %v2963, %v3388
        %v3604 = vmul.f32 %v2964, %v3390
        %v3605 = vmul.f32 %v2965, %v3392
        %v3606 = vmul.f32 %v2966, %v3394
        %v3607 = vmul.f32 %v2967, %v3396
        %v3608 = vmul.f32 %v2968, %v3398
        %v3609 = vmul.f32 %v2969, %v3400
        %v3610 = vmul.f32 %v2970, %v3402
        %v3611 = vmul.f32 %v2971, %v3404
        %v3612 = vmul.f32 %v2972, %v3406
        %v3613 = vmul.f32 %v2973, %v3408
        %v3614 = vmul.f32 %v2974, %v3410
        %v3615 = vmul.f32 %v2975, %v3412
        %v3616 = vmul.f32 %v2976, %v3414
        %v3617 = vmul.f32 %v2977, %v3416
        %v3618 = vmul.f32 %v2978, %v3418
        %v3619 = vmul.f32 %v2979, %v3420
        %v3620 = vmul.f32 %v2980, %v3422
        %v3621 = vmul.f32 %v2981, %v3424
        %v3622 = vmul.f32 %v2982, %v3426
        %v3623 = vmul.f32 %v2983, %v3428
        %v3624 = vmul.f32 %v2984, %v3430
        %v3625 = vmul.f32 %v2985, %v3432
        %v3626 = vmul.f32 %v2986, %v3434
        %v3627 = vmul.f32 %v2987, %v3436
        %v3628 = vmul.f32 %v2988, %v3438
        %v3629 = vmul.f32 %v2989, %v3440
        %v3630 = vmul.f32 %v2990, %v3442
        %v3631 = vmul.f32 %v2991, %v3444
        %v3632 = vmul.f32 %v2992, %v3446
        %v3633 = vmul.f32 %v2993, %v3448
        %v3634 = vmul.f32 %v2994, %v3450
        %v3635 = vmul.f32 %v2995, %v3452
        %v3636 = vmul.f32 %v2996, %v3454
        %v3637 = vmul.f32 %v2997, %v3456
        %v3638 = vmul.f32 %v2998, %v3458
        %v3639 = vmul.f32 %v2999, %v3460
        %v3640 = vmul.f32 %v3000, %v3462
        %v3641 = vmul.f32 %v3001, %v3464
        %v3642 = vmul.f32 %v3002, %v3466
        %v3643 = vmul.f32 %v3003, %v3468
        %v3644 = vmul.f32 %v3004, %v3470
        %v3645 = vmul.f32 %v3005, %v3472
        %v3646 = vmul.f32 %v3006, %v3474
        %v3647 = vmul.f32 %v3007, %v3476
        %v3648 = vmul.f32 %v3008, %v3478
        %v3649 = vmul.f32 %v3009, %v3480
        %v3650 = vmul.f32 %v3010, %v3482
        %v3651 = vmul.f32 %v3011, %v3484
        %v3652 = vmul.f32 %v3012, %v3486
        %v3653 = vmul.f32 %v3013, %v3488
        %v3654 = vmul.f32 %v3014, %v3490
        %v3655 = vmul.f32 %v3015, %v3492
        %v3656 = vmul.f32 %v3016, %v3494
        %v3657 = vmul.f32 %v3017, %v3496
        %v3658 = vmul.f32 %v3018, %v3498
        %v3659 = vmul.f32 %v3019, %v3500
        %v3660 = vmul.f32 %v3020, %v3502
        %v3661 = vmul.f32 %v3021, %v3504
        %v3662 = vmul.f32 %v3022, %v3506
        %v3663 = vmul.f32 %v3023, %v3508
        %v3664 = vmul.f32 %v3024, %v3510
        %v3665 = vmul.f32 %v3025, %v3512
        %v3666 = vmul.f32 %v3026, %v3514
        %v3667 = vmul.f32 %v3027, %v3516
        %v3668 = vmul.f32 %v3028, %v3518
        %v3669 = vmul.f32 %v3029, %v3520
        %v3670 = vmul.f32 %v3030, %v3522
        %v3671 = vmul.f32 %v3031, %v3524
        %v3672 = vmul.f32 %v3032, %v3526
        %v3673 = vmul.f32 %v3033, %v3528
        %v3674 = vmul.f32 %v3034, %v3530
        %v3675 = vmul.f32 %v3035, %v3532
        %v3676 = vmul.f32 %v3036, %v3534
        %v3677 = vmul.f32 %v3037, %v3536
        %v3678 = vmul.f32 %v3038, %v3538
        %v3679 = vmul.f32 %v3039, %v3540
        %v3680 = vmul.f32 %v3040, %v3542
        %v3681 = vmul.f32 %v3041, %v3544
        %v3682 = vmul.f32 %v3042, %v3546
        %v3683 = vmul.f32 %v3043, %v3548
        %v3684 = vmul.f32 %v3044, %v3550
        %v3685 = vmul.f32 %v3045, %v3552
        %v3686 = vmul.f32 %v3046, %v3554
        %v3687 = vmul.f32 %v3047, %v3556
        %v3688 = vmul.f32 %v3048, %v3558
        %v3689 = vmul.f32 %v3049, %v3560
        %v3690 = vmul.f32 %v3050, %v3562
        %v3691 = vsub.f32 1.0, %v3563
        %v3692 = vsub.f32 1.0, %v3564
        %v3693 = vsub.f32 1.0, %v3565
        %v3694 = vsub.f32 1.0, %v3566
        %v3695 = vsub.f32 1.0, %v3567
        %v3696 = vsub.f32 1.0, %v3568
        %v3697 = vsub.f32 1.0, %v3569
        %v3698 = vsub.f32 1.0, %v3570
        %v3699 = vsub.f32 1.0, %v3571
        %v3700 = vsub.f32 1.0, %v3572
        %v3701 = vsub.f32 1.0, %v3573
        %v3702 = vsub.f32 1.0, %v3574
        %v3703 = vsub.f32 1.0, %v3575
        %v3704 = vsub.f32 1.0, %v3576
        %v3705 = vsub.f32 1.0, %v3577
        %v3706 = vsub.f32 1.0, %v3578
        %v3707 = vsub.f32 1.0, %v3579
        %v3708 = vsub.f32 1.0, %v3580
        %v3709 = vsub.f32 1.0, %v3581
        %v3710 = vsub.f32 1.0, %v3582
        %v3711 = vsub.f32 1.0, %v3583
        %v3712 = vsub.f32 1.0, %v3584
        %v3713 = vsub.f32 1.0, %v3585
        %v3714 = vsub.f32 1.0, %v3586
        %v3715 = vsub.f32 1.0, %v3587
        %v3716 = vsub.f32 1.0, %v3588
        %v3717 = vsub.f32 1.0, %v3589
        %v3718 = vsub.f32 1.0, %v3590
        %v3719 = vsub.f32 1.0, %v3591
        %v3720 = vsub.f32 1.0, %v3592
        %v3721 = vsub.f32 1.0, %v3593
        %v3722 = vsub.f32 1.0, %v3594
        %v3723 = vsub.f32 1.0, %v3595
        %v3724 = vsub.f32 1.0, %v3596
        %v3725 = vsub.f32 1.0, %v3597
        %v3726 = vsub.f32 1.0, %v3598
        %v3727 = vsub.f32 1.0, %v3599
        %v3728 = vsub.f32 1.0, %v3600
        %v3729 = vsub.f32 1.0, %v3601
        %v3730 = vsub.f32 1.0, %v3602
        %v3731 = vsub.f32 1.0, %v3603
        %v3732 = vsub.f32 1.0, %v3604
        %v3733 = vsub.f32 1.0, %v3605
        %v3734 = vsub.f32 1.0, %v3606
        %v3735 = vsub.f32 1.0, %v3607
        %v3736 = vsub.f32 1.0, %v3608
        %v3737 = vsub.f32 1.0, %v3609
        %v3738 = vsub.f32 1.0, %v3610
        %v3739 = vsub.f32 1.0, %v3611
        %v3740 = vsub.f32 1.0, %v3612
        %v3741 = vsub.f32 1.0, %v3613
        %v3742 = vsub.f32 1.0, %v3614
        %v3743 = vsub.f32 1.0, %v3615
        %v3744 = vsub.f32 1.0, %v3616
        %v3745 = vsub.f32 1.0, %v3617
        %v3746 = vsub.f32 1.0, %v3618
        %v3747 = vsub.f32 1.0, %v3619
        %v3748 = vsub.f32 1.0, %v3620
        %v3749 = vsub.f32 1.0, %v3621
        %v3750 = vsub.f32 1.0, %v3622
        %v3751 = vsub.f32 1.0, %v3623
        %v3752 = vsub.f32 1.0, %v3624
        %v3753 = vsub.f32 1.0, %v3625
        %v3754 = vsub.f32 1.0, %v3626
        %v3755 = vsub.f32 1.0, %v3627
        %v3756 = vsub.f32 1.0, %v3628
        %v3757 = vsub.f32 1.0, %v3629
        %v3758 = vsub.f32 1.0, %v3630
        %v3759 = vsub.f32 1.0, %v3631
        %v3760 = vsub.f32 1.0, %v3632
        %v3761 = vsub.f32 1.0, %v3633
        %v3762 = vsub.f32 1.0, %v3634
        %v3763 = vsub.f32 1.0, %v3635
        %v3764 = vsub.f32 1.0, %v3636
        %v3765 = vsub.f32 1.0, %v3637
        %v3766 = vsub.f32 1.0, %v3638
        %v3767 = vsub.f32 1.0, %v3639
        %v3768 = vsub.f32 1.0, %v3640
        %v3769 = vsub.f32 1.0, %v3641
        %v3770 = vsub.f32 1.0, %v3642
        %v3771 = vsub.f32 1.0, %v3643
        %v3772 = vsub.f32 1.0, %v3644
        %v3773 = vsub.f32 1.0, %v3645
        %v3774 = vsub.f32 1.0, %v3646
        %v3775 = vsub.f32 1.0, %v3647
        %v3776 = vsub.f32 1.0, %v3648
        %v3777 = vsub.f32 1.0, %v3649
        %v3778 = vsub.f32 1.0, %v3650
        %v3779 = vsub.f32 1.0, %v3651
        %v3780 = vsub.f32 1.0, %v3652
        %v3781 = vsub.f32 1.0, %v3653
        %v3782 = vsub.f32 1.0, %v3654
        %v3783 = vsub.f32 1.0, %v3655
        %v3784 = vsub.f32 1.0, %v3656
        %v3785 = vsub.f32 1.0, %v3657
        %v3786 = vsub.f32 1.0, %v3658
        %v3787 = vsub.f32 1.0, %v3659
        %v3788 = vsub.f32 1.0, %v3660
        %v3789 = vsub.f32 1.0, %v3661
        %v3790 = vsub.f32 1.0, %v3662
        %v3791 = vsub.f32 1.0, %v3663
        %v3792 = vsub.f32 1.0, %v3664
        %v3793 = vsub.f32 1.0, %v3665
        %v3794 = vsub.f32 1.0, %v3666
        %v3795 = vsub.f32 1.0, %v3667
        %v3796 = vsub.f32 1.0, %v3668
        %v3797 = vsub.f32 1.0, %v3669
        %v3798 = vsub.f32 1.0, %v3670
        %v3799 = vsub.f32 1.0, %v3671
        %v3800 = vsub.f32 1.0, %v3672
        %v3801 = vsub.f32 1.0, %v3673
        %v3802 = vsub.f32 1.0, %v3674
        %v3803 = vsub.f32 1.0, %v3675
        %v3804 = vsub.f32 1.0, %v3676
        %v3805 = vsub.f32 1.0, %v3677
        %v3806 = vsub.f32 1.0, %v3678
        %v3807 = vsub.f32 1.0, %v3679
        %v3808 = vsub.f32 1.0, %v3680
        %v3809 = vsub.f32 1.0, %v3681
        %v3810 = vsub.f32 1.0, %v3682
        %v3811 = vsub.f32 1.0, %v3683
        %v3812 = vsub.f32 1.0, %v3684
        %v3813 = vsub.f32 1.0, %v3685
        %v3814 = vsub.f32 1.0, %v3686
        %v3815 = vsub.f32 1.0, %v3687
        %v3816 = vsub.f32 1.0, %v3688
        %v3817 = vsub.f32 1.0, %v3689
        %v3818 = vsub.f32 1.0, %v3690
        %vm3819 = vcmp.lt.f32.partialorder %v1131, 0.0
        %vm3820 = vcmp.lt.f32.partialorder %v1132, 0.0
        %vm3821 = vcmp.lt.f32.partialorder %v1133, 0.0
        %vm3822 = vcmp.lt.f32.partialorder %v1134, 0.0
        %vm3823 = vcmp.lt.f32.partialorder %v1135, 0.0
        %vm3824 = vcmp.lt.f32.partialorder %v1136, 0.0
        %vm3825 = vcmp.lt.f32.partialorder %v1137, 0.0
        %vm3826 = vcmp.lt.f32.partialorder %v1138, 0.0
        %vm3827 = vcmp.lt.f32.partialorder %v1139, 0.0
        %vm3828 = vcmp.lt.f32.partialorder %v1140, 0.0
        %vm3829 = vcmp.lt.f32.partialorder %v1141, 0.0
        %vm3830 = vcmp.lt.f32.partialorder %v1142, 0.0
        %vm3831 = vcmp.lt.f32.partialorder %v1143, 0.0
        %vm3832 = vcmp.lt.f32.partialorder %v1144, 0.0
        %vm3833 = vcmp.lt.f32.partialorder %v1145, 0.0
        %vm3834 = vcmp.lt.f32.partialorder %v1146, 0.0
        %vm3835 = vcmp.lt.f32.partialorder %v1147, 0.0
        %vm3836 = vcmp.lt.f32.partialorder %v1148, 0.0
        %vm3837 = vcmp.lt.f32.partialorder %v1149, 0.0
        %vm3838 = vcmp.lt.f32.partialorder %v1150, 0.0
        %vm3839 = vcmp.lt.f32.partialorder %v1151, 0.0
        %vm3840 = vcmp.lt.f32.partialorder %v1152, 0.0
        %vm3841 = vcmp.lt.f32.partialorder %v1153, 0.0
        %vm3842 = vcmp.lt.f32.partialorder %v1154, 0.0
        %vm3843 = vcmp.lt.f32.partialorder %v1155, 0.0
        %vm3844 = vcmp.lt.f32.partialorder %v1156, 0.0
        %vm3845 = vcmp.lt.f32.partialorder %v1157, 0.0
        %vm3846 = vcmp.lt.f32.partialorder %v1158, 0.0
        %vm3847 = vcmp.lt.f32.partialorder %v1159, 0.0
        %vm3848 = vcmp.lt.f32.partialorder %v1160, 0.0
        %vm3849 = vcmp.lt.f32.partialorder %v1161, 0.0
        %vm3850 = vcmp.lt.f32.partialorder %v1162, 0.0
        %vm3851 = vcmp.lt.f32.partialorder %v1163, 0.0
        %vm3852 = vcmp.lt.f32.partialorder %v1164, 0.0
        %vm3853 = vcmp.lt.f32.partialorder %v1165, 0.0
        %vm3854 = vcmp.lt.f32.partialorder %v1166, 0.0
        %vm3855 = vcmp.lt.f32.partialorder %v1167, 0.0
        %vm3856 = vcmp.lt.f32.partialorder %v1168, 0.0
        %vm3857 = vcmp.lt.f32.partialorder %v1169, 0.0
        %vm3858 = vcmp.lt.f32.partialorder %v1170, 0.0
        %vm3859 = vcmp.lt.f32.partialorder %v1171, 0.0
        %vm3860 = vcmp.lt.f32.partialorder %v1172, 0.0
        %vm3861 = vcmp.lt.f32.partialorder %v1173, 0.0
        %vm3862 = vcmp.lt.f32.partialorder %v1174, 0.0
        %vm3863 = vcmp.lt.f32.partialorder %v1175, 0.0
        %vm3864 = vcmp.lt.f32.partialorder %v1176, 0.0
        %vm3865 = vcmp.lt.f32.partialorder %v1177, 0.0
        %vm3866 = vcmp.lt.f32.partialorder %v1178, 0.0
        %vm3867 = vcmp.lt.f32.partialorder %v1179, 0.0
        %vm3868 = vcmp.lt.f32.partialorder %v1180, 0.0
        %vm3869 = vcmp.lt.f32.partialorder %v1181, 0.0
        %vm3870 = vcmp.lt.f32.partialorder %v1182, 0.0
        %vm3871 = vcmp.lt.f32.partialorder %v1183, 0.0
        %vm3872 = vcmp.lt.f32.partialorder %v1184, 0.0
        %vm3873 = vcmp.lt.f32.partialorder %v1185, 0.0
        %vm3874 = vcmp.lt.f32.partialorder %v1186, 0.0
        %vm3875 = vcmp.lt.f32.partialorder %v1187, 0.0
        %vm3876 = vcmp.lt.f32.partialorder %v1188, 0.0
        %vm3877 = vcmp.lt.f32.partialorder %v1189, 0.0
        %vm3878 = vcmp.lt.f32.partialorder %v1190, 0.0
        %vm3879 = vcmp.lt.f32.partialorder %v1191, 0.0
        %vm3880 = vcmp.lt.f32.partialorder %v1192, 0.0
        %vm3881 = vcmp.lt.f32.partialorder %v1193, 0.0
        %vm3882 = vcmp.lt.f32.partialorder %v1194, 0.0
        %vm3883 = vcmp.lt.f32.partialorder %v1195, 0.0
        %vm3884 = vcmp.lt.f32.partialorder %v1196, 0.0
        %vm3885 = vcmp.lt.f32.partialorder %v1197, 0.0
        %vm3886 = vcmp.lt.f32.partialorder %v1198, 0.0
        %vm3887 = vcmp.lt.f32.partialorder %v1199, 0.0
        %vm3888 = vcmp.lt.f32.partialorder %v1200, 0.0
        %vm3889 = vcmp.lt.f32.partialorder %v1201, 0.0
        %vm3890 = vcmp.lt.f32.partialorder %v1202, 0.0
        %vm3891 = vcmp.lt.f32.partialorder %v1203, 0.0
        %vm3892 = vcmp.lt.f32.partialorder %v1204, 0.0
        %vm3893 = vcmp.lt.f32.partialorder %v1205, 0.0
        %vm3894 = vcmp.lt.f32.partialorder %v1206, 0.0
        %vm3895 = vcmp.lt.f32.partialorder %v1207, 0.0
        %vm3896 = vcmp.lt.f32.partialorder %v1208, 0.0
        %vm3897 = vcmp.lt.f32.partialorder %v1209, 0.0
        %vm3898 = vcmp.lt.f32.partialorder %v1210, 0.0
        %vm3899 = vcmp.lt.f32.partialorder %v1211, 0.0
        %vm3900 = vcmp.lt.f32.partialorder %v1212, 0.0
        %vm3901 = vcmp.lt.f32.partialorder %v1213, 0.0
        %vm3902 = vcmp.lt.f32.partialorder %v1214, 0.0
        %vm3903 = vcmp.lt.f32.partialorder %v1215, 0.0
        %vm3904 = vcmp.lt.f32.partialorder %v1216, 0.0
        %vm3905 = vcmp.lt.f32.partialorder %v1217, 0.0
        %vm3906 = vcmp.lt.f32.partialorder %v1218, 0.0
        %vm3907 = vcmp.lt.f32.partialorder %v1219, 0.0
        %vm3908 = vcmp.lt.f32.partialorder %v1220, 0.0
        %vm3909 = vcmp.lt.f32.partialorder %v1221, 0.0
        %vm3910 = vcmp.lt.f32.partialorder %v1222, 0.0
        %vm3911 = vcmp.lt.f32.partialorder %v1223, 0.0
        %vm3912 = vcmp.lt.f32.partialorder %v1224, 0.0
        %vm3913 = vcmp.lt.f32.partialorder %v1225, 0.0
        %vm3914 = vcmp.lt.f32.partialorder %v1226, 0.0
        %vm3915 = vcmp.lt.f32.partialorder %v1227, 0.0
        %vm3916 = vcmp.lt.f32.partialorder %v1228, 0.0
        %vm3917 = vcmp.lt.f32.partialorder %v1229, 0.0
        %vm3918 = vcmp.lt.f32.partialorder %v1230, 0.0
        %vm3919 = vcmp.lt.f32.partialorder %v1231, 0.0
        %vm3920 = vcmp.lt.f32.partialorder %v1232, 0.0
        %vm3921 = vcmp.lt.f32.partialorder %v1233, 0.0
        %vm3922 = vcmp.lt.f32.partialorder %v1234, 0.0
        %vm3923 = vcmp.lt.f32.partialorder %v1235, 0.0
        %vm3924 = vcmp.lt.f32.partialorder %v1236, 0.0
        %vm3925 = vcmp.lt.f32.partialorder %v1237, 0.0
        %vm3926 = vcmp.lt.f32.partialorder %v1238, 0.0
        %vm3927 = vcmp.lt.f32.partialorder %v1239, 0.0
        %vm3928 = vcmp.lt.f32.partialorder %v1240, 0.0
        %vm3929 = vcmp.lt.f32.partialorder %v1241, 0.0
        %vm3930 = vcmp.lt.f32.partialorder %v1242, 0.0
        %vm3931 = vcmp.lt.f32.partialorder %v1243, 0.0
        %vm3932 = vcmp.lt.f32.partialorder %v1244, 0.0
        %vm3933 = vcmp.lt.f32.partialorder %v1245, 0.0
        %vm3934 = vcmp.lt.f32.partialorder %v1246, 0.0
        %vm3935 = vcmp.lt.f32.partialorder %v1247, 0.0
        %vm3936 = vcmp.lt.f32.partialorder %v1248, 0.0
        %vm3937 = vcmp.lt.f32.partialorder %v1249, 0.0
        %vm3938 = vcmp.lt.f32.partialorder %v1250, 0.0
        %vm3939 = vcmp.lt.f32.partialorder %v1251, 0.0
        %vm3940 = vcmp.lt.f32.partialorder %v1252, 0.0
        %vm3941 = vcmp.lt.f32.partialorder %v1253, 0.0
        %vm3942 = vcmp.lt.f32.partialorder %v1254, 0.0
        %vm3943 = vcmp.lt.f32.partialorder %v1255, 0.0
        %vm3944 = vcmp.lt.f32.partialorder %v1256, 0.0
        %vm3945 = vcmp.lt.f32.partialorder %v1257, 0.0
        %vm3946 = vcmp.lt.f32.partialorder %v1258, 0.0
        %v3947 = vsub.f32 0.0, %v3691
        %v3948 = vsub.f32 0.0, %v3692
        %v3949 = vsub.f32 0.0, %v3693
        %v3950 = vsub.f32 0.0, %v3694
        %v3951 = vsub.f32 0.0, %v3695
        %v3952 = vsub.f32 0.0, %v3696
        %v3953 = vsub.f32 0.0, %v3697
        %v3954 = vsub.f32 0.0, %v3698
        %v3955 = vsub.f32 0.0, %v3699
        %v3956 = vsub.f32 0.0, %v3700
        %v3957 = vsub.f32 0.0, %v3701
        %v3958 = vsub.f32 0.0, %v3702
        %v3959 = vsub.f32 0.0, %v3703
        %v3960 = vsub.f32 0.0, %v3704
        %v3961 = vsub.f32 0.0, %v3705
        %v3962 = vsub.f32 0.0, %v3706
        %v3963 = vsub.f32 0.0, %v3707
        %v3964 = vsub.f32 0.0, %v3708
        %v3965 = vsub.f32 0.0, %v3709
        %v3966 = vsub.f32 0.0, %v3710
        %v3967 = vsub.f32 0.0, %v3711
        %v3968 = vsub.f32 0.0, %v3712
        %v3969 = vsub.f32 0.0, %v3713
        %v3970 = vsub.f32 0.0, %v3714
        %v3971 = vsub.f32 0.0, %v3715
        %v3972 = vsub.f32 0.0, %v3716
        %v3973 = vsub.f32 0.0, %v3717
        %v3974 = vsub.f32 0.0, %v3718
        %v3975 = vsub.f32 0.0, %v3719
        %v3976 = vsub.f32 0.0, %v3720
        %v3977 = vsub.f32 0.0, %v3721
        %v3978 = vsub.f32 0.0, %v3722
        %v3979 = vsub.f32 0.0, %v3723
        %v3980 = vsub.f32 0.0, %v3724
        %v3981 = vsub.f32 0.0, %v3725
        %v3982 = vsub.f32 0.0, %v3726
        %v3983 = vsub.f32 0.0, %v3727
        %v3984 = vsub.f32 0.0, %v3728
        %v3985 = vsub.f32 0.0, %v3729
        %v3986 = vsub.f32 0.0, %v3730
        %v3987 = vsub.f32 0.0, %v3731
        %v3988 = vsub.f32 0.0, %v3732
        %v3989 = vsub.f32 0.0, %v3733
        %v3990 = vsub.f32 0.0, %v3734
        %v3991 = vsub.f32 0.0, %v3735
        %v3992 = vsub.f32 0.0, %v3736
        %v3993 = vsub.f32 0.0, %v3737
        %v3994 = vsub.f32 0.0, %v3738
        %v3995 = vsub.f32 0.0, %v3739
        %v3996 = vsub.f32 0.0, %v3740
        %v3997 = vsub.f32 0.0, %v3741
        %v3998 = vsub.f32 0.0, %v3742
        %v3999 = vsub.f32 0.0, %v3743
        %v4000 = vsub.f32 0.0, %v3744
        %v4001 = vsub.f32 0.0, %v3745
        %v4002 = vsub.f32 0.0, %v3746
        %v4003 = vsub.f32 0.0, %v3747
        %v4004 = vsub.f32 0.0, %v3748
        %v4005 = vsub.f32 0.0, %v3749
        %v4006 = vsub.f32 0.0, %v3750
        %v4007 = vsub.f32 0.0, %v3751
        %v4008 = vsub.f32 0.0, %v3752
        %v4009 = vsub.f32 0.0, %v3753
        %v4010 = vsub.f32 0.0, %v3754
        %v4011 = vsub.f32 0.0, %v3755
        %v4012 = vsub.f32 0.0, %v3756
        %v4013 = vsub.f32 0.0, %v3757
        %v4014 = vsub.f32 0.0, %v3758
        %v4015 = vsub.f32 0.0, %v3759
        %v4016 = vsub.f32 0.0, %v3760
        %v4017 = vsub.f32 0.0, %v3761
        %v4018 = vsub.f32 0.0, %v3762
        %v4019 = vsub.f32 0.0, %v3763
        %v4020 = vsub.f32 0.0, %v3764
        %v4021 = vsub.f32 0.0, %v3765
        %v4022 = vsub.f32 0.0, %v3766
        %v4023 = vsub.f32 0.0, %v3767
        %v4024 = vsub.f32 0.0, %v3768
        %v4025 = vsub.f32 0.0, %v3769
        %v4026 = vsub.f32 0.0, %v3770
        %v4027 = vsub.f32 0.0, %v3771
        %v4028 = vsub.f32 0.0, %v3772
        %v4029 = vsub.f32 0.0, %v3773
        %v4030 = vsub.f32 0.0, %v3774
        %v4031 = vsub.f32 0.0, %v3775
        %v4032 = vsub.f32 0.0, %v3776
        %v4033 = vsub.f32 0.0, %v3777
        %v4034 = vsub.f32 0.0, %v3778
        %v4035 = vsub.f32 0.0, %v3779
        %v4036 = vsub.f32 0.0, %v3780
        %v4037 = vsub.f32 0.0, %v3781
        %v4038 = vsub.f32 0.0, %v3782
        %v4039 = vsub.f32 0.0, %v3783
        %v4040 = vsub.f32 0.0, %v3784
        %v4041 = vsub.f32 0.0, %v3785
        %v4042 = vsub.f32 0.0, %v3786
        %v4043 = vsub.f32 0.0, %v3787
        %v4044 = vsub.f32 0.0, %v3788
        %v4045 = vsub.f32 0.0, %v3789
        %v4046 = vsub.f32 0.0, %v3790
        %v4047 = vsub.f32 0.0, %v3791
        %v4048 = vsub.f32 0.0, %v3792
        %v4049 = vsub.f32 0.0, %v3793
        %v4050 = vsub.f32 0.0, %v3794
        %v4051 = vsub.f32 0.0, %v3795
        %v4052 = vsub.f32 0.0, %v3796
        %v4053 = vsub.f32 0.0, %v3797
        %v4054 = vsub.f32 0.0, %v3798
        %v4055 = vsub.f32 0.0, %v3799
        %v4056 = vsub.f32 0.0, %v3800
        %v4057 = vsub.f32 0.0, %v3801
        %v4058 = vsub.f32 0.0, %v3802
        %v4059 = vsub.f32 0.0, %v3803
        %v4060 = vsub.f32 0.0, %v3804
        %v4061 = vsub.f32 0.0, %v3805
        %v4062 = vsub.f32 0.0, %v3806
        %v4063 = vsub.f32 0.0, %v3807
        %v4064 = vsub.f32 0.0, %v3808
        %v4065 = vsub.f32 0.0, %v3809
        %v4066 = vsub.f32 0.0, %v3810
        %v4067 = vsub.f32 0.0, %v3811
        %v4068 = vsub.f32 0.0, %v3812
        %v4069 = vsub.f32 0.0, %v3813
        %v4070 = vsub.f32 0.0, %v3814
        %v4071 = vsub.f32 0.0, %v3815
        %v4072 = vsub.f32 0.0, %v3816
        %v4073 = vsub.f32 0.0, %v3817
        %v4074 = vsub.f32 0.0, %v3818
        %v4075 = vsel %vm3819, %v3947, %v3691
        %v4076 = vsel %vm3820, %v3948, %v3692
        %v4077 = vsel %vm3821, %v3949, %v3693
        %v4078 = vsel %vm3822, %v3950, %v3694
        %v4079 = vsel %vm3823, %v3951, %v3695
        %v4080 = vsel %vm3824, %v3952, %v3696
        %v4081 = vsel %vm3825, %v3953, %v3697
        %v4082 = vsel %vm3826, %v3954, %v3698
        %v4083 = vsel %vm3827, %v3955, %v3699
        %v4084 = vsel %vm3828, %v3956, %v3700
        %v4085 = vsel %vm3829, %v3957, %v3701
        %v4086 = vsel %vm3830, %v3958, %v3702
        %v4087 = vsel %vm3831, %v3959, %v3703
        %v4088 = vsel %vm3832, %v3960, %v3704
        %v4089 = vsel %vm3833, %v3961, %v3705
        %v4090 = vsel %vm3834, %v3962, %v3706
        %v4091 = vsel %vm3835, %v3963, %v3707
        %v4092 = vsel %vm3836, %v3964, %v3708
        %v4093 = vsel %vm3837, %v3965, %v3709
        %v4094 = vsel %vm3838, %v3966, %v3710
        %v4095 = vsel %vm3839, %v3967, %v3711
        %v4096 = vsel %vm3840, %v3968, %v3712
        %v4097 = vsel %vm3841, %v3969, %v3713
        %v4098 = vsel %vm3842, %v3970, %v3714
        %v4099 = vsel %vm3843, %v3971, %v3715
        %v4100 = vsel %vm3844, %v3972, %v3716
        %v4101 = vsel %vm3845, %v3973, %v3717
        %v4102 = vsel %vm3846, %v3974, %v3718
        %v4103 = vsel %vm3847, %v3975, %v3719
        %v4104 = vsel %vm3848, %v3976, %v3720
        %v4105 = vsel %vm3849, %v3977, %v3721
        %v4106 = vsel %vm3850, %v3978, %v3722
        %v4107 = vsel %vm3851, %v3979, %v3723
        %v4108 = vsel %vm3852, %v3980, %v3724
        %v4109 = vsel %vm3853, %v3981, %v3725
        %v4110 = vsel %vm3854, %v3982, %v3726
        %v4111 = vsel %vm3855, %v3983, %v3727
        %v4112 = vsel %vm3856, %v3984, %v3728
        %v4113 = vsel %vm3857, %v3985, %v3729
        %v4114 = vsel %vm3858, %v3986, %v3730
        %v4115 = vsel %vm3859, %v3987, %v3731
        %v4116 = vsel %vm3860, %v3988, %v3732
        %v4117 = vsel %vm3861, %v3989, %v3733
        %v4118 = vsel %vm3862, %v3990, %v3734
        %v4119 = vsel %vm3863, %v3991, %v3735
        %v4120 = vsel %vm3864, %v3992, %v3736
        %v4121 = vsel %vm3865, %v3993, %v3737
        %v4122 = vsel %vm3866, %v3994, %v3738
        %v4123 = vsel %vm3867, %v3995, %v3739
        %v4124 = vsel %vm3868, %v3996, %v3740
        %v4125 = vsel %vm3869, %v3997, %v3741
        %v4126 = vsel %vm3870, %v3998, %v3742
        %v4127 = vsel %vm3871, %v3999, %v3743
        %v4128 = vsel %vm3872, %v4000, %v3744
        %v4129 = vsel %vm3873, %v4001, %v3745
        %v4130 = vsel %vm3874, %v4002, %v3746
        %v4131 = vsel %vm3875, %v4003, %v3747
        %v4132 = vsel %vm3876, %v4004, %v3748
        %v4133 = vsel %vm3877, %v4005, %v3749
        %v4134 = vsel %vm3878, %v4006, %v3750
        %v4135 = vsel %vm3879, %v4007, %v3751
        %v4136 = vsel %vm3880, %v4008, %v3752
        %v4137 = vsel %vm3881, %v4009, %v3753
        %v4138 = vsel %vm3882, %v4010, %v3754
        %v4139 = vsel %vm3883, %v4011, %v3755
        %v4140 = vsel %vm3884, %v4012, %v3756
        %v4141 = vsel %vm3885, %v4013, %v3757
        %v4142 = vsel %vm3886, %v4014, %v3758
        %v4143 = vsel %vm3887, %v4015, %v3759
        %v4144 = vsel %vm3888, %v4016, %v3760
        %v4145 = vsel %vm3889, %v4017, %v3761
        %v4146 = vsel %vm3890, %v4018, %v3762
        %v4147 = vsel %vm3891, %v4019, %v3763
        %v4148 = vsel %vm3892, %v4020, %v3764
        %v4149 = vsel %vm3893, %v4021, %v3765
        %v4150 = vsel %vm3894, %v4022, %v3766
        %v4151 = vsel %vm3895, %v4023, %v3767
        %v4152 = vsel %vm3896, %v4024, %v3768
        %v4153 = vsel %vm3897, %v4025, %v3769
        %v4154 = vsel %vm3898, %v4026, %v3770
        %v4155 = vsel %vm3899, %v4027, %v3771
        %v4156 = vsel %vm3900, %v4028, %v3772
        %v4157 = vsel %vm3901, %v4029, %v3773
        %v4158 = vsel %vm3902, %v4030, %v3774
        %v4159 = vsel %vm3903, %v4031, %v3775
        %v4160 = vsel %vm3904, %v4032, %v3776
        %v4161 = vsel %vm3905, %v4033, %v3777
        %v4162 = vsel %vm3906, %v4034, %v3778
        %v4163 = vsel %vm3907, %v4035, %v3779
        %v4164 = vsel %vm3908, %v4036, %v3780
        %v4165 = vsel %vm3909, %v4037, %v3781
        %v4166 = vsel %vm3910, %v4038, %v3782
        %v4167 = vsel %vm3911, %v4039, %v3783
        %v4168 = vsel %vm3912, %v4040, %v3784
        %v4169 = vsel %vm3913, %v4041, %v3785
        %v4170 = vsel %vm3914, %v4042, %v3786
        %v4171 = vsel %vm3915, %v4043, %v3787
        %v4172 = vsel %vm3916, %v4044, %v3788
        %v4173 = vsel %vm3917, %v4045, %v3789
        %v4174 = vsel %vm3918, %v4046, %v3790
        %v4175 = vsel %vm3919, %v4047, %v3791
        %v4176 = vsel %vm3920, %v4048, %v3792
        %v4177 = vsel %vm3921, %v4049, %v3793
        %v4178 = vsel %vm3922, %v4050, %v3794
        %v4179 = vsel %vm3923, %v4051, %v3795
        %v4180 = vsel %vm3924, %v4052, %v3796
        %v4181 = vsel %vm3925, %v4053, %v3797
        %v4182 = vsel %vm3926, %v4054, %v3798
        %v4183 = vsel %vm3927, %v4055, %v3799
        %v4184 = vsel %vm3928, %v4056, %v3800
        %v4185 = vsel %vm3929, %v4057, %v3801
        %v4186 = vsel %vm3930, %v4058, %v3802
        %v4187 = vsel %vm3931, %v4059, %v3803
        %v4188 = vsel %vm3932, %v4060, %v3804
        %v4189 = vsel %vm3933, %v4061, %v3805
        %v4190 = vsel %vm3934, %v4062, %v3806
        %v4191 = vsel %vm3935, %v4063, %v3807
        %v4192 = vsel %vm3936, %v4064, %v3808
        %v4193 = vsel %vm3937, %v4065, %v3809
        %v4194 = vsel %vm3938, %v4066, %v3810
        %v4195 = vsel %vm3939, %v4067, %v3811
        %v4196 = vsel %vm3940, %v4068, %v3812
        %v4197 = vsel %vm3941, %v4069, %v3813
        %v4198 = vsel %vm3942, %v4070, %v3814
        %v4199 = vsel %vm3943, %v4071, %v3815
        %v4200 = vsel %vm3944, %v4072, %v3816
        %v4201 = vsel %vm3945, %v4073, %v3817
        %v4202 = vsel %vm3946, %v4074, %v3818
        %v4203 = vadd.f32 %v4075, 1.0
        %v4204 = vadd.f32 %v4076, 1.0
        %v4205 = vadd.f32 %v4077, 1.0
        %v4206 = vadd.f32 %v4078, 1.0
        %v4207 = vadd.f32 %v4079, 1.0
        %v4208 = vadd.f32 %v4080, 1.0
        %v4209 = vadd.f32 %v4081, 1.0
        %v4210 = vadd.f32 %v4082, 1.0
        %v4211 = vadd.f32 %v4083, 1.0
        %v4212 = vadd.f32 %v4084, 1.0
        %v4213 = vadd.f32 %v4085, 1.0
        %v4214 = vadd.f32 %v4086, 1.0
        %v4215 = vadd.f32 %v4087, 1.0
        %v4216 = vadd.f32 %v4088, 1.0
        %v4217 = vadd.f32 %v4089, 1.0
        %v4218 = vadd.f32 %v4090, 1.0
        %v4219 = vadd.f32 %v4091, 1.0
        %v4220 = vadd.f32 %v4092, 1.0
        %v4221 = vadd.f32 %v4093, 1.0
        %v4222 = vadd.f32 %v4094, 1.0
        %v4223 = vadd.f32 %v4095, 1.0
        %v4224 = vadd.f32 %v4096, 1.0
        %v4225 = vadd.f32 %v4097, 1.0
        %v4226 = vadd.f32 %v4098, 1.0
        %v4227 = vadd.f32 %v4099, 1.0
        %v4228 = vadd.f32 %v4100, 1.0
        %v4229 = vadd.f32 %v4101, 1.0
        %v4230 = vadd.f32 %v4102, 1.0
        %v4231 = vadd.f32 %v4103, 1.0
        %v4232 = vadd.f32 %v4104, 1.0
        %v4233 = vadd.f32 %v4105, 1.0
        %v4234 = vadd.f32 %v4106, 1.0
        %v4235 = vadd.f32 %v4107, 1.0
        %v4236 = vadd.f32 %v4108, 1.0
        %v4237 = vadd.f32 %v4109, 1.0
        %v4238 = vadd.f32 %v4110, 1.0
        %v4239 = vadd.f32 %v4111, 1.0
        %v4240 = vadd.f32 %v4112, 1.0
        %v4241 = vadd.f32 %v4113, 1.0
        %v4242 = vadd.f32 %v4114, 1.0
        %v4243 = vadd.f32 %v4115, 1.0
        %v4244 = vadd.f32 %v4116, 1.0
        %v4245 = vadd.f32 %v4117, 1.0
        %v4246 = vadd.f32 %v4118, 1.0
        %v4247 = vadd.f32 %v4119, 1.0
        %v4248 = vadd.f32 %v4120, 1.0
        %v4249 = vadd.f32 %v4121, 1.0
        %v4250 = vadd.f32 %v4122, 1.0
        %v4251 = vadd.f32 %v4123, 1.0
        %v4252 = vadd.f32 %v4124, 1.0
        %v4253 = vadd.f32 %v4125, 1.0
        %v4254 = vadd.f32 %v4126, 1.0
        %v4255 = vadd.f32 %v4127, 1.0
        %v4256 = vadd.f32 %v4128, 1.0
        %v4257 = vadd.f32 %v4129, 1.0
        %v4258 = vadd.f32 %v4130, 1.0
        %v4259 = vadd.f32 %v4131, 1.0
        %v4260 = vadd.f32 %v4132, 1.0
        %v4261 = vadd.f32 %v4133, 1.0
        %v4262 = vadd.f32 %v4134, 1.0
        %v4263 = vadd.f32 %v4135, 1.0
        %v4264 = vadd.f32 %v4136, 1.0
        %v4265 = vadd.f32 %v4137, 1.0
        %v4266 = vadd.f32 %v4138, 1.0
        %v4267 = vadd.f32 %v4139, 1.0
        %v4268 = vadd.f32 %v4140, 1.0
        %v4269 = vadd.f32 %v4141, 1.0
        %v4270 = vadd.f32 %v4142, 1.0
        %v4271 = vadd.f32 %v4143, 1.0
        %v4272 = vadd.f32 %v4144, 1.0
        %v4273 = vadd.f32 %v4145, 1.0
        %v4274 = vadd.f32 %v4146, 1.0
        %v4275 = vadd.f32 %v4147, 1.0
        %v4276 = vadd.f32 %v4148, 1.0
        %v4277 = vadd.f32 %v4149, 1.0
        %v4278 = vadd.f32 %v4150, 1.0
        %v4279 = vadd.f32 %v4151, 1.0
        %v4280 = vadd.f32 %v4152, 1.0
        %v4281 = vadd.f32 %v4153, 1.0
        %v4282 = vadd.f32 %v4154, 1.0
        %v4283 = vadd.f32 %v4155, 1.0
        %v4284 = vadd.f32 %v4156, 1.0
        %v4285 = vadd.f32 %v4157, 1.0
        %v4286 = vadd.f32 %v4158, 1.0
        %v4287 = vadd.f32 %v4159, 1.0
        %v4288 = vadd.f32 %v4160, 1.0
        %v4289 = vadd.f32 %v4161, 1.0
        %v4290 = vadd.f32 %v4162, 1.0
        %v4291 = vadd.f32 %v4163, 1.0
        %v4292 = vadd.f32 %v4164, 1.0
        %v4293 = vadd.f32 %v4165, 1.0
        %v4294 = vadd.f32 %v4166, 1.0
        %v4295 = vadd.f32 %v4167, 1.0
        %v4296 = vadd.f32 %v4168, 1.0
        %v4297 = vadd.f32 %v4169, 1.0
        %v4298 = vadd.f32 %v4170, 1.0
        %v4299 = vadd.f32 %v4171, 1.0
        %v4300 = vadd.f32 %v4172, 1.0
        %v4301 = vadd.f32 %v4173, 1.0
        %v4302 = vadd.f32 %v4174, 1.0
        %v4303 = vadd.f32 %v4175, 1.0
        %v4304 = vadd.f32 %v4176, 1.0
        %v4305 = vadd.f32 %v4177, 1.0
        %v4306 = vadd.f32 %v4178, 1.0
        %v4307 = vadd.f32 %v4179, 1.0
        %v4308 = vadd.f32 %v4180, 1.0
        %v4309 = vadd.f32 %v4181, 1.0
        %v4310 = vadd.f32 %v4182, 1.0
        %v4311 = vadd.f32 %v4183, 1.0
        %v4312 = vadd.f32 %v4184, 1.0
        %v4313 = vadd.f32 %v4185, 1.0
        %v4314 = vadd.f32 %v4186, 1.0
        %v4315 = vadd.f32 %v4187, 1.0
        %v4316 = vadd.f32 %v4188, 1.0
        %v4317 = vadd.f32 %v4189, 1.0
        %v4318 = vadd.f32 %v4190, 1.0
        %v4319 = vadd.f32 %v4191, 1.0
        %v4320 = vadd.f32 %v4192, 1.0
        %v4321 = vadd.f32 %v4193, 1.0
        %v4322 = vadd.f32 %v4194, 1.0
        %v4323 = vadd.f32 %v4195, 1.0
        %v4324 = vadd.f32 %v4196, 1.0
        %v4325 = vadd.f32 %v4197, 1.0
        %v4326 = vadd.f32 %v4198, 1.0
        %v4327 = vadd.f32 %v4199, 1.0
        %v4328 = vadd.f32 %v4200, 1.0
        %v4329 = vadd.f32 %v4201, 1.0
        %v4330 = vadd.f32 %v4202, 1.0
        %v4331 = vmul.f32 %v1003, %v4203
        %v4332 = vmul.f32 %v1004, %v4204
        %v4333 = vmul.f32 %v1005, %v4205
        %v4334 = vmul.f32 %v1006, %v4206
        %v4335 = vmul.f32 %v1007, %v4207
        %v4336 = vmul.f32 %v1008, %v4208
        %v4337 = vmul.f32 %v1009, %v4209
        %v4338 = vmul.f32 %v1010, %v4210
        %v4339 = vmul.f32 %v1011, %v4211
        %v4340 = vmul.f32 %v1012, %v4212
        %v4341 = vmul.f32 %v1013, %v4213
        %v4342 = vmul.f32 %v1014, %v4214
        %v4343 = vmul.f32 %v1015, %v4215
        %v4344 = vmul.f32 %v1016, %v4216
        %v4345 = vmul.f32 %v1017, %v4217
        %v4346 = vmul.f32 %v1018, %v4218
        %v4347 = vmul.f32 %v1019, %v4219
        %v4348 = vmul.f32 %v1020, %v4220
        %v4349 = vmul.f32 %v1021, %v4221
        %v4350 = vmul.f32 %v1022, %v4222
        %v4351 = vmul.f32 %v1023, %v4223
        %v4352 = vmul.f32 %v1024, %v4224
        %v4353 = vmul.f32 %v1025, %v4225
        %v4354 = vmul.f32 %v1026, %v4226
        %v4355 = vmul.f32 %v1027, %v4227
        %v4356 = vmul.f32 %v1028, %v4228
        %v4357 = vmul.f32 %v1029, %v4229
        %v4358 = vmul.f32 %v1030, %v4230
        %v4359 = vmul.f32 %v1031, %v4231
        %v4360 = vmul.f32 %v1032, %v4232
        %v4361 = vmul.f32 %v1033, %v4233
        %v4362 = vmul.f32 %v1034, %v4234
        %v4363 = vmul.f32 %v1035, %v4235
        %v4364 = vmul.f32 %v1036, %v4236
        %v4365 = vmul.f32 %v1037, %v4237
        %v4366 = vmul.f32 %v1038, %v4238
        %v4367 = vmul.f32 %v1039, %v4239
        %v4368 = vmul.f32 %v1040, %v4240
        %v4369 = vmul.f32 %v1041, %v4241
        %v4370 = vmul.f32 %v1042, %v4242
        %v4371 = vmul.f32 %v1043, %v4243
        %v4372 = vmul.f32 %v1044, %v4244
        %v4373 = vmul.f32 %v1045, %v4245
        %v4374 = vmul.f32 %v1046, %v4246
        %v4375 = vmul.f32 %v1047, %v4247
        %v4376 = vmul.f32 %v1048, %v4248
        %v4377 = vmul.f32 %v1049, %v4249
        %v4378 = vmul.f32 %v1050, %v4250
        %v4379 = vmul.f32 %v1051, %v4251
        %v4380 = vmul.f32 %v1052, %v4252
        %v4381 = vmul.f32 %v1053, %v4253
        %v4382 = vmul.f32 %v1054, %v4254
        %v4383 = vmul.f32 %v1055, %v4255
        %v4384 = vmul.f32 %v1056, %v4256
        %v4385 = vmul.f32 %v1057, %v4257
        %v4386 = vmul.f32 %v1058, %v4258
        %v4387 = vmul.f32 %v1059, %v4259
        %v4388 = vmul.f32 %v1060, %v4260
        %v4389 = vmul.f32 %v1061, %v4261
        %v4390 = vmul.f32 %v1062, %v4262
        %v4391 = vmul.f32 %v1063, %v4263
        %v4392 = vmul.f32 %v1064, %v4264
        %v4393 = vmul.f32 %v1065, %v4265
        %v4394 = vmul.f32 %v1066, %v4266
        %v4395 = vmul.f32 %v1067, %v4267
        %v4396 = vmul.f32 %v1068, %v4268
        %v4397 = vmul.f32 %v1069, %v4269
        %v4398 = vmul.f32 %v1070, %v4270
        %v4399 = vmul.f32 %v1071, %v4271
        %v4400 = vmul.f32 %v1072, %v4272
        %v4401 = vmul.f32 %v1073, %v4273
        %v4402 = vmul.f32 %v1074, %v4274
        %v4403 = vmul.f32 %v1075, %v4275
        %v4404 = vmul.f32 %v1076, %v4276
        %v4405 = vmul.f32 %v1077, %v4277
        %v4406 = vmul.f32 %v1078, %v4278
        %v4407 = vmul.f32 %v1079, %v4279
        %v4408 = vmul.f32 %v1080, %v4280
        %v4409 = vmul.f32 %v1081, %v4281
        %v4410 = vmul.f32 %v1082, %v4282
        %v4411 = vmul.f32 %v1083, %v4283
        %v4412 = vmul.f32 %v1084, %v4284
        %v4413 = vmul.f32 %v1085, %v4285
        %v4414 = vmul.f32 %v1086, %v4286
        %v4415 = vmul.f32 %v1087, %v4287
        %v4416 = vmul.f32 %v1088, %v4288
        %v4417 = vmul.f32 %v1089, %v4289
        %v4418 = vmul.f32 %v1090, %v4290
        %v4419 = vmul.f32 %v1091, %v4291
        %v4420 = vmul.f32 %v1092, %v4292
        %v4421 = vmul.f32 %v1093, %v4293
        %v4422 = vmul.f32 %v1094, %v4294
        %v4423 = vmul.f32 %v1095, %v4295
        %v4424 = vmul.f32 %v1096, %v4296
        %v4425 = vmul.f32 %v1097, %v4297
        %v4426 = vmul.f32 %v1098, %v4298
        %v4427 = vmul.f32 %v1099, %v4299
        %v4428 = vmul.f32 %v1100, %v4300
        %v4429 = vmul.f32 %v1101, %v4301
        %v4430 = vmul.f32 %v1102, %v4302
        %v4431 = vmul.f32 %v1103, %v4303
        %v4432 = vmul.f32 %v1104, %v4304
        %v4433 = vmul.f32 %v1105, %v4305
        %v4434 = vmul.f32 %v1106, %v4306
        %v4435 = vmul.f32 %v1107, %v4307
        %v4436 = vmul.f32 %v1108, %v4308
        %v4437 = vmul.f32 %v1109, %v4309
        %v4438 = vmul.f32 %v1110, %v4310
        %v4439 = vmul.f32 %v1111, %v4311
        %v4440 = vmul.f32 %v1112, %v4312
        %v4441 = vmul.f32 %v1113, %v4313
        %v4442 = vmul.f32 %v1114, %v4314
        %v4443 = vmul.f32 %v1115, %v4315
        %v4444 = vmul.f32 %v1116, %v4316
        %v4445 = vmul.f32 %v1117, %v4317
        %v4446 = vmul.f32 %v1118, %v4318
        %v4447 = vmul.f32 %v1119, %v4319
        %v4448 = vmul.f32 %v1120, %v4320
        %v4449 = vmul.f32 %v1121, %v4321
        %v4450 = vmul.f32 %v1122, %v4322
        %v4451 = vmul.f32 %v1123, %v4323
        %v4452 = vmul.f32 %v1124, %v4324
        %v4453 = vmul.f32 %v1125, %v4325
        %v4454 = vmul.f32 %v1126, %v4326
        %v4455 = vmul.f32 %v1127, %v4327
        %v4456 = vmul.f32 %v1128, %v4328
        %v4457 = vmul.f32 %v1129, %v4329
        %v4458 = vmul.f32 %v1130, %v4330
        %v4459 = vpack.c.bf16 %v4335, %v4331
        %v4460 = vpack.c.bf16 %v4336, %v4332
        %v4461 = vpack.c.bf16 %v4337, %v4333
        %v4462 = vpack.c.bf16 %v4338, %v4334
        %v4463 = vpack.c.bf16 %v4343, %v4339
        %v4464 = vpack.c.bf16 %v4344, %v4340
        %v4465 = vpack.c.bf16 %v4345, %v4341
        %v4466 = vpack.c.bf16 %v4346, %v4342
        %v4467 = vpack.c.bf16 %v4351, %v4347
        %v4468 = vpack.c.bf16 %v4352, %v4348
        %v4469 = vpack.c.bf16 %v4353, %v4349
        %v4470 = vpack.c.bf16 %v4354, %v4350
        %v4471 = vpack.c.bf16 %v4359, %v4355
        %v4472 = vpack.c.bf16 %v4360, %v4356
        %v4473 = vpack.c.bf16 %v4361, %v4357
        %v4474 = vpack.c.bf16 %v4362, %v4358
        %v4475 = vpack.c.bf16 %v4367, %v4363
        %v4476 = vpack.c.bf16 %v4368, %v4364
        %v4477 = vpack.c.bf16 %v4369, %v4365
        %v4478 = vpack.c.bf16 %v4370, %v4366
        %v4479 = vpack.c.bf16 %v4375, %v4371
        %v4480 = vpack.c.bf16 %v4376, %v4372
        %v4481 = vpack.c.bf16 %v4377, %v4373
        %v4482 = vpack.c.bf16 %v4378, %v4374
        %v4483 = vpack.c.bf16 %v4383, %v4379
        %v4484 = vpack.c.bf16 %v4384, %v4380
        %v4485 = vpack.c.bf16 %v4385, %v4381
        %v4486 = vpack.c.bf16 %v4386, %v4382
        %v4487 = vpack.c.bf16 %v4391, %v4387
        %v4488 = vpack.c.bf16 %v4392, %v4388
        %v4489 = vpack.c.bf16 %v4393, %v4389
        %v4490 = vpack.c.bf16 %v4394, %v4390
        %v4491 = vpack.c.bf16 %v4399, %v4395
        %v4492 = vpack.c.bf16 %v4400, %v4396
        %v4493 = vpack.c.bf16 %v4401, %v4397
        %v4494 = vpack.c.bf16 %v4402, %v4398
        %v4495 = vpack.c.bf16 %v4407, %v4403
        %v4496 = vpack.c.bf16 %v4408, %v4404
        %v4497 = vpack.c.bf16 %v4409, %v4405
        %v4498 = vpack.c.bf16 %v4410, %v4406
        %v4499 = vpack.c.bf16 %v4415, %v4411
        %v4500 = vpack.c.bf16 %v4416, %v4412
        %v4501 = vpack.c.bf16 %v4417, %v4413
        %v4502 = vpack.c.bf16 %v4418, %v4414
        %v4503 = vpack.c.bf16 %v4423, %v4419
        %v4504 = vpack.c.bf16 %v4424, %v4420
        %v4505 = vpack.c.bf16 %v4425, %v4421
        %v4506 = vpack.c.bf16 %v4426, %v4422
        %v4507 = vpack.c.bf16 %v4431, %v4427
        %v4508 = vpack.c.bf16 %v4432, %v4428
        %v4509 = vpack.c.bf16 %v4433, %v4429
        %v4510 = vpack.c.bf16 %v4434, %v4430
        %v4511 = vpack.c.bf16 %v4439, %v4435
        %v4512 = vpack.c.bf16 %v4440, %v4436
        %v4513 = vpack.c.bf16 %v4441, %v4437
        %v4514 = vpack.c.bf16 %v4442, %v4438
        %v4515 = vpack.c.bf16 %v4447, %v4443
        %v4516 = vpack.c.bf16 %v4448, %v4444
        %v4517 = vpack.c.bf16 %v4449, %v4445
        %v4518 = vpack.c.bf16 %v4450, %v4446
        %v4519 = vpack.c.bf16 %v4455, %v4451
        %v4520 = vpack.c.bf16 %v4456, %v4452
        %v4521 = vpack.c.bf16 %v4457, %v4453
        %v4522 = vpack.c.bf16 %v4458, %v4454
        %v4523 = vld [vmem:[#allocation7] sm:$0xf]
        %v4524 = vld [vmem:[#allocation7 + $0x4] sm:$0xf]
        %v4525 = vld [vmem:[#allocation7 + $0x8] sm:$0xf]
        %v4526 = vld [vmem:[#allocation7 + $0xc] sm:$0xf]
        %v4527 = vld [vmem:[#allocation7 + $0x10] sm:$0xf]
        %v4528 = vld [vmem:[#allocation7 + $0x14] sm:$0xf]
        %v4529 = vld [vmem:[#allocation7 + $0x18] sm:$0xf]
        %v4530 = vld [vmem:[#allocation7 + $0x1c] sm:$0xf]
        %v4531 = vld [vmem:[#allocation7 + $0x20] sm:$0xf]
        %v4532 = vld [vmem:[#allocation7 + $0x24] sm:$0xf]
        %v4533 = vld [vmem:[#allocation7 + $0x28] sm:$0xf]
        %v4534 = vld [vmem:[#allocation7 + $0x2c] sm:$0xf]
        %v4535 = vld [vmem:[#allocation7 + $0x30] sm:$0xf]
        %v4536 = vld [vmem:[#allocation7 + $0x34] sm:$0xf]
        %v4537 = vld [vmem:[#allocation7 + $0x38] sm:$0xf]
        %v4538 = vld [vmem:[#allocation7 + $0x3c] sm:$0xf]
        %v4539 = vld [vmem:[#allocation7 + $0x40] sm:$0xf]
        %v4540 = vld [vmem:[#allocation7 + $0x44] sm:$0xf]
        %v4541 = vld [vmem:[#allocation7 + $0x48] sm:$0xf]
        %v4542 = vld [vmem:[#allocation7 + $0x4c] sm:$0xf]
        %v4543 = vld [vmem:[#allocation7 + $0x50] sm:$0xf]
        %v4544 = vld [vmem:[#allocation7 + $0x54] sm:$0xf]
        %v4545 = vld [vmem:[#allocation7 + $0x58] sm:$0xf]
        %v4546 = vld [vmem:[#allocation7 + $0x5c] sm:$0xf]
        %v4547 = vld [vmem:[#allocation7 + $0x60] sm:$0xf]
        %v4548 = vld [vmem:[#allocation7 + $0x64] sm:$0xf]
        %v4549 = vld [vmem:[#allocation7 + $0x68] sm:$0xf]
        %v4550 = vld [vmem:[#allocation7 + $0x6c] sm:$0xf]
        %v4551 = vld [vmem:[#allocation7 + $0x70] sm:$0xf]
        %v4552 = vld [vmem:[#allocation7 + $0x74] sm:$0xf]
        %v4553 = vld [vmem:[#allocation7 + $0x78] sm:$0xf]
        %v4554 = vld [vmem:[#allocation7 + $0x7c] sm:$0xf]
        %v4555 = vld [vmem:[#allocation7 + $0x80] sm:$0xf]
        %v4556 = vld [vmem:[#allocation7 + $0x84] sm:$0xf]
        %v4557 = vld [vmem:[#allocation7 + $0x88] sm:$0xf]
        %v4558 = vld [vmem:[#allocation7 + $0x8c] sm:$0xf]
        %v4559 = vld [vmem:[#allocation7 + $0x90] sm:$0xf]
        %v4560 = vld [vmem:[#allocation7 + $0x94] sm:$0xf]
        %v4561 = vld [vmem:[#allocation7 + $0x98] sm:$0xf]
        %v4562 = vld [vmem:[#allocation7 + $0x9c] sm:$0xf]
        %v4563 = vld [vmem:[#allocation7 + $0xa0] sm:$0xf]
        %v4564 = vld [vmem:[#allocation7 + $0xa4] sm:$0xf]
        %v4565 = vld [vmem:[#allocation7 + $0xa8] sm:$0xf]
        %v4566 = vld [vmem:[#allocation7 + $0xac] sm:$0xf]
        %v4567 = vld [vmem:[#allocation7 + $0xb0] sm:$0xf]
        %v4568 = vld [vmem:[#allocation7 + $0xb4] sm:$0xf]
        %v4569 = vld [vmem:[#allocation7 + $0xb8] sm:$0xf]
        %v4570 = vld [vmem:[#allocation7 + $0xbc] sm:$0xf]
        %v4571 = vld [vmem:[#allocation7 + $0xc0] sm:$0xf]
        %v4572 = vld [vmem:[#allocation7 + $0xc4] sm:$0xf]
        %v4573 = vld [vmem:[#allocation7 + $0xc8] sm:$0xf]
        %v4574 = vld [vmem:[#allocation7 + $0xcc] sm:$0xf]
        %v4575 = vld [vmem:[#allocation7 + $0xd0] sm:$0xf]
        %v4576 = vld [vmem:[#allocation7 + $0xd4] sm:$0xf]
        %v4577 = vld [vmem:[#allocation7 + $0xd8] sm:$0xf]
        %v4578 = vld [vmem:[#allocation7 + $0xdc] sm:$0xf]
        %v4579 = vld [vmem:[#allocation7 + $0xe0] sm:$0xf]
        %v4580 = vld [vmem:[#allocation7 + $0xe4] sm:$0xf]
        %v4581 = vld [vmem:[#allocation7 + $0xe8] sm:$0xf]
        %v4582 = vld [vmem:[#allocation7 + $0xec] sm:$0xf]
        %v4583 = vld [vmem:[#allocation7 + $0xf0] sm:$0xf]
        %v4584 = vld [vmem:[#allocation7 + $0xf4] sm:$0xf]
        %v4585 = vld [vmem:[#allocation7 + $0xf8] sm:$0xf]
        %v4586 = vld [vmem:[#allocation7 + $0xfc] sm:$0xf]
        %v4587 = vld [vmem:[%s4] sm:$0x1]
        %v4589 = vlaneseq
        %v4590 = vshrl.u32 %v4589, 7
        %v4591 = vsub.s32 0, %v4590
        %v4592 = vrot.slane %v4587, %v4591
        %v4658 = vunpack.c.l.b16 %v4523
        %v4659 = vunpack.c.l.b16 %v4524
        %v4660 = vunpack.c.l.b16 %v4525
        %v4661 = vunpack.c.l.b16 %v4526
        %v4662 = vunpack.c.l.b16 %v4527
        %v4663 = vunpack.c.l.b16 %v4528
        %v4664 = vunpack.c.l.b16 %v4529
        %v4665 = vunpack.c.l.b16 %v4530
        %v4666 = vunpack.c.l.b16 %v4531
        %v4667 = vunpack.c.l.b16 %v4532
        %v4668 = vunpack.c.l.b16 %v4533
        %v4669 = vunpack.c.l.b16 %v4534
        %v4670 = vunpack.c.l.b16 %v4535
        %v4671 = vunpack.c.l.b16 %v4536
        %v4672 = vunpack.c.l.b16 %v4537
        %v4673 = vunpack.c.l.b16 %v4538
        %v4674 = vunpack.c.l.b16 %v4539
        %v4675 = vunpack.c.l.b16 %v4540
        %v4676 = vunpack.c.l.b16 %v4541
        %v4677 = vunpack.c.l.b16 %v4542
        %v4678 = vunpack.c.l.b16 %v4543
        %v4679 = vunpack.c.l.b16 %v4544
        %v4680 = vunpack.c.l.b16 %v4545
        %v4681 = vunpack.c.l.b16 %v4546
        %v4682 = vunpack.c.l.b16 %v4547
        %v4683 = vunpack.c.l.b16 %v4548
        %v4684 = vunpack.c.l.b16 %v4549
        %v4685 = vunpack.c.l.b16 %v4550
        %v4686 = vunpack.c.l.b16 %v4551
        %v4687 = vunpack.c.l.b16 %v4552
        %v4688 = vunpack.c.l.b16 %v4553
        %v4689 = vunpack.c.l.b16 %v4554
        %v4690 = vunpack.c.l.b16 %v4555
        %v4691 = vunpack.c.l.b16 %v4556
        %v4692 = vunpack.c.l.b16 %v4557
        %v4693 = vunpack.c.l.b16 %v4558
        %v4694 = vunpack.c.l.b16 %v4559
        %v4695 = vunpack.c.l.b16 %v4560
        %v4696 = vunpack.c.l.b16 %v4561
        %v4697 = vunpack.c.l.b16 %v4562
        %v4698 = vunpack.c.l.b16 %v4563
        %v4699 = vunpack.c.l.b16 %v4564
        %v4700 = vunpack.c.l.b16 %v4565
        %v4701 = vunpack.c.l.b16 %v4566
        %v4702 = vunpack.c.l.b16 %v4567
        %v4703 = vunpack.c.l.b16 %v4568
        %v4704 = vunpack.c.l.b16 %v4569
        %v4705 = vunpack.c.l.b16 %v4570
        %v4706 = vunpack.c.l.b16 %v4571
        %v4707 = vunpack.c.l.b16 %v4572
        %v4708 = vunpack.c.l.b16 %v4573
        %v4709 = vunpack.c.l.b16 %v4574
        %v4710 = vunpack.c.l.b16 %v4575
        %v4711 = vunpack.c.l.b16 %v4576
        %v4712 = vunpack.c.l.b16 %v4577
        %v4713 = vunpack.c.l.b16 %v4578
        %v4714 = vunpack.c.l.b16 %v4579
        %v4715 = vunpack.c.l.b16 %v4580
        %v4716 = vunpack.c.l.b16 %v4581
        %v4717 = vunpack.c.l.b16 %v4582
        %v4718 = vunpack.c.l.b16 %v4583
        %v4719 = vunpack.c.l.b16 %v4584
        %v4720 = vunpack.c.l.b16 %v4585
        %v4721 = vunpack.c.l.b16 %v4586
        %v4722 = vpack.c.b16 %v4659, %v4658
        %v4723 = vpack.c.b16 %v4661, %v4660
        %v4724 = vpack.c.b16 %v4663, %v4662
        %v4725 = vpack.c.b16 %v4665, %v4664
        %v4726 = vpack.c.b16 %v4667, %v4666
        %v4727 = vpack.c.b16 %v4669, %v4668
        %v4728 = vpack.c.b16 %v4671, %v4670
        %v4729 = vpack.c.b16 %v4673, %v4672
        %v4730 = vpack.c.b16 %v4675, %v4674
        %v4731 = vpack.c.b16 %v4677, %v4676
        %v4732 = vpack.c.b16 %v4679, %v4678
        %v4733 = vpack.c.b16 %v4681, %v4680
        %v4734 = vpack.c.b16 %v4683, %v4682
        %v4735 = vpack.c.b16 %v4685, %v4684
        %v4736 = vpack.c.b16 %v4687, %v4686
        %v4737 = vpack.c.b16 %v4689, %v4688
        %v4738 = vpack.c.b16 %v4691, %v4690
        %v4739 = vpack.c.b16 %v4693, %v4692
        %v4740 = vpack.c.b16 %v4695, %v4694
        %v4741 = vpack.c.b16 %v4697, %v4696
        %v4742 = vpack.c.b16 %v4699, %v4698
        %v4743 = vpack.c.b16 %v4701, %v4700
        %v4744 = vpack.c.b16 %v4703, %v4702
        %v4745 = vpack.c.b16 %v4705, %v4704
        %v4746 = vpack.c.b16 %v4707, %v4706
        %v4747 = vpack.c.b16 %v4709, %v4708
        %v4748 = vpack.c.b16 %v4711, %v4710
        %v4749 = vpack.c.b16 %v4713, %v4712
        %v4750 = vpack.c.b16 %v4715, %v4714
        %v4751 = vpack.c.b16 %v4717, %v4716
        %v4752 = vpack.c.b16 %v4719, %v4718
        %v4753 = vpack.c.b16 %v4721, %v4720
        %4786 = vmatprep.subr.bf16.mxu0 0
        %4787 = vmatpush1.bf16.msra.mxu0 %v4722
        %4788 = vmatprep.subr.bf16.mxu0 0
        %4789 = vmatpush1.bf16.msra.mxu0 %v4723
        %4790 = vmatprep.subr.bf16.mxu0 0
        %4791 = vmatpush1.bf16.msra.mxu0 %v4724
        %4792 = vmatprep.subr.bf16.mxu0 0
        %4793 = vmatpush1.bf16.msra.mxu0 %v4725
        %4794 = vmatprep.subr.bf16.mxu0 0
        %4795 = vmatpush1.bf16.msra.mxu0 %v4726
        %4796 = vmatprep.subr.bf16.mxu0 0
        %4797 = vmatpush1.bf16.msra.mxu0 %v4727
        %4798 = vmatprep.subr.bf16.mxu0 0
        %4799 = vmatpush1.bf16.msra.mxu0 %v4728
        %4800 = vmatprep.subr.bf16.mxu0 0
        %4801 = vmatpush1.bf16.msra.mxu0 %v4729
        %4802 = vmatprep.subr.bf16.mxu0 0
        %4803 = vmatpush1.bf16.msra.mxu0 %v4730
        %4804 = vmatprep.subr.bf16.mxu0 0
        %4805 = vmatpush1.bf16.msra.mxu0 %v4731
        %4806 = vmatprep.subr.bf16.mxu0 0
        %4807 = vmatpush1.bf16.msra.mxu0 %v4732
        %4808 = vmatprep.subr.bf16.mxu0 0
        %4809 = vmatpush1.bf16.msra.mxu0 %v4733
        %4810 = vmatprep.subr.bf16.mxu0 0
        %4811 = vmatpush1.bf16.msra.mxu0 %v4734
        %4812 = vmatprep.subr.bf16.mxu0 0
        %4813 = vmatpush1.bf16.msra.mxu0 %v4735
        %4814 = vmatprep.subr.bf16.mxu0 0
        %4815 = vmatpush1.bf16.msra.mxu0 %v4736
        %4816 = vmatprep.subr.bf16.mxu0 0
        %4817 = vmatpush1.bf16.msra.mxu0 %v4737
        %4818 = vmatprep.mubr.bf16.mxu0 %v4460
        %4819 = vmatmul.mubr.bf16.gmra.mrb[0].mxu0 %v4459
        %v4820 = vpop.f32.mrb[0].mxu0
        %v4821 = vadd.f32 %v4592, %v4820
        %v4822 = vpop.f32.mrb[0].mxu0
        %v4823 = vpop.f32.mrb[0].mxu0
        %v4824 = vadd.f32 %v4592, %v4823
        %v4825 = vpop.f32.mrb[0].mxu0
        %4826 = vmatprep.mubr.bf16.mxu0 %v4464
        %4827 = vmatmul.mubr.bf16.gmra.mrb[0].mxu0 %v4463
        %v4828 = vpop.f32.mrb[0].mxu0
        %v4829 = vadd.f32 %v4592, %v4828
        %v4830 = vpop.f32.mrb[0].mxu0
        %v4831 = vpop.f32.mrb[0].mxu0
        %v4832 = vadd.f32 %v4592, %v4831
        %v4833 = vpop.f32.mrb[0].mxu0
        %4834 = vmatprep.mubr.bf16.mxu0 %v4468
        %4835 = vmatmul.mubr.bf16.gmra.mrb[0].mxu0 %v4467
        %v4836 = vpop.f32.mrb[0].mxu0
        %v4837 = vadd.f32 %v4592, %v4836
        %v4838 = vpop.f32.mrb[0].mxu0
        %v4839 = vpop.f32.mrb[0].mxu0
        %v4840 = vadd.f32 %v4592, %v4839
        %v4841 = vpop.f32.mrb[0].mxu0
        %4842 = vmatprep.mubr.bf16.mxu0 %v4472
        %4843 = vmatmul.mubr.bf16.gmra.mrb[0].mxu0 %v4471
        %v4844 = vpop.f32.mrb[0].mxu0
        %v4845 = vadd.f32 %v4592, %v4844
        %v4846 = vpop.f32.mrb[0].mxu0
        %v4847 = vpop.f32.mrb[0].mxu0
        %v4848 = vadd.f32 %v4592, %v4847
        %v4849 = vpop.f32.mrb[0].mxu0
        %4850 = vmatprep.mubr.bf16.mxu0 %v4476
        %4851 = vmatmul.mubr.bf16.gmra.mrb[0].mxu0 %v4475
        %v4852 = vpop.f32.mrb[0].mxu0
        %v4853 = vadd.f32 %v4592, %v4852
        %v4854 = vpop.f32.mrb[0].mxu0
        %v4855 = vpop.f32.mrb[0].mxu0
        %v4856 = vadd.f32 %v4592, %v4855
        %v4857 = vpop.f32.mrb[0].mxu0
        %4858 = vmatprep.mubr.bf16.mxu0 %v4480
        %4859 = vmatmul.mubr.bf16.gmra.mrb[0].mxu0 %v4479
        %v4860 = vpop.f32.mrb[0].mxu0
        %v4861 = vadd.f32 %v4592, %v4860
        %v4862 = vpop.f32.mrb[0].mxu0
        %v4863 = vpop.f32.mrb[0].mxu0
        %v4864 = vadd.f32 %v4592, %v4863
        %v4865 = vpop.f32.mrb[0].mxu0
        %4866 = vmatprep.mubr.bf16.mxu0 %v4484
        %4867 = vmatmul.mubr.bf16.gmra.mrb[0].mxu0 %v4483
        %v4868 = vpop.f32.mrb[0].mxu0
        %v4869 = vadd.f32 %v4592, %v4868
        %v4870 = vpop.f32.mrb[0].mxu0
        %v4871 = vpop.f32.mrb[0].mxu0
        %v4872 = vadd.f32 %v4592, %v4871
        %v4873 = vpop.f32.mrb[0].mxu0
        %4874 = vmatprep.mubr.bf16.mxu0 %v4488
        %4875 = vmatmul.mubr.bf16.gmra.mrb[0].mxu0 %v4487
        %v4876 = vpop.f32.mrb[0].mxu0
        %v4877 = vadd.f32 %v4592, %v4876
        %v4878 = vpop.f32.mrb[0].mxu0
        %v4879 = vpop.f32.mrb[0].mxu0
        %v4880 = vadd.f32 %v4592, %v4879
        %v4881 = vpop.f32.mrb[0].mxu0
        %4882 = vmatprep.mubr.bf16.mxu0 %v4492
        %4883 = vmatmul.mubr.bf16.gmra.mrb[0].mxu0 %v4491
        %v4884 = vpop.f32.mrb[0].mxu0
        %v4885 = vadd.f32 %v4592, %v4884
        %v4886 = vpop.f32.mrb[0].mxu0
        %v4887 = vpop.f32.mrb[0].mxu0
        %v4888 = vadd.f32 %v4592, %v4887
        %v4889 = vpop.f32.mrb[0].mxu0
        %4890 = vmatprep.mubr.bf16.mxu0 %v4496
        %4891 = vmatmul.mubr.bf16.gmra.mrb[0].mxu0 %v4495
        %v4892 = vpop.f32.mrb[0].mxu0
        %v4893 = vadd.f32 %v4592, %v4892
        %v4894 = vpop.f32.mrb[0].mxu0
        %v4895 = vpop.f32.mrb[0].mxu0
        %v4896 = vadd.f32 %v4592, %v4895
        %v4897 = vpop.f32.mrb[0].mxu0
        %4898 = vmatprep.mubr.bf16.mxu0 %v4500
        %4899 = vmatmul.mubr.bf16.gmra.mrb[0].mxu0 %v4499
        %v4900 = vpop.f32.mrb[0].mxu0
        %v4901 = vadd.f32 %v4592, %v4900
        %v4902 = vpop.f32.mrb[0].mxu0
        %v4903 = vpop.f32.mrb[0].mxu0
        %v4904 = vadd.f32 %v4592, %v4903
        %v4905 = vpop.f32.mrb[0].mxu0
        %4906 = vmatprep.mubr.bf16.mxu0 %v4504
        %4907 = vmatmul.mubr.bf16.gmra.mrb[0].mxu0 %v4503
        %v4908 = vpop.f32.mrb[0].mxu0
        %v4909 = vadd.f32 %v4592, %v4908
        %v4910 = vpop.f32.mrb[0].mxu0
        %v4911 = vpop.f32.mrb[0].mxu0
        %v4912 = vadd.f32 %v4592, %v4911
        %v4913 = vpop.f32.mrb[0].mxu0
        %4914 = vmatprep.mubr.bf16.mxu0 %v4508
        %4915 = vmatmul.mubr.bf16.gmra.mrb[0].mxu0 %v4507
        %v4916 = vpop.f32.mrb[0].mxu0
        %v4917 = vadd.f32 %v4592, %v4916
        %v4918 = vpop.f32.mrb[0].mxu0
        %v4919 = vpop.f32.mrb[0].mxu0
        %v4920 = vadd.f32 %v4592, %v4919
        %v4921 = vpop.f32.mrb[0].mxu0
        %4922 = vmatprep.mubr.bf16.mxu0 %v4512
        %4923 = vmatmul.mubr.bf16.gmra.mrb[0].mxu0 %v4511
        %v4924 = vpop.f32.mrb[0].mxu0
        %v4925 = vadd.f32 %v4592, %v4924
        %v4926 = vpop.f32.mrb[0].mxu0
        %v4927 = vpop.f32.mrb[0].mxu0
        %v4928 = vadd.f32 %v4592, %v4927
        %v4929 = vpop.f32.mrb[0].mxu0
        %4930 = vmatprep.mubr.bf16.mxu0 %v4516
        %4931 = vmatmul.mubr.bf16.gmra.mrb[0].mxu0 %v4515
        %v4932 = vpop.f32.mrb[0].mxu0
        %v4933 = vadd.f32 %v4592, %v4932
        %v4934 = vpop.f32.mrb[0].mxu0
        %v4935 = vpop.f32.mrb[0].mxu0
        %v4936 = vadd.f32 %v4592, %v4935
        %v4937 = vpop.f32.mrb[0].mxu0
        %4938 = vmatprep.mubr.bf16.mxu0 %v4520
        %4939 = vmatmul.mubr.bf16.gmra.mrb[0].mxu0 %v4519
        %v4940 = vpop.f32.mrb[0].mxu0
        %v4941 = vadd.f32 %v4592, %v4940
        %v4942 = vpop.f32.mrb[0].mxu0
        %v4943 = vpop.f32.mrb[0].mxu0
        %v4944 = vadd.f32 %v4592, %v4943
        %v4945 = vpop.f32.mrb[0].mxu0
        %4946 = vdwg.mxu0
        %4947 = vmatprep.subr.bf16.mxu0 0
        %4948 = vmatpush1.bf16.msra.mxu0 %v4738
        %4949 = vmatprep.subr.bf16.mxu0 0
        %4950 = vmatpush1.bf16.msra.mxu0 %v4739
        %4951 = vmatprep.subr.bf16.mxu0 0
        %4952 = vmatpush1.bf16.msra.mxu0 %v4740
        %4953 = vmatprep.subr.bf16.mxu0 0
        %4954 = vmatpush1.bf16.msra.mxu0 %v4741
        %4955 = vmatprep.subr.bf16.mxu0 0
        %4956 = vmatpush1.bf16.msra.mxu0 %v4742
        %4957 = vmatprep.subr.bf16.mxu0 0
        %4958 = vmatpush1.bf16.msra.mxu0 %v4743
        %4959 = vmatprep.subr.bf16.mxu0 0
        %4960 = vmatpush1.bf16.msra.mxu0 %v4744
        %4961 = vmatprep.subr.bf16.mxu0 0
        %4962 = vmatpush1.bf16.msra.mxu0 %v4745
        %4963 = vmatprep.subr.bf16.mxu0 0
        %4964 = vmatpush1.bf16.msra.mxu0 %v4746
        %4965 = vmatprep.subr.bf16.mxu0 0
        %4966 = vmatpush1.bf16.msra.mxu0 %v4747
        %4967 = vmatprep.subr.bf16.mxu0 0
        %4968 = vmatpush1.bf16.msra.mxu0 %v4748
        %4969 = vmatprep.subr.bf16.mxu0 0
        %4970 = vmatpush1.bf16.msra.mxu0 %v4749
        %4971 = vmatprep.subr.bf16.mxu0 0
        %4972 = vmatpush1.bf16.msra.mxu0 %v4750
        %4973 = vmatprep.subr.bf16.mxu0 0
        %4974 = vmatpush1.bf16.msra.mxu0 %v4751
        %4975 = vmatprep.subr.bf16.mxu0 0
        %4976 = vmatpush1.bf16.msra.mxu0 %v4752
        %4977 = vmatprep.subr.bf16.mxu0 0
        %4978 = vmatpush1.bf16.msra.mxu0 %v4753
        %4979 = vmatprep.mubr.bf16.mxu0 %v4462
        %4980 = vmatmul.mubr.bf16.gmra.mrb[0].mxu0 %v4461
        %v4981 = vpop.f32.mrb[0].mxu0
        %v4982 = vadd.f32 %v4821, %v4981
        %v4983 = vpop.f32.mrb[0].mxu0
        %v4984 = vpop.f32.mrb[0].mxu0
        %v4985 = vadd.f32 %v4824, %v4984
        %v4986 = vpop.f32.mrb[0].mxu0
        %4987 = vmatprep.mubr.bf16.mxu0 %v4466
        %4988 = vmatmul.mubr.bf16.gmra.mrb[0].mxu0 %v4465
        %v4989 = vpop.f32.mrb[0].mxu0
        %v4990 = vadd.f32 %v4829, %v4989
        %v4991 = vpop.f32.mrb[0].mxu0
        %v4992 = vpop.f32.mrb[0].mxu0
        %v4993 = vadd.f32 %v4832, %v4992
        %v4994 = vpop.f32.mrb[0].mxu0
        %4995 = vmatprep.mubr.bf16.mxu0 %v4470
        %4996 = vmatmul.mubr.bf16.gmra.mrb[0].mxu0 %v4469
        %v4997 = vpop.f32.mrb[0].mxu0
        %v4998 = vadd.f32 %v4837, %v4997
        %v4999 = vpop.f32.mrb[0].mxu0
        %v5000 = vpop.f32.mrb[0].mxu0
        %v5001 = vadd.f32 %v4840, %v5000
        %v5002 = vpop.f32.mrb[0].mxu0
        %5003 = vmatprep.mubr.bf16.mxu0 %v4474
        %5004 = vmatmul.mubr.bf16.gmra.mrb[0].mxu0 %v4473
        %v5005 = vpop.f32.mrb[0].mxu0
        %v5006 = vadd.f32 %v4845, %v5005
        %v5007 = vpop.f32.mrb[0].mxu0
        %v5008 = vpop.f32.mrb[0].mxu0
        %v5009 = vadd.f32 %v4848, %v5008
        %v5010 = vpop.f32.mrb[0].mxu0
        %5011 = vmatprep.mubr.bf16.mxu0 %v4478
        %5012 = vmatmul.mubr.bf16.gmra.mrb[0].mxu0 %v4477
        %v5013 = vpop.f32.mrb[0].mxu0
        %v5014 = vadd.f32 %v4853, %v5013
        %v5015 = vpop.f32.mrb[0].mxu0
        %v5016 = vpop.f32.mrb[0].mxu0
        %v5017 = vadd.f32 %v4856, %v5016
        %v5018 = vpop.f32.mrb[0].mxu0
        %5019 = vmatprep.mubr.bf16.mxu0 %v4482
        %5020 = vmatmul.mubr.bf16.gmra.mrb[0].mxu0 %v4481
        %v5021 = vpop.f32.mrb[0].mxu0
        %v5022 = vadd.f32 %v4861, %v5021
        %v5023 = vpop.f32.mrb[0].mxu0
        %v5024 = vpop.f32.mrb[0].mxu0
        %v5025 = vadd.f32 %v4864, %v5024
        %v5026 = vpop.f32.mrb[0].mxu0
        %5027 = vmatprep.mubr.bf16.mxu0 %v4486
        %5028 = vmatmul.mubr.bf16.gmra.mrb[0].mxu0 %v4485
        %v5029 = vpop.f32.mrb[0].mxu0
        %v5030 = vadd.f32 %v4869, %v5029
        %v5031 = vpop.f32.mrb[0].mxu0
        %v5032 = vpop.f32.mrb[0].mxu0
        %v5033 = vadd.f32 %v4872, %v5032
        %v5034 = vpop.f32.mrb[0].mxu0
        %5035 = vmatprep.mubr.bf16.mxu0 %v4490
        %5036 = vmatmul.mubr.bf16.gmra.mrb[0].mxu0 %v4489
        %v5037 = vpop.f32.mrb[0].mxu0
        %v5038 = vadd.f32 %v4877, %v5037
        %v5039 = vpop.f32.mrb[0].mxu0
        %v5040 = vpop.f32.mrb[0].mxu0
        %v5041 = vadd.f32 %v4880, %v5040
        %v5042 = vpop.f32.mrb[0].mxu0
        %5043 = vmatprep.mubr.bf16.mxu0 %v4494
        %5044 = vmatmul.mubr.bf16.gmra.mrb[0].mxu0 %v4493
        %v5045 = vpop.f32.mrb[0].mxu0
        %v5046 = vadd.f32 %v4885, %v5045
        %v5047 = vpop.f32.mrb[0].mxu0
        %v5048 = vpop.f32.mrb[0].mxu0
        %v5049 = vadd.f32 %v4888, %v5048
        %v5050 = vpop.f32.mrb[0].mxu0
        %5051 = vmatprep.mubr.bf16.mxu0 %v4498
        %5052 = vmatmul.mubr.bf16.gmra.mrb[0].mxu0 %v4497
        %v5053 = vpop.f32.mrb[0].mxu0
        %v5054 = vadd.f32 %v4893, %v5053
        %v5055 = vpop.f32.mrb[0].mxu0
        %v5056 = vpop.f32.mrb[0].mxu0
        %v5057 = vadd.f32 %v4896, %v5056
        %v5058 = vpop.f32.mrb[0].mxu0
        %5059 = vmatprep.mubr.bf16.mxu0 %v4502
        %5060 = vmatmul.mubr.bf16.gmra.mrb[0].mxu0 %v4501
        %v5061 = vpop.f32.mrb[0].mxu0
        %v5062 = vadd.f32 %v4901, %v5061
        %v5063 = vpop.f32.mrb[0].mxu0
        %v5064 = vpop.f32.mrb[0].mxu0
        %v5065 = vadd.f32 %v4904, %v5064
        %v5066 = vpop.f32.mrb[0].mxu0
        %5067 = vmatprep.mubr.bf16.mxu0 %v4506
        %5068 = vmatmul.mubr.bf16.gmra.mrb[0].mxu0 %v4505
        %v5069 = vpop.f32.mrb[0].mxu0
        %v5070 = vadd.f32 %v4909, %v5069
        %v5071 = vpop.f32.mrb[0].mxu0
        %v5072 = vpop.f32.mrb[0].mxu0
        %v5073 = vadd.f32 %v4912, %v5072
        %v5074 = vpop.f32.mrb[0].mxu0
        %5075 = vmatprep.mubr.bf16.mxu0 %v4510
        %5076 = vmatmul.mubr.bf16.gmra.mrb[0].mxu0 %v4509
        %v5077 = vpop.f32.mrb[0].mxu0
        %v5078 = vadd.f32 %v4917, %v5077
        %v5079 = vpop.f32.mrb[0].mxu0
        %v5080 = vpop.f32.mrb[0].mxu0
        %v5081 = vadd.f32 %v4920, %v5080
        %v5082 = vpop.f32.mrb[0].mxu0
        %5083 = vmatprep.mubr.bf16.mxu0 %v4514
        %5084 = vmatmul.mubr.bf16.gmra.mrb[0].mxu0 %v4513
        %v5085 = vpop.f32.mrb[0].mxu0
        %v5086 = vadd.f32 %v4925, %v5085
        %v5087 = vpop.f32.mrb[0].mxu0
        %v5088 = vpop.f32.mrb[0].mxu0
        %v5089 = vadd.f32 %v4928, %v5088
        %v5090 = vpop.f32.mrb[0].mxu0
        %5091 = vmatprep.mubr.bf16.mxu0 %v4518
        %5092 = vmatmul.mubr.bf16.gmra.mrb[0].mxu0 %v4517
        %v5093 = vpop.f32.mrb[0].mxu0
        %v5094 = vadd.f32 %v4933, %v5093
        %v5095 = vpop.f32.mrb[0].mxu0
        %v5096 = vpop.f32.mrb[0].mxu0
        %v5097 = vadd.f32 %v4936, %v5096
        %v5098 = vpop.f32.mrb[0].mxu0
        %5099 = vmatprep.mubr.bf16.mxu0 %v4522
        %5100 = vmatmul.mubr.bf16.gmra.mrb[0].mxu0 %v4521
        %v5101 = vpop.f32.mrb[0].mxu0
        %v5102 = vadd.f32 %v4941, %v5101
        %v5103 = vpop.f32.mrb[0].mxu0
        %v5104 = vpop.f32.mrb[0].mxu0
        %v5105 = vadd.f32 %v4944, %v5104
        %v5106 = vpop.f32.mrb[0].mxu0
        %5107 = vdwg.mxu0
        %5108 = vst [vmem:[%s271] sm:$0xff] %v4982
        %5109 = vst [vmem:[%s271 + $0x8] sm:$0xff] %v4985
        %5110 = vst [vmem:[%s271 + $0x10] sm:$0xff] %v4990
        %5111 = vst [vmem:[%s271 + $0x18] sm:$0xff] %v4993
        %5112 = vst [vmem:[%s271 + $0x20] sm:$0xff] %v4998
        %5113 = vst [vmem:[%s271 + $0x28] sm:$0xff] %v5001
        %5114 = vst [vmem:[%s271 + $0x30] sm:$0xff] %v5006
        %5115 = vst [vmem:[%s271 + $0x38] sm:$0xff] %v5009
        %5116 = vst [vmem:[%s271 + $0x40] sm:$0xff] %v5014
        %5117 = vst [vmem:[%s271 + $0x48] sm:$0xff] %v5017
        %5118 = vst [vmem:[%s271 + $0x50] sm:$0xff] %v5022
        %5119 = vst [vmem:[%s271 + $0x58] sm:$0xff] %v5025
        %5120 = vst [vmem:[%s271 + $0x60] sm:$0xff] %v5030
        %5121 = vst [vmem:[%s271 + $0x68] sm:$0xff] %v5033
        %5122 = vst [vmem:[%s271 + $0x70] sm:$0xff] %v5038
        %5123 = vst [vmem:[%s271 + $0x78] sm:$0xff] %v5041
        %5124 = vst [vmem:[%s271 + $0x80] sm:$0xff] %v5046
        %5125 = vst [vmem:[%s271 + $0x88] sm:$0xff] %v5049
        %5126 = vst [vmem:[%s271 + $0x90] sm:$0xff] %v5054
        %5127 = vst [vmem:[%s271 + $0x98] sm:$0xff] %v5057
        %5128 = vst [vmem:[%s271 + $0xa0] sm:$0xff] %v5062
        %5129 = vst [vmem:[%s271 + $0xa8] sm:$0xff] %v5065
        %5130 = vst [vmem:[%s271 + $0xb0] sm:$0xff] %v5070
        %5131 = vst [vmem:[%s271 + $0xb8] sm:$0xff] %v5073
        %5132 = vst [vmem:[%s271 + $0xc0] sm:$0xff] %v5078
        %5133 = vst [vmem:[%s271 + $0xc8] sm:$0xff] %v5081
        %5134 = vst [vmem:[%s271 + $0xd0] sm:$0xff] %v5086
        %5135 = vst [vmem:[%s271 + $0xd8] sm:$0xff] %v5089
        %5136 = vst [vmem:[%s271 + $0xe0] sm:$0xff] %v5094
        %5137 = vst [vmem:[%s271 + $0xe8] sm:$0xff] %v5097
        %5138 = vst [vmem:[%s271 + $0xf0] sm:$0xff] %v5102
        %5139 = vst [vmem:[%s271 + $0xf8] sm:$0xff] %v5105
        %s5140 = sand.u32 %s141, 1
        %s5141 = scalar_lea.sflag [#allocation4], %s5140
        %s5142 = sand.u32 %s141, 1
        %s5143 = smul.addr %s5142, 256
        %s5144 = scalar_lea.vmem [#allocation8], %s5143
        // Predicated region
        $region53: #{tpu_custom_call.1} parent=39 // pred_check
          %p5145 = pneg %p151
        $region54: #{tpu_custom_call.1} parent=39 // pred_check_branch
          %5147 = sbr.rel (%p5145) target = $region56
        $region55: #{tpu_custom_call.1} parent=39 // pred_region
          %s5148 = smul.u32 32, %s23
          %s5150 = ssub.s32 4096, 4096
          %5151 = vsyncadd %s5141, %s5150
          %s5152 = smul.addr %s5148, 128
          %s5153 = scalar_lea.hbm %s5, %s5152
          %s5154 = sshll.u32 %s5144, 4
          %s5155 = int_to_ptr.vmem [resolvable:$true] %s5154
          %5160 = dma.vmem_to_hbm [thread:$0]  %s5155, 4096, %s5153, %s5141, 128, 128, 8
        $region56: #{tpu_custom_call.1} parent=39 // pred_fallthru
          _
      $region40: #{tpu_custom_call.1} parent=5 // pred_fallthru
        _
      %p5161 = scmp.le.s32.totalorder 2, %s18
      // Predicated region
      $region57: #{tpu_custom_call.1} parent=5 // pred_check
        %p5162 = pneg %p5161
      $region58: #{tpu_custom_call.1} parent=5 // pred_check_branch
        %5164 = sbr.rel (%p5162) target = $region60
      $region59: #{tpu_custom_call.1} parent=5 // pred_region
        %s5165 = ssub.s32 %s18, 2
        // Predicated region
        $region61: #{tpu_custom_call.1} parent=59 // pred_check
          %p5166 = pneg %p157
        $region62: #{tpu_custom_call.1} parent=59 // pred_check_branch
          %5168 = sbr.rel (%p5166) target = $region64
        $region63: #{tpu_custom_call.1} parent=59 // pred_region
          %s5169 = sand.u32 %s142, 1
          %s5170 = scalar_lea.sflag [#allocation4], %s5169
          %s5171 = sand.u32 %s142, 1
          %s5172 = smul.addr %s5171, 256
          %s5173 = scalar_lea.vmem [#allocation8], %s5172
          %5174 = dma.done %s5170, 4096
        $region64: #{tpu_custom_call.1} parent=59 // pred_fallthru
          _
      $region60: #{tpu_custom_call.1} parent=5 // pred_fallthru
        _
    $region6: #{tpu_custom_call.1} parent=1 // loop_footer
      %s22 = sadd.s32 1, %s18
    $region7: #{tpu_custom_call.1} parent=1 // loop_footer_branch
      %17 = sbr.rel target = $region3
    $region8: #{tpu_custom_call.1} parent=1 // loop_exit
      _
    %5175 = vsyncpa [#allocation3], 1
    %s5176 = scalar_lea.sflag [#allocation3], 1
    %5177 = vsyncpa %s5176, 1
    %5178 = vsyncpa [#allocation6], 1
    %5179 = vsyncpa [#allocation4], 1
    %s5180 = scalar_lea.sflag [#allocation4], 1
    %5181 = vsyncpa %s5180, 1

</llo_original>
